<compile_context>
chip_gen: v7x
topology: tpu7x:2x2x1
jax: 0.10.0
libtpu: 0.0.40
codegen_flags: <defaults>
</compile_context>

<pallas_src>
import jax
import jax.numpy as jnp
import numpy as np
from jax import lax
from jax.experimental import pallas as pl
from jax.experimental.pallas import tpu as pltpu

KH = KW = 5            # every Conv2dBNReLU in CFQKBN is 5x5, stride 1, pad 2
POOL_K, POOL_S = 3, 2  # every pool is kernel 3, stride 2, pad 0
LANE = 128             # TPU lane width


def _pool_out(n):
    return (n - POOL_K) // POOL_S + 1


def _ceil_to(x, m):
    return ((x + m - 1) // m) * m


# ----------------------------- host-side packing ------------------------------
def _conv_band(w, w_out):
    """(5,5,Cin,Cout) -> (5, (w_out+4)*Cin, w_out*Cout) banded matrices."""
    kh_, kw_, cin, cout = w.shape
    wp = w_out + 4
    band = np.zeros((kh_, wp, cin, w_out, cout), np.float32)
    for kw in range(kw_):
        for wo in range(w_out):
            band[:, wo + kw, :, wo, :] += w[:, kw, :, :]
    return band.reshape(kh_, wp * cin, w_out * cout)


def _maxpool_mats(h, w, c):
    """Row/col selection matrices for 3x3/s2 max-pool, output zero-padded by 2."""
    ho, wo_n = _pool_out(h), _pool_out(w)
    r = np.zeros((POOL_K, ho + 4, h), np.float32)
    u = np.zeros((POOL_K, w * c, (wo_n + 4) * c), np.float32)
    eye = np.eye(c, dtype=np.float32)
    for i in range(POOL_K):
        for o in range(ho):
            r[i, o + 2, 2 * o + i] = 1.0
    for j in range(POOL_K):
        for o in range(wo_n):
            u[j, (2 * o + j) * c:(2 * o + j + 1) * c, (o + 2) * c:(o + 3) * c] = eye
    return r, u


def _avgpool_mats(h, w, c):
    """Linear 3x3/s2 avg-pool as two matrices, output zero-padded by 2."""
    ho, wo_n = _pool_out(h), _pool_out(w)
    r = np.zeros((ho + 4, h), np.float32)
    s = np.zeros((w * c, (wo_n + 4) * c), np.float32)
    eye = np.eye(c, dtype=np.float32)
    for i in range(POOL_K):
        for o in range(ho):
            r[o + 2, 2 * o + i] = 1.0
    for j in range(POOL_K):
        for o in range(wo_n):
            s[(2 * o + j) * c:(2 * o + j + 1) * c, (o + 2) * c:(o + 3) * c] += eye / 9.0
    return r, s


def _fc1_fold(fc1_w, hf, wf, c):
    """Fold 3x3/s2 avg-pool + NCHW flatten + fc1 into (hf, wf*c, Npad)."""
    ho, wo_n = _pool_out(hf), _pool_out(wf)
    n = fc1_w.shape[1]
    fr = fc1_w.reshape(c, ho, wo_n, n)           # PyTorch flatten: c*9 + ho*3 + wo
    w1e = np.zeros((hf, wf, c, n), np.float32)
    for o_h in range(ho):
        for o_w in range(wo_n):
            for i in range(POOL_K):
                for j in range(POOL_K):
                    w1e[2 * o_h + i, 2 * o_w + j, :, :] += fr[:, o_h, o_w, :] / 9.0
    return w1e.reshape(hf, wf * c, n)


def pack_params(params, H0=32, W0=32):
    convs = [(np.asarray(w, np.float32),
              np.asarray(s, np.float32).reshape(-1),
              np.asarray(b, np.float32).reshape(-1)) for (w, s, b) in params["convs"]]
    (cw1, cs1, cb1), (cw2, cs2, cb2), (cw3, cs3, cb3) = convs
    C0 = cw1.shape[2]
    C1, C2, C3 = cw1.shape[3], cw2.shape[3], cw3.shape[3]
    H1, W1 = H0, W0
    H2, W2 = _pool_out(H1), _pool_out(W1)
    H3, W3 = _pool_out(H2), _pool_out(W2)

    R1, U1 = _maxpool_mats(H1, W1, C1)
    R2, S2 = _avgpool_mats(H2, W2, C2)

    # ----- FC path, zero-padded to 128 lanes (lane-dense hidden + logits) -----
    fc1_w = np.asarray(params["fc1_w"], np.float32)                 # (9*C3, 64)
    fc1_b = np.asarray(params["fc1_b"], np.float32).reshape(-1)     # (64,)
    fc2_w = np.asarray(params["fc2_w"], np.float32)                 # (64, n_cls)
    fc2_b = np.asarray(params["fc2_b"], np.float32).reshape(-1)     # (n_cls,)
    n_hid, n_cls = fc1_w.shape[1], fc2_w.shape[1]
    hpad, cpad = _ceil_to(n_hid, LANE), _ceil_to(n_cls, LANE)

    fc1_w_p = np.zeros((fc1_w.shape[0], hpad), np.float32)
    fc1_w_p[:, :n_hid] = fc1_w
    fb1 = np.zeros((1, hpad), np.float32)
    fb1[0, :n_hid] = fc1_b
    w2p = np.zeros((hpad, cpad), np.float32)
    w2p[:n_hid, :n_cls] = fc2_w
    fb2 = np.zeros((1, cpad), np.float32)
    fb2[0, :n_cls] = fc2_b

    packed = {
        "b1": _conv_band(cw1, W1), "sc1": np.tile(cs1, W1)[None], "bi1": np.tile(cb1, W1)[None],
        "r1": R1, "u1": U1,
        "b2": _conv_band(cw2, W2), "sc2": np.tile(cs2, W2)[None], "bi2": np.tile(cb2, W2)[None],
        "r2": R2, "s2": S2,
        "b3": _conv_band(cw3, W3), "sc3": np.tile(cs3, W3)[None], "bi3": np.tile(cb3, W3)[None],
        "w1e": _fc1_fold(fc1_w_p, H3, W3, C3),        # (H3, W3*C3, hpad)
        "fb1": fb1,
        "w2fc": w2p,                                   # (hpad, cpad)
        "fb2": fb2,
    }
    packed = {k: jnp.asarray(v) for k, v in packed.items()}
    packed["dims"] = (H0, W0, C0, H3, W3, C3, n_cls)   # python ints for the wrapper
    return packed


# ----------------------------- fused network kernel ---------------------------
def _cfqkbn_kernel(xpad_ref, b1_ref, sc1_ref, bi1_ref, r1_ref, u1_ref,
                   b2_ref, sc2_ref, bi2_ref, r2_ref, s2_ref,
                   b3_ref, sc3_ref, bi3_ref, w1e_ref, fb1_ref, w2_ref, fb2_ref,
                   logits_ref, feat_ref, pad2_ref, pad3_ref):
    f32 = jnp.float32

    def conv_bn_relu(src_ref, b_ref, sc_ref, bi_ref):
        # src_ref: (H+4, (W+4)*Cin) zero-padded 2D image; b_ref: (5, (W+4)*Cin, W*Cout)
        h = src_ref.shape[0] - (KH - 1)
        acc = jnp.dot(src_ref[0:h, :], b_ref[0], preferred_element_type=f32)
        for kh in range(1, KH):
            acc = acc + jnp.dot(src_ref[kh:kh + h, :], b_ref[kh],
                                preferred_element_type=f32)
        return jnp.maximum(acc * sc_ref[...] + bi_ref[...], 0.0)

    # --- conv1 + BN + ReLU -> (32, 32*C1) ----------------------------------
    y1 = conv_bn_relu(xpad_ref, b1_ref, sc1_ref, bi1_ref)

    # --- max-pool 3x3/s2 (+ zero pad for conv2) -> (19, 19*C1) -------------
    v = jnp.dot(r1_ref[0], y1, preferred_element_type=f32)
    for i in range(1, POOL_K):
        v = jnp.maximum(v, jnp.dot(r1_ref[i], y1, preferred_element_type=f32))
    p = jnp.dot(v, u1_ref[0], preferred_element_type=f32)
    for j in range(1, POOL_K):
        p = jnp.maximum(p, jnp.dot(v, u1_ref[j], preferred_element_type=f32))
    pad2_ref[...] = p

    # --- conv2 + BN + ReLU -> (15, 15*C2) ----------------------------------
    y2 = conv_bn_relu(pad2_ref, b2_ref, sc2_ref, bi2_ref)

    # --- avg-pool 3x3/s2 (+ zero pad for conv3) -> (11, 11*C2) -------------
    pad3_ref[...] = jnp.dot(
        jnp.dot(r2_ref[...], y2, preferred_element_type=f32),
        s2_ref[...], preferred_element_type=f32)

    # --- conv3 + BN + ReLU (feat) -> (7, 7*C3) ------------------------------
    y3 = conv_bn_relu(pad3_ref, b3_ref, sc3_ref, bi3_ref)
    feat_ref[...] = y3

    # --- avg-pool + NCHW flatten + fc1 (all folded into w1e) + ReLU + fc2 ---
    # hidden / logits are padded to 128 lanes -> lane-dense vregs and store.
    hidden = fb1_ref[...]
    for h in range(w1e_ref.shape[0]):
        hidden = hidden + jnp.dot(y3[h:h + 1, :], w1e_ref[h],
                                  preferred_element_type=f32)
    hidden = jnp.maximum(hidden, 0.0)
    logits_ref[...] = (jnp.dot(hidden, w2_ref[...], preferred_element_type=f32)
                       + fb2_ref[...])


def cfqkbn_forward(x_nchw, packed):
    H0, W0, C0, H3, W3, C3, n_cls = packed["dims"]
    B = x_nchw.shape[0]
    cpad = packed["fb2"].shape[-1]

    # NCHW -> NHWC -> (B, H, W*C) -> zero-pad by 2 pixels (glue; tiny input only)
    x2d = jnp.transpose(x_nchw, (0, 2, 3, 1)).reshape(B, H0, W0 * C0)
    xpad = jnp.pad(x2d, ((0, 0), (2, 2), (2 * C0, 2 * C0)))

    Hp2, Wp2C = packed["r1"].shape[1], packed["u1"].shape[2]
    Hp3, Wp3C = packed["r2"].shape[0], packed["s2"].shape[1]

    def full(a):
        return pl.BlockSpec(a.shape, lambda b, nd=a.ndim: (0,) * nd)

    logits3, feat2d = pl.pallas_call(
        _cfqkbn_kernel,
        out_shape=(jax.ShapeDtypeStruct((B, 1, cpad), jnp.float32),
                   jax.ShapeDtypeStruct((B, H3, W3 * C3), jnp.float32)),
        grid=(B,),
        in_specs=[
            pl.BlockSpec((None, H0 + 4, (W0 + 4) * C0), lambda b: (b, 0, 0)),
            full(packed["b1"]), full(packed["sc1"]), full(packed["bi1"]),
            full(packed["r1"]), full(packed["u1"]),
            full(packed["b2"]), full(packed["sc2"]), full(packed["bi2"]),
            full(packed["r2"]), full(packed["s2"]),
            full(packed["b3"]), full(packed["sc3"]), full(packed["bi3"]),
            full(packed["w1e"]), full(packed["fb1"]),
            full(packed["w2fc"]), full(packed["fb2"]),
        ],
        out_specs=(pl.BlockSpec((None, 1, cpad), lambda b: (b, 0, 0)),
                   pl.BlockSpec((None, H3, W3 * C3), lambda b: (b, 0, 0))),
        scratch_shapes=[pltpu.VMEM((Hp2, Wp2C), jnp.float32),
                        pltpu.VMEM((Hp3, Wp3C), jnp.float32)],
        compiler_params=pltpu.CompilerParams(
            dimension_semantics=("parallel",),
            vmem_limit_bytes=32 * 1024 * 1024),
    )(xpad, packed["b1"], packed["sc1"], packed["bi1"],
      packed["r1"], packed["u1"],
      packed["b2"], packed["sc2"], packed["bi2"],
      packed["r2"], packed["s2"],
      packed["b3"], packed["sc3"], packed["bi3"],
      packed["w1e"], packed["fb1"], packed["w2fc"], packed["fb2"])

    logits = logits3[:, 0, :n_cls]
    feat_nchw = jnp.transpose(feat2d.reshape(B, H3, W3, C3), (0, 3, 1, 2))
    return logits, feat_nchw


# ------------------------------- parameters -----------------------------------
def init_params(key, deps=(8, 16, 32), num_classes=10):
    eps = 1e-5
    keys = iter(jax.random.split(key, 32))
    params = {"convs": []}
    cin = 3
    for cout in deps:
        w = 0.1 * jax.random.normal(next(keys), (KH, KW, cin, cout), jnp.float32)
        gamma = 1.0 + 0.1 * jax.random.normal(next(keys), (cout,), jnp.float32)
        beta = 0.1 * jax.random.normal(next(keys), (cout,), jnp.float32)
        mean = 0.1 * jax.random.normal(next(keys), (cout,), jnp.float32)
        var = 0.5 + jnp.abs(jax.random.normal(next(keys), (cout,), jnp.float32))
        scale = gamma / jnp.sqrt(var + eps)          # fold BN (inference mode)
        bias = beta - mean * scale
        params["convs"].append((w, scale.reshape(1, cout), bias.reshape(1, cout)))
        cin = cout
    d_flat = 3 * 3 * deps[2]
    params["fc1_w"] = 0.05 * jax.random.normal(next(keys), (d_flat, 64), jnp.float32)
    params["fc1_b"] = 0.05 * jax.random.normal(next(keys), (1, 64), jnp.float32)
    params["fc2_w"] = 0.05 * jax.random.normal(next(keys), (64, num_classes), jnp.float32)
    params["fc2_b"] = 0.05 * jax.random.normal(next(keys), (1, num_classes), jnp.float32)
    return params


# ------------------------- pure-JAX reference (checking) -----------------------
def reference_forward(x_nchw, params):
    hi = lax.Precision.HIGHEST

    def conv_ref(x, w, s, b):
        y = lax.conv_general_dilated(x, w, (1, 1), ((2, 2), (2, 2)),
                                     dimension_numbers=("NHWC", "HWIO", "NHWC"),
                                     precision=hi)
        return jnp.maximum(y * s.reshape(1, 1, 1, -1) + b.reshape(1, 1, 1, -1), 0.0)

    def pool_ref(x, op):
        if op == "max":
            return lax.reduce_window(x, -jnp.inf, lax.max,
                                     (1, 3, 3, 1), (1, 2, 2, 1), "VALID")
        return lax.reduce_window(x, 0.0, lax.add,
                                 (1, 3, 3, 1), (1, 2, 2, 1), "VALID") / 9.0

    x = jnp.transpose(x_nchw, (0, 2, 3, 1))
    (w1, s1, b1), (w2, s2, b2), (w3, s3, b3) = params["convs"]
    x = pool_ref(conv_ref(x, w1, s1, b1), "max")
    x = pool_ref(conv_ref(x, w2, s2, b2), "avg")
    feat = conv_ref(x, w3, s3, b3)
    x = pool_ref(feat, "avg")
    B = x.shape[0]
    x = jnp.transpose(x, (0, 3, 1, 2)).reshape(B, -1)
    h = jnp.maximum(jnp.dot(x, params["fc1_w"], precision=hi) + params["fc1_b"], 0.0)
    logits = jnp.dot(h, params["fc2_w"], precision=hi) + params["fc2_b"]
    return logits, jnp.transpose(feat, (0, 3, 1, 2))


if __name__ == "__main__":
    key = jax.random.PRNGKey(0)
    k_x, k_p = jax.random.split(key)
    deps, num_classes = (8, 16, 32), 10
    x = jax.random.normal(k_x, (2, 3, 32, 32), jnp.float32)   # NCHW, CIFAR-sized
    params = init_params(k_p, deps=deps, num_classes=num_classes)
    packed = pack_params(params, H0=32, W0=32)

    logits, feat = jax.block_until_ready(cfqkbn_forward(x, packed))

    ref_logits, ref_feat = reference_forward(x, params)
    assert logits.shape == (2, num_classes)
    assert feat.shape == (2, deps[2], 7, 7)
    assert jnp.allclose(logits, ref_logits, atol=1e-2, rtol=1e-2), (
        float(jnp.max(jnp.abs(logits - ref_logits))))
    assert jnp.allclose(feat, ref_feat, atol=1e-2, rtol=1e-2), (
        float(jnp.max(jnp.abs(feat - ref_feat))))
    print("KERNEL_OK")
</pallas_src>

<mosaic_0001>
module attributes {stable_mosaic.version = 11 : i64} {
  func.func @_cfqkbn_kernel(%arg0: i32, %arg1: memref<1x36x108xf32, #tpu.memory_space<vmem>>, %arg2: memref<5x108x256xf32, #tpu.memory_space<vmem>>, %arg3: memref<1x256xf32, #tpu.memory_space<vmem>>, %arg4: memref<1x256xf32, #tpu.memory_space<vmem>>, %arg5: memref<3x19x32xf32, #tpu.memory_space<vmem>>, %arg6: memref<3x256x152xf32, #tpu.memory_space<vmem>>, %arg7: memref<5x152x240xf32, #tpu.memory_space<vmem>>, %arg8: memref<1x240xf32, #tpu.memory_space<vmem>>, %arg9: memref<1x240xf32, #tpu.memory_space<vmem>>, %arg10: memref<11x15xf32, #tpu.memory_space<vmem>>, %arg11: memref<240x176xf32, #tpu.memory_space<vmem>>, %arg12: memref<5x176x224xf32, #tpu.memory_space<vmem>>, %arg13: memref<1x224xf32, #tpu.memory_space<vmem>>, %arg14: memref<1x224xf32, #tpu.memory_space<vmem>>, %arg15: memref<7x224x128xf32, #tpu.memory_space<vmem>>, %arg16: memref<1x128xf32, #tpu.memory_space<vmem>>, %arg17: memref<128x128xf32, #tpu.memory_space<vmem>>, %arg18: memref<1x128xf32, #tpu.memory_space<vmem>>, %arg19: memref<1x1x128xf32, #tpu.memory_space<vmem>>, %arg20: memref<1x7x224xf32, #tpu.memory_space<vmem>>, %arg21: memref<19x152xf32, #tpu.memory_space<vmem>>, %arg22: memref<11x176xf32, #tpu.memory_space<vmem>>) attributes {dimension_semantics = [#tpu.dimension_semantics<parallel>], iteration_bounds = array<i64: 2>, scalar_prefetch = 0 : i64, scratch_operands = 2 : i64, tpu.core_type = #tpu.core_type<tc>, window_params = [{transform_indices = @transform_0, window_bounds = array<i64: 1, 36, 108>}, {pipeline_mode = #tpu.pipeline_mode<synchronous>, transform_indices = @transform_1, window_bounds = array<i64: 5, 108, 256>}, {pipeline_mode = #tpu.pipeline_mode<synchronous>, transform_indices = @transform_2, window_bounds = array<i64: 1, 256>}, {pipeline_mode = #tpu.pipeline_mode<synchronous>, transform_indices = @transform_3, window_bounds = array<i64: 1, 256>}, {pipeline_mode = #tpu.pipeline_mode<synchronous>, transform_indices = @transform_4, window_bounds = array<i64: 3, 19, 32>}, {pipeline_mode = #tpu.pipeline_mode<synchronous>, transform_indices = @transform_5, window_bounds = array<i64: 3, 256, 152>}, {pipeline_mode = #tpu.pipeline_mode<synchronous>, transform_indices = @transform_6, window_bounds = array<i64: 5, 152, 240>}, {pipeline_mode = #tpu.pipeline_mode<synchronous>, transform_indices = @transform_7, window_bounds = array<i64: 1, 240>}, {pipeline_mode = #tpu.pipeline_mode<synchronous>, transform_indices = @transform_8, window_bounds = array<i64: 1, 240>}, {pipeline_mode = #tpu.pipeline_mode<synchronous>, transform_indices = @transform_9, window_bounds = array<i64: 11, 15>}, {pipeline_mode = #tpu.pipeline_mode<synchronous>, transform_indices = @transform_10, window_bounds = array<i64: 240, 176>}, {pipeline_mode = #tpu.pipeline_mode<synchronous>, transform_indices = @transform_11, window_bounds = array<i64: 5, 176, 224>}, {pipeline_mode = #tpu.pipeline_mode<synchronous>, transform_indices = @transform_12, window_bounds = array<i64: 1, 224>}, {pipeline_mode = #tpu.pipeline_mode<synchronous>, transform_indices = @transform_13, window_bounds = array<i64: 1, 224>}, {pipeline_mode = #tpu.pipeline_mode<synchronous>, transform_indices = @transform_14, window_bounds = array<i64: 7, 224, 128>}, {pipeline_mode = #tpu.pipeline_mode<synchronous>, transform_indices = @transform_15, window_bounds = array<i64: 1, 128>}, {pipeline_mode = #tpu.pipeline_mode<synchronous>, transform_indices = @transform_16, window_bounds = array<i64: 128, 128>}, {pipeline_mode = #tpu.pipeline_mode<synchronous>, transform_indices = @transform_17, window_bounds = array<i64: 1, 128>}, {transform_indices = @transform_18, window_bounds = array<i64: 1, 1, 128>}, {transform_indices = @transform_19, window_bounds = array<i64: 1, 7, 224>}]} {
    %c0 = arith.constant 0 : index
    %c0_0 = arith.constant 0 : index
    %c0_1 = arith.constant 0 : index
    %0 = vector.load %arg1[%c0, %c0_0, %c0_1] : memref<1x36x108xf32, #tpu.memory_space<vmem>>, vector<1x32x108xf32>
    %1 = vector.shape_cast %0 : vector<1x32x108xf32> to vector<32x108xf32>
    %c0_2 = arith.constant 0 : index
    %c0_3 = arith.constant 0 : index
    %c0_4 = arith.constant 0 : index
    %2 = vector.load %arg2[%c0_2, %c0_3, %c0_4] : memref<5x108x256xf32, #tpu.memory_space<vmem>>, vector<1x108x256xf32>
    %3 = vector.shape_cast %2 : vector<1x108x256xf32> to vector<108x256xf32>
    %cst = arith.constant dense<0.000000e+00> : vector<32x256xf32>
    %4 = tpu.matmul %1, %3, %cst {dimension_numbers = #tpu.dot_dimension_numbers<[1], [0], [0], [1], [0, 0, 1, 1], [], []>} : vector<32x108xf32>, vector<108x256xf32>, vector<32x256xf32> -> vector<32x256xf32>
    %c0_5 = arith.constant 0 : index
    %c1 = arith.constant 1 : index
    %c0_6 = arith.constant 0 : index
    %5 = vector.load %arg1[%c0_5, %c1, %c0_6] : memref<1x36x108xf32, #tpu.memory_space<vmem>>, vector<1x32x108xf32>
    %6 = vector.shape_cast %5 : vector<1x32x108xf32> to vector<32x108xf32>
    %c1_7 = arith.constant 1 : index
    %c0_8 = arith.constant 0 : index
    %c0_9 = arith.constant 0 : index
    %7 = vector.load %arg2[%c1_7, %c0_8, %c0_9] : memref<5x108x256xf32, #tpu.memory_space<vmem>>, vector<1x108x256xf32>
    %8 = vector.shape_cast %7 : vector<1x108x256xf32> to vector<108x256xf32>
    %cst_10 = arith.constant dense<0.000000e+00> : vector<32x256xf32>
    %9 = tpu.matmul %6, %8, %cst_10 {dimension_numbers = #tpu.dot_dimension_numbers<[1], [0], [0], [1], [0, 0, 1, 1], [], []>} : vector<32x108xf32>, vector<108x256xf32>, vector<32x256xf32> -> vector<32x256xf32>
    %10 = arith.addf %4, %9 : vector<32x256xf32>
    %c0_11 = arith.constant 0 : index
    %c2 = arith.constant 2 : index
    %c0_12 = arith.constant 0 : index
    %11 = vector.load %arg1[%c0_11, %c2, %c0_12] : memref<1x36x108xf32, #tpu.memory_space<vmem>>, vector<1x32x108xf32>
    %12 = vector.shape_cast %11 : vector<1x32x108xf32> to vector<32x108xf32>
    %c2_13 = arith.constant 2 : index
    %c0_14 = arith.constant 0 : index
    %c0_15 = arith.constant 0 : index
    %13 = vector.load %arg2[%c2_13, %c0_14, %c0_15] : memref<5x108x256xf32, #tpu.memory_space<vmem>>, vector<1x108x256xf32>
    %14 = vector.shape_cast %13 : vector<1x108x256xf32> to vector<108x256xf32>
    %cst_16 = arith.constant dense<0.000000e+00> : vector<32x256xf32>
    %15 = tpu.matmul %12, %14, %cst_16 {dimension_numbers = #tpu.dot_dimension_numbers<[1], [0], [0], [1], [0, 0, 1, 1], [], []>} : vector<32x108xf32>, vector<108x256xf32>, vector<32x256xf32> -> vector<32x256xf32>
    %16 = arith.addf %10, %15 : vector<32x256xf32>
    %c0_17 = arith.constant 0 : index
    %c3 = arith.constant 3 : index
    %c0_18 = arith.constant 0 : index
    %17 = vector.load %arg1[%c0_17, %c3, %c0_18] : memref<1x36x108xf32, #tpu.memory_space<vmem>>, vector<1x32x108xf32>
    %18 = vector.shape_cast %17 : vector<1x32x108xf32> to vector<32x108xf32>
    %c3_19 = arith.constant 3 : index
    %c0_20 = arith.constant 0 : index
    %c0_21 = arith.constant 0 : index
    %19 = vector.load %arg2[%c3_19, %c0_20, %c0_21] : memref<5x108x256xf32, #tpu.memory_space<vmem>>, vector<1x108x256xf32>
    %20 = vector.shape_cast %19 : vector<1x108x256xf32> to vector<108x256xf32>
    %cst_22 = arith.constant dense<0.000000e+00> : vector<32x256xf32>
    %21 = tpu.matmul %18, %20, %cst_22 {dimension_numbers = #tpu.dot_dimension_numbers<[1], [0], [0], [1], [0, 0, 1, 1], [], []>} : vector<32x108xf32>, vector<108x256xf32>, vector<32x256xf32> -> vector<32x256xf32>
    %22 = arith.addf %16, %21 : vector<32x256xf32>
    %c0_23 = arith.constant 0 : index
    %c4 = arith.constant 4 : index
    %c0_24 = arith.constant 0 : index
    %23 = vector.load %arg1[%c0_23, %c4, %c0_24] : memref<1x36x108xf32, #tpu.memory_space<vmem>>, vector<1x32x108xf32>
    %24 = vector.shape_cast %23 : vector<1x32x108xf32> to vector<32x108xf32>
    %c4_25 = arith.constant 4 : index
    %c0_26 = arith.constant 0 : index
    %c0_27 = arith.constant 0 : index
    %25 = vector.load %arg2[%c4_25, %c0_26, %c0_27] : memref<5x108x256xf32, #tpu.memory_space<vmem>>, vector<1x108x256xf32>
    %26 = vector.shape_cast %25 : vector<1x108x256xf32> to vector<108x256xf32>
    %cst_28 = arith.constant dense<0.000000e+00> : vector<32x256xf32>
    %27 = tpu.matmul %24, %26, %cst_28 {dimension_numbers = #tpu.dot_dimension_numbers<[1], [0], [0], [1], [0, 0, 1, 1], [], []>} : vector<32x108xf32>, vector<108x256xf32>, vector<32x256xf32> -> vector<32x256xf32>
    %28 = arith.addf %22, %27 : vector<32x256xf32>
    %c0_29 = arith.constant 0 : index
    %c0_30 = arith.constant 0 : index
    %29 = vector.load %arg3[%c0_29, %c0_30] : memref<1x256xf32, #tpu.memory_space<vmem>>, vector<1x256xf32>
    %30 = vector.broadcast %29 : vector<1x256xf32> to vector<32x256xf32>
    %31 = arith.mulf %28, %30 : vector<32x256xf32>
    %c0_31 = arith.constant 0 : index
    %c0_32 = arith.constant 0 : index
    %32 = vector.load %arg4[%c0_31, %c0_32] : memref<1x256xf32, #tpu.memory_space<vmem>>, vector<1x256xf32>
    %33 = vector.broadcast %32 : vector<1x256xf32> to vector<32x256xf32>
    %34 = arith.addf %31, %33 : vector<32x256xf32>
    %cst_33 = arith.constant 0.000000e+00 : f32
    %35 = vector.broadcast %cst_33 : f32 to vector<32x256xf32>
    %36 = arith.maximumf %34, %35 : vector<32x256xf32>
    %c0_34 = arith.constant 0 : index
    %c0_35 = arith.constant 0 : index
    %c0_36 = arith.constant 0 : index
    %37 = vector.load %arg5[%c0_34, %c0_35, %c0_36] : memref<3x19x32xf32, #tpu.memory_space<vmem>>, vector<1x19x32xf32>
    %38 = vector.shape_cast %37 : vector<1x19x32xf32> to vector<19x32xf32>
    %cst_37 = arith.constant dense<0.000000e+00> : vector<19x256xf32>
    %39 = tpu.matmul %38, %36, %cst_37 {dimension_numbers = #tpu.dot_dimension_numbers<[1], [0], [0], [1], [0, 0, 1, 1], [], []>} : vector<19x32xf32>, vector<32x256xf32>, vector<19x256xf32> -> vector<19x256xf32>
    %c1_38 = arith.constant 1 : index
    %c0_39 = arith.constant 0 : index
    %c0_40 = arith.constant 0 : index
    %40 = vector.load %arg5[%c1_38, %c0_39, %c0_40] : memref<3x19x32xf32, #tpu.memory_space<vmem>>, vector<1x19x32xf32>
    %41 = vector.shape_cast %40 : vector<1x19x32xf32> to vector<19x32xf32>
    %cst_41 = arith.constant dense<0.000000e+00> : vector<19x256xf32>
    %42 = tpu.matmul %41, %36, %cst_41 {dimension_numbers = #tpu.dot_dimension_numbers<[1], [0], [0], [1], [0, 0, 1, 1], [], []>} : vector<19x32xf32>, vector<32x256xf32>, vector<19x256xf32> -> vector<19x256xf32>
    %43 = arith.maximumf %39, %42 : vector<19x256xf32>
    %c2_42 = arith.constant 2 : index
    %c0_43 = arith.constant 0 : index
    %c0_44 = arith.constant 0 : index
    %44 = vector.load %arg5[%c2_42, %c0_43, %c0_44] : memref<3x19x32xf32, #tpu.memory_space<vmem>>, vector<1x19x32xf32>
    %45 = vector.shape_cast %44 : vector<1x19x32xf32> to vector<19x32xf32>
    %cst_45 = arith.constant dense<0.000000e+00> : vector<19x256xf32>
    %46 = tpu.matmul %45, %36, %cst_45 {dimension_numbers = #tpu.dot_dimension_numbers<[1], [0], [0], [1], [0, 0, 1, 1], [], []>} : vector<19x32xf32>, vector<32x256xf32>, vector<19x256xf32> -> vector<19x256xf32>
    %47 = arith.maximumf %43, %46 : vector<19x256xf32>
    %c0_46 = arith.constant 0 : index
    %c0_47 = arith.constant 0 : index
    %c0_48 = arith.constant 0 : index
    %48 = vector.load %arg6[%c0_46, %c0_47, %c0_48] : memref<3x256x152xf32, #tpu.memory_space<vmem>>, vector<1x256x152xf32>
    %49 = vector.shape_cast %48 : vector<1x256x152xf32> to vector<256x152xf32>
    %cst_49 = arith.constant dense<0.000000e+00> : vector<19x152xf32>
    %50 = tpu.matmul %47, %49, %cst_49 {dimension_numbers = #tpu.dot_dimension_numbers<[1], [0], [0], [1], [0, 0, 1, 1], [], []>} : vector<19x256xf32>, vector<256x152xf32>, vector<19x152xf32> -> vector<19x152xf32>
    %c1_50 = arith.constant 1 : index
    %c0_51 = arith.constant 0 : index
    %c0_52 = arith.constant 0 : index
    %51 = vector.load %arg6[%c1_50, %c0_51, %c0_52] : memref<3x256x152xf32, #tpu.memory_space<vmem>>, vector<1x256x152xf32>
    %52 = vector.shape_cast %51 : vector<1x256x152xf32> to vector<256x152xf32>
    %cst_53 = arith.constant dense<0.000000e+00> : vector<19x152xf32>
    %53 = tpu.matmul %47, %52, %cst_53 {dimension_numbers = #tpu.dot_dimension_numbers<[1], [0], [0], [1], [0, 0, 1, 1], [], []>} : vector<19x256xf32>, vector<256x152xf32>, vector<19x152xf32> -> vector<19x152xf32>
    %54 = arith.maximumf %50, %53 : vector<19x152xf32>
    %c2_54 = arith.constant 2 : index
    %c0_55 = arith.constant 0 : index
    %c0_56 = arith.constant 0 : index
    %55 = vector.load %arg6[%c2_54, %c0_55, %c0_56] : memref<3x256x152xf32, #tpu.memory_space<vmem>>, vector<1x256x152xf32>
    %56 = vector.shape_cast %55 : vector<1x256x152xf32> to vector<256x152xf32>
    %cst_57 = arith.constant dense<0.000000e+00> : vector<19x152xf32>
    %57 = tpu.matmul %47, %56, %cst_57 {dimension_numbers = #tpu.dot_dimension_numbers<[1], [0], [0], [1], [0, 0, 1, 1], [], []>} : vector<19x256xf32>, vector<256x152xf32>, vector<19x152xf32> -> vector<19x152xf32>
    %58 = arith.maximumf %54, %57 : vector<19x152xf32>
    %c0_58 = arith.constant 0 : index
    %c0_59 = arith.constant 0 : index
    %59 = vector.load %arg21[%c0_58, %c0_59] : memref<19x152xf32, #tpu.memory_space<vmem>>, vector<19x152xf32>
    tpu.vector_store %arg21[%c0_58, %c0_59], %58 {strides = array<i32>} : memref<19x152xf32, #tpu.memory_space<vmem>>, vector<19x152xf32>,
    %c0_60 = arith.constant 0 : index
    %c0_61 = arith.constant 0 : index
    %60 = vector.load %arg21[%c0_60, %c0_61] : memref<19x152xf32, #tpu.memory_space<vmem>>, vector<15x152xf32>
    %c0_62 = arith.constant 0 : index
    %c0_63 = arith.constant 0 : index
    %c0_64 = arith.constant 0 : index
    %61 = vector.load %arg7[%c0_62, %c0_63, %c0_64] : memref<5x152x240xf32, #tpu.memory_space<vmem>>, vector<1x152x240xf32>
    %62 = vector.shape_cast %61 : vector<1x152x240xf32> to vector<152x240xf32>
    %cst_65 = arith.constant dense<0.000000e+00> : vector<15x240xf32>
    %63 = tpu.matmul %60, %62, %cst_65 {dimension_numbers = #tpu.dot_dimension_numbers<[1], [0], [0], [1], [0, 0, 1, 1], [], []>} : vector<15x152xf32>, vector<152x240xf32>, vector<15x240xf32> -> vector<15x240xf32>
    %c1_66 = arith.constant 1 : index
    %c0_67 = arith.constant 0 : index
    %64 = vector.load %arg21[%c1_66, %c0_67] : memref<19x152xf32, #tpu.memory_space<vmem>>, vector<15x152xf32>
    %c1_68 = arith.constant 1 : index
    %c0_69 = arith.constant 0 : index
    %c0_70 = arith.constant 0 : index
    %65 = vector.load %arg7[%c1_68, %c0_69, %c0_70] : memref<5x152x240xf32, #tpu.memory_space<vmem>>, vector<1x152x240xf32>
    %66 = vector.shape_cast %65 : vector<1x152x240xf32> to vector<152x240xf32>
    %cst_71 = arith.constant dense<0.000000e+00> : vector<15x240xf32>
    %67 = tpu.matmul %64, %66, %cst_71 {dimension_numbers = #tpu.dot_dimension_numbers<[1], [0], [0], [1], [0, 0, 1, 1], [], []>} : vector<15x152xf32>, vector<152x240xf32>, vector<15x240xf32> -> vector<15x240xf32>
    %68 = arith.addf %63, %67 : vector<15x240xf32>
    %c2_72 = arith.constant 2 : index
    %c0_73 = arith.constant 0 : index
    %69 = vector.load %arg21[%c2_72, %c0_73] : memref<19x152xf32, #tpu.memory_space<vmem>>, vector<15x152xf32>
    %c2_74 = arith.constant 2 : index
    %c0_75 = arith.constant 0 : index
    %c0_76 = arith.constant 0 : index
    %70 = vector.load %arg7[%c2_74, %c0_75, %c0_76] : memref<5x152x240xf32, #tpu.memory_space<vmem>>, vector<1x152x240xf32>
    %71 = vector.shape_cast %70 : vector<1x152x240xf32> to vector<152x240xf32>
    %cst_77 = arith.constant dense<0.000000e+00> : vector<15x240xf32>
    %72 = tpu.matmul %69, %71, %cst_77 {dimension_numbers = #tpu.dot_dimension_numbers<[1], [0], [0], [1], [0, 0, 1, 1], [], []>} : vector<15x152xf32>, vector<152x240xf32>, vector<15x240xf32> -> vector<15x240xf32>
    %73 = arith.addf %68, %72 : vector<15x240xf32>
    %c3_78 = arith.constant 3 : index
    %c0_79 = arith.constant 0 : index
    %74 = vector.load %arg21[%c3_78, %c0_79] : memref<19x152xf32, #tpu.memory_space<vmem>>, vector<15x152xf32>
    %c3_80 = arith.constant 3 : index
    %c0_81 = arith.constant 0 : index
    %c0_82 = arith.constant 0 : index
    %75 = vector.load %arg7[%c3_80, %c0_81, %c0_82] : memref<5x152x240xf32, #tpu.memory_space<vmem>>, vector<1x152x240xf32>
    %76 = vector.shape_cast %75 : vector<1x152x240xf32> to vector<152x240xf32>
    %cst_83 = arith.constant dense<0.000000e+00> : vector<15x240xf32>
    %77 = tpu.matmul %74, %76, %cst_83 {dimension_numbers = #tpu.dot_dimension_numbers<[1], [0], [0], [1], [0, 0, 1, 1], [], []>} : vector<15x152xf32>, vector<152x240xf32>, vector<15x240xf32> -> vector<15x240xf32>
    %78 = arith.addf %73, %77 : vector<15x240xf32>
    %c4_84 = arith.constant 4 : index
    %c0_85 = arith.constant 0 : index
    %79 = vector.load %arg21[%c4_84, %c0_85] : memref<19x152xf32, #tpu.memory_space<vmem>>, vector<15x152xf32>
    %c4_86 = arith.constant 4 : index
    %c0_87 = arith.constant 0 : index
    %c0_88 = arith.constant 0 : index
    %80 = vector.load %arg7[%c4_86, %c0_87, %c0_88] : memref<5x152x240xf32, #tpu.memory_space<vmem>>, vector<1x152x240xf32>
    %81 = vector.shape_cast %80 : vector<1x152x240xf32> to vector<152x240xf32>
    %cst_89 = arith.constant dense<0.000000e+00> : vector<15x240xf32>
    %82 = tpu.matmul %79, %81, %cst_89 {dimension_numbers = #tpu.dot_dimension_numbers<[1], [0], [0], [1], [0, 0, 1, 1], [], []>} : vector<15x152xf32>, vector<152x240xf32>, vector<15x240xf32> -> vector<15x240xf32>
    %83 = arith.addf %78, %82 : vector<15x240xf32>
    %c0_90 = arith.constant 0 : index
    %c0_91 = arith.constant 0 : index
    %84 = vector.load %arg8[%c0_90, %c0_91] : memref<1x240xf32, #tpu.memory_space<vmem>>, vector<1x240xf32>
    %85 = vector.broadcast %84 : vector<1x240xf32> to vector<15x240xf32>
    %86 = arith.mulf %83, %85 : vector<15x240xf32>
    %c0_92 = arith.constant 0 : index
    %c0_93 = arith.constant 0 : index
    %87 = vector.load %arg9[%c0_92, %c0_93] : memref<1x240xf32, #tpu.memory_space<vmem>>, vector<1x240xf32>
    %88 = vector.broadcast %87 : vector<1x240xf32> to vector<15x240xf32>
    %89 = arith.addf %86, %88 : vector<15x240xf32>
    %cst_94 = arith.constant 0.000000e+00 : f32
    %90 = vector.broadcast %cst_94 : f32 to vector<15x240xf32>
    %91 = arith.maximumf %89, %90 : vector<15x240xf32>
    %c0_95 = arith.constant 0 : index
    %c0_96 = arith.constant 0 : index
    %92 = vector.load %arg10[%c0_95, %c0_96] : memref<11x15xf32, #tpu.memory_space<vmem>>, vector<11x15xf32>
    %cst_97 = arith.constant dense<0.000000e+00> : vector<11x240xf32>
    %93 = tpu.matmul %92, %91, %cst_97 {dimension_numbers = #tpu.dot_dimension_numbers<[1], [0], [0], [1], [0, 0, 1, 1], [], []>} : vector<11x15xf32>, vector<15x240xf32>, vector<11x240xf32> -> vector<11x240xf32>
    %c0_98 = arith.constant 0 : index
    %c0_99 = arith.constant 0 : index
    %94 = vector.load %arg11[%c0_98, %c0_99] : memref<240x176xf32, #tpu.memory_space<vmem>>, vector<240x176xf32>
    %cst_100 = arith.constant dense<0.000000e+00> : vector<11x176xf32>
    %95 = tpu.matmul %93, %94, %cst_100 {dimension_numbers = #tpu.dot_dimension_numbers<[1], [0], [0], [1], [0, 0, 1, 1], [], []>} : vector<11x240xf32>, vector<240x176xf32>, vector<11x176xf32> -> vector<11x176xf32>
    %c0_101 = arith.constant 0 : index
    %c0_102 = arith.constant 0 : index
    %96 = vector.load %arg22[%c0_101, %c0_102] : memref<11x176xf32, #tpu.memory_space<vmem>>, vector<11x176xf32>
    tpu.vector_store %arg22[%c0_101, %c0_102], %95 {strides = array<i32>} : memref<11x176xf32, #tpu.memory_space<vmem>>, vector<11x176xf32>,
    %c0_103 = arith.constant 0 : index
    %c0_104 = arith.constant 0 : index
    %97 = vector.load %arg22[%c0_103, %c0_104] : memref<11x176xf32, #tpu.memory_space<vmem>>, vector<7x176xf32>
    %c0_105 = arith.constant 0 : index
    %c0_106 = arith.constant 0 : index
    %c0_107 = arith.constant 0 : index
    %98 = vector.load %arg12[%c0_105, %c0_106, %c0_107] : memref<5x176x224xf32, #tpu.memory_space<vmem>>, vector<1x176x224xf32>
    %99 = vector.shape_cast %98 : vector<1x176x224xf32> to vector<176x224xf32>
    %cst_108 = arith.constant dense<0.000000e+00> : vector<7x224xf32>
    %100 = tpu.matmul %97, %99, %cst_108 {dimension_numbers = #tpu.dot_dimension_numbers<[1], [0], [0], [1], [0, 0, 1, 1], [], []>} : vector<7x176xf32>, vector<176x224xf32>, vector<7x224xf32> -> vector<7x224xf32>
    %c1_109 = arith.constant 1 : index
    %c0_110 = arith.constant 0 : index
    %101 = vector.load %arg22[%c1_109, %c0_110] : memref<11x176xf32, #tpu.memory_space<vmem>>, vector<7x176xf32>
    %c1_111 = arith.constant 1 : index
    %c0_112 = arith.constant 0 : index
    %c0_113 = arith.constant 0 : index
    %102 = vector.load %arg12[%c1_111, %c0_112, %c0_113] : memref<5x176x224xf32, #tpu.memory_space<vmem>>, vector<1x176x224xf32>
    %103 = vector.shape_cast %102 : vector<1x176x224xf32> to vector<176x224xf32>
    %cst_114 = arith.constant dense<0.000000e+00> : vector<7x224xf32>
    %104 = tpu.matmul %101, %103, %cst_114 {dimension_numbers = #tpu.dot_dimension_numbers<[1], [0], [0], [1], [0, 0, 1, 1], [], []>} : vector<7x176xf32>, vector<176x224xf32>, vector<7x224xf32> -> vector<7x224xf32>
    %105 = arith.addf %100, %104 : vector<7x224xf32>
    %c2_115 = arith.constant 2 : index
    %c0_116 = arith.constant 0 : index
    %106 = vector.load %arg22[%c2_115, %c0_116] : memref<11x176xf32, #tpu.memory_space<vmem>>, vector<7x176xf32>
    %c2_117 = arith.constant 2 : index
    %c0_118 = arith.constant 0 : index
    %c0_119 = arith.constant 0 : index
    %107 = vector.load %arg12[%c2_117, %c0_118, %c0_119] : memref<5x176x224xf32, #tpu.memory_space<vmem>>, vector<1x176x224xf32>
    %108 = vector.shape_cast %107 : vector<1x176x224xf32> to vector<176x224xf32>
    %cst_120 = arith.constant dense<0.000000e+00> : vector<7x224xf32>
    %109 = tpu.matmul %106, %108, %cst_120 {dimension_numbers = #tpu.dot_dimension_numbers<[1], [0], [0], [1], [0, 0, 1, 1], [], []>} : vector<7x176xf32>, vector<176x224xf32>, vector<7x224xf32> -> vector<7x224xf32>
    %110 = arith.addf %105, %109 : vector<7x224xf32>
    %c3_121 = arith.constant 3 : index
    %c0_122 = arith.constant 0 : index
    %111 = vector.load %arg22[%c3_121, %c0_122] : memref<11x176xf32, #tpu.memory_space<vmem>>, vector<7x176xf32>
    %c3_123 = arith.constant 3 : index
    %c0_124 = arith.constant 0 : index
    %c0_125 = arith.constant 0 : index
    %112 = vector.load %arg12[%c3_123, %c0_124, %c0_125] : memref<5x176x224xf32, #tpu.memory_space<vmem>>, vector<1x176x224xf32>
    %113 = vector.shape_cast %112 : vector<1x176x224xf32> to vector<176x224xf32>
    %cst_126 = arith.constant dense<0.000000e+00> : vector<7x224xf32>
    %114 = tpu.matmul %111, %113, %cst_126 {dimension_numbers = #tpu.dot_dimension_numbers<[1], [0], [0], [1], [0, 0, 1, 1], [], []>} : vector<7x176xf32>, vector<176x224xf32>, vector<7x224xf32> -> vector<7x224xf32>
    %115 = arith.addf %110, %114 : vector<7x224xf32>
    %c4_127 = arith.constant 4 : index
    %c0_128 = arith.constant 0 : index
    %116 = vector.load %arg22[%c4_127, %c0_128] : memref<11x176xf32, #tpu.memory_space<vmem>>, vector<7x176xf32>
    %c4_129 = arith.constant 4 : index
    %c0_130 = arith.constant 0 : index
    %c0_131 = arith.constant 0 : index
    %117 = vector.load %arg12[%c4_129, %c0_130, %c0_131] : memref<5x176x224xf32, #tpu.memory_space<vmem>>, vector<1x176x224xf32>
    %118 = vector.shape_cast %117 : vector<1x176x224xf32> to vector<176x224xf32>
    %cst_132 = arith.constant dense<0.000000e+00> : vector<7x224xf32>
    %119 = tpu.matmul %116, %118, %cst_132 {dimension_numbers = #tpu.dot_dimension_numbers<[1], [0], [0], [1], [0, 0, 1, 1], [], []>} : vector<7x176xf32>, vector<176x224xf32>, vector<7x224xf32> -> vector<7x224xf32>
    %120 = arith.addf %115, %119 : vector<7x224xf32>
    %c0_133 = arith.constant 0 : index
    %c0_134 = arith.constant 0 : index
    %121 = vector.load %arg13[%c0_133, %c0_134] : memref<1x224xf32, #tpu.memory_space<vmem>>, vector<1x224xf32>
    %122 = vector.broadcast %121 : vector<1x224xf32> to vector<7x224xf32>
    %123 = arith.mulf %120, %122 : vector<7x224xf32>
    %c0_135 = arith.constant 0 : index
    %c0_136 = arith.constant 0 : index
    %124 = vector.load %arg14[%c0_135, %c0_136] : memref<1x224xf32, #tpu.memory_space<vmem>>, vector<1x224xf32>
    %125 = vector.broadcast %124 : vector<1x224xf32> to vector<7x224xf32>
    %126 = arith.addf %123, %125 : vector<7x224xf32>
    %cst_137 = arith.constant 0.000000e+00 : f32
    %127 = vector.broadcast %cst_137 : f32 to vector<7x224xf32>
    %128 = arith.maximumf %126, %127 : vector<7x224xf32>
    %c0_138 = arith.constant 0 : index
    %c0_139 = arith.constant 0 : index
    %c0_140 = arith.constant 0 : index
    %129 = vector.load %arg20[%c0_138, %c0_139, %c0_140] : memref<1x7x224xf32, #tpu.memory_space<vmem>>, vector<1x7x224xf32>
    %130 = vector.shape_cast %129 : vector<1x7x224xf32> to vector<7x224xf32>
    %131 = vector.shape_cast %128 : vector<7x224xf32> to vector<1x7x224xf32>
    tpu.vector_store %arg20[%c0_138, %c0_139, %c0_140], %131 {strides = array<i32>} : memref<1x7x224xf32, #tpu.memory_space<vmem>>, vector<1x7x224xf32>,
    %c0_141 = arith.constant 0 : index
    %c0_142 = arith.constant 0 : index
    %132 = vector.load %arg16[%c0_141, %c0_142] : memref<1x128xf32, #tpu.memory_space<vmem>>, vector<1x128xf32>
    %133 = vector.extract_strided_slice %128 {offsets = [0, 0], sizes = [1, 224], strides = [1, 1]} : vector<7x224xf32> to vector<1x224xf32>
    %c0_143 = arith.constant 0 : index
    %c0_144 = arith.constant 0 : index
    %c0_145 = arith.constant 0 : index
    %134 = vector.load %arg15[%c0_143, %c0_144, %c0_145] : memref<7x224x128xf32, #tpu.memory_space<vmem>>, vector<1x224x128xf32>
    %135 = vector.shape_cast %134 : vector<1x224x128xf32> to vector<224x128xf32>
    %cst_146 = arith.constant dense<0.000000e+00> : vector<1x128xf32>
    %136 = tpu.matmul %133, %135, %cst_146 {dimension_numbers = #tpu.dot_dimension_numbers<[1], [0], [0], [1], [0, 0, 1, 1], [], []>} : vector<1x224xf32>, vector<224x128xf32>, vector<1x128xf32> -> vector<1x128xf32>
    %137 = arith.addf %132, %136 : vector<1x128xf32>
    %138 = vector.extract_strided_slice %128 {offsets = [1, 0], sizes = [1, 224], strides = [1, 1]} : vector<7x224xf32> to vector<1x224xf32>
    %c1_147 = arith.constant 1 : index
    %c0_148 = arith.constant 0 : index
    %c0_149 = arith.constant 0 : index
    %139 = vector.load %arg15[%c1_147, %c0_148, %c0_149] : memref<7x224x128xf32, #tpu.memory_space<vmem>>, vector<1x224x128xf32>
    %140 = vector.shape_cast %139 : vector<1x224x128xf32> to vector<224x128xf32>
    %cst_150 = arith.constant dense<0.000000e+00> : vector<1x128xf32>
    %141 = tpu.matmul %138, %140, %cst_150 {dimension_numbers = #tpu.dot_dimension_numbers<[1], [0], [0], [1], [0, 0, 1, 1], [], []>} : vector<1x224xf32>, vector<224x128xf32>, vector<1x128xf32> -> vector<1x128xf32>
    %142 = arith.addf %137, %141 : vector<1x128xf32>
    %143 = vector.extract_strided_slice %128 {offsets = [2, 0], sizes = [1, 224], strides = [1, 1]} : vector<7x224xf32> to vector<1x224xf32>
    %c2_151 = arith.constant 2 : index
    %c0_152 = arith.constant 0 : index
    %c0_153 = arith.constant 0 : index
    %144 = vector.load %arg15[%c2_151, %c0_152, %c0_153] : memref<7x224x128xf32, #tpu.memory_space<vmem>>, vector<1x224x128xf32>
    %145 = vector.shape_cast %144 : vector<1x224x128xf32> to vector<224x128xf32>
    %cst_154 = arith.constant dense<0.000000e+00> : vector<1x128xf32>
    %146 = tpu.matmul %143, %145, %cst_154 {dimension_numbers = #tpu.dot_dimension_numbers<[1], [0], [0], [1], [0, 0, 1, 1], [], []>} : vector<1x224xf32>, vector<224x128xf32>, vector<1x128xf32> -> vector<1x128xf32>
    %147 = arith.addf %142, %146 : vector<1x128xf32>
    %148 = vector.extract_strided_slice %128 {offsets = [3, 0], sizes = [1, 224], strides = [1, 1]} : vector<7x224xf32> to vector<1x224xf32>
    %c3_155 = arith.constant 3 : index
    %c0_156 = arith.constant 0 : index
    %c0_157 = arith.constant 0 : index
    %149 = vector.load %arg15[%c3_155, %c0_156, %c0_157] : memref<7x224x128xf32, #tpu.memory_space<vmem>>, vector<1x224x128xf32>
    %150 = vector.shape_cast %149 : vector<1x224x128xf32> to vector<224x128xf32>
    %cst_158 = arith.constant dense<0.000000e+00> : vector<1x128xf32>
    %151 = tpu.matmul %148, %150, %cst_158 {dimension_numbers = #tpu.dot_dimension_numbers<[1], [0], [0], [1], [0, 0, 1, 1], [], []>} : vector<1x224xf32>, vector<224x128xf32>, vector<1x128xf32> -> vector<1x128xf32>
    %152 = arith.addf %147, %151 : vector<1x128xf32>
    %153 = vector.extract_strided_slice %128 {offsets = [4, 0], sizes = [1, 224], strides = [1, 1]} : vector<7x224xf32> to vector<1x224xf32>
    %c4_159 = arith.constant 4 : index
    %c0_160 = arith.constant 0 : index
    %c0_161 = arith.constant 0 : index
    %154 = vector.load %arg15[%c4_159, %c0_160, %c0_161] : memref<7x224x128xf32, #tpu.memory_space<vmem>>, vector<1x224x128xf32>
    %155 = vector.shape_cast %154 : vector<1x224x128xf32> to vector<224x128xf32>
    %cst_162 = arith.constant dense<0.000000e+00> : vector<1x128xf32>
    %156 = tpu.matmul %153, %155, %cst_162 {dimension_numbers = #tpu.dot_dimension_numbers<[1], [0], [0], [1], [0, 0, 1, 1], [], []>} : vector<1x224xf32>, vector<224x128xf32>, vector<1x128xf32> -> vector<1x128xf32>
    %157 = arith.addf %152, %156 : vector<1x128xf32>
    %158 = vector.extract_strided_slice %128 {offsets = [5, 0], sizes = [1, 224], strides = [1, 1]} : vector<7x224xf32> to vector<1x224xf32>
    %c5 = arith.constant 5 : index
    %c0_163 = arith.constant 0 : index
    %c0_164 = arith.constant 0 : index
    %159 = vector.load %arg15[%c5, %c0_163, %c0_164] : memref<7x224x128xf32, #tpu.memory_space<vmem>>, vector<1x224x128xf32>
    %160 = vector.shape_cast %159 : vector<1x224x128xf32> to vector<224x128xf32>
    %cst_165 = arith.constant dense<0.000000e+00> : vector<1x128xf32>
    %161 = tpu.matmul %158, %160, %cst_165 {dimension_numbers = #tpu.dot_dimension_numbers<[1], [0], [0], [1], [0, 0, 1, 1], [], []>} : vector<1x224xf32>, vector<224x128xf32>, vector<1x128xf32> -> vector<1x128xf32>
    %162 = arith.addf %157, %161 : vector<1x128xf32>
    %163 = vector.extract_strided_slice %128 {offsets = [6, 0], sizes = [1, 224], strides = [1, 1]} : vector<7x224xf32> to vector<1x224xf32>
    %c6 = arith.constant 6 : index
    %c0_166 = arith.constant 0 : index
    %c0_167 = arith.constant 0 : index
    %164 = vector.load %arg15[%c6, %c0_166, %c0_167] : memref<7x224x128xf32, #tpu.memory_space<vmem>>, vector<1x224x128xf32>
    %165 = vector.shape_cast %164 : vector<1x224x128xf32> to vector<224x128xf32>
    %cst_168 = arith.constant dense<0.000000e+00> : vector<1x128xf32>
    %166 = tpu.matmul %163, %165, %cst_168 {dimension_numbers = #tpu.dot_dimension_numbers<[1], [0], [0], [1], [0, 0, 1, 1], [], []>} : vector<1x224xf32>, vector<224x128xf32>, vector<1x128xf32> -> vector<1x128xf32>
    %167 = arith.addf %162, %166 : vector<1x128xf32>
    %cst_169 = arith.constant 0.000000e+00 : f32
    %168 = vector.broadcast %cst_169 : f32 to vector<1x128xf32>
    %169 = arith.maximumf %167, %168 : vector<1x128xf32>
    %c0_170 = arith.constant 0 : index
    %c0_171 = arith.constant 0 : index
    %170 = vector.load %arg17[%c0_170, %c0_171] : memref<128x128xf32, #tpu.memory_space<vmem>>, vector<128x128xf32>
    %cst_172 = arith.constant dense<0.000000e+00> : vector<1x128xf32>
    %171 = tpu.matmul %169, %170, %cst_172 {dimension_numbers = #tpu.dot_dimension_numbers<[1], [0], [0], [1], [0, 0, 1, 1], [], []>} : vector<1x128xf32>, vector<128x128xf32>, vector<1x128xf32> -> vector<1x128xf32>
    %c0_173 = arith.constant 0 : index
    %c0_174 = arith.constant 0 : index
    %172 = vector.load %arg18[%c0_173, %c0_174] : memref<1x128xf32, #tpu.memory_space<vmem>>, vector<1x128xf32>
    %173 = arith.addf %171, %172 : vector<1x128xf32>
    %c0_175 = arith.constant 0 : index
    %c0_176 = arith.constant 0 : index
    %c0_177 = arith.constant 0 : index
    %174 = vector.load %arg19[%c0_175, %c0_176, %c0_177] : memref<1x1x128xf32, #tpu.memory_space<vmem>>, vector<1x1x128xf32>
    %175 = vector.shape_cast %174 : vector<1x1x128xf32> to vector<1x128xf32>
    %176 = vector.shape_cast %173 : vector<1x128xf32> to vector<1x1x128xf32>
    tpu.vector_store %arg19[%c0_175, %c0_176, %c0_177], %176 {strides = array<i32>} : memref<1x1x128xf32, #tpu.memory_space<vmem>>, vector<1x1x128xf32>,
    return
  }
  func.func @transform_0(%arg0: i32) -> (i32, i32, i32) {
    %c0_i32 = arith.constant 0 : i32
    %c0_i32_0 = arith.constant 0 : i32
    %c0_i32_1 = arith.constant 0 : i32
    return %arg0, %c0_i32, %c0_i32_0 : i32, i32, i32
  }
  func.func @transform_1(%arg0: i32) -> (i32, i32, i32) {
    %c0_i32 = arith.constant 0 : i32
    %c0_i32_0 = arith.constant 0 : i32
    %c0_i32_1 = arith.constant 0 : i32
    %c0_i32_2 = arith.constant 0 : i32
    return %c0_i32, %c0_i32_0, %c0_i32_1 : i32, i32, i32
  }
  func.func @transform_2(%arg0: i32) -> (i32, i32) {
    %c0_i32 = arith.constant 0 : i32
    %c0_i32_0 = arith.constant 0 : i32
    %c0_i32_1 = arith.constant 0 : i32
    return %c0_i32, %c0_i32_0 : i32, i32
  }
  func.func @transform_3(%arg0: i32) -> (i32, i32) {
    %c0_i32 = arith.constant 0 : i32
    %c0_i32_0 = arith.constant 0 : i32
    %c0_i32_1 = arith.constant 0 : i32
    return %c0_i32, %c0_i32_0 : i32, i32
  }
  func.func @transform_4(%arg0: i32) -> (i32, i32, i32) {
    %c0_i32 = arith.constant 0 : i32
    %c0_i32_0 = arith.constant 0 : i32
    %c0_i32_1 = arith.constant 0 : i32
    %c0_i32_2 = arith.constant 0 : i32
    return %c0_i32, %c0_i32_0, %c0_i32_1 : i32, i32, i32
  }
  func.func @transform_5(%arg0: i32) -> (i32, i32, i32) {
    %c0_i32 = arith.constant 0 : i32
    %c0_i32_0 = arith.constant 0 : i32
    %c0_i32_1 = arith.constant 0 : i32
    %c0_i32_2 = arith.constant 0 : i32
    return %c0_i32, %c0_i32_0, %c0_i32_1 : i32, i32, i32
  }
  func.func @transform_6(%arg0: i32) -> (i32, i32, i32) {
    %c0_i32 = arith.constant 0 : i32
    %c0_i32_0 = arith.constant 0 : i32
    %c0_i32_1 = arith.constant 0 : i32
    %c0_i32_2 = arith.constant 0 : i32
    return %c0_i32, %c0_i32_0, %c0_i32_1 : i32, i32, i32
  }
  func.func @transform_7(%arg0: i32) -> (i32, i32) {
    %c0_i32 = arith.constant 0 : i32
    %c0_i32_0 = arith.constant 0 : i32
    %c0_i32_1 = arith.constant 0 : i32
    return %c0_i32, %c0_i32_0 : i32, i32
  }
  func.func @transform_8(%arg0: i32) -> (i32, i32) {
    %c0_i32 = arith.constant 0 : i32
    %c0_i32_0 = arith.constant 0 : i32
    %c0_i32_1 = arith.constant 0 : i32
    return %c0_i32, %c0_i32_0 : i32, i32
  }
  func.func @transform_9(%arg0: i32) -> (i32, i32) {
    %c0_i32 = arith.constant 0 : i32
    %c0_i32_0 = arith.constant 0 : i32
    %c0_i32_1 = arith.constant 0 : i32
    return %c0_i32, %c0_i32_0 : i32, i32
  }
  func.func @transform_10(%arg0: i32) -> (i32, i32) {
    %c0_i32 = arith.constant 0 : i32
    %c0_i32_0 = arith.constant 0 : i32
    %c0_i32_1 = arith.constant 0 : i32
    return %c0_i32, %c0_i32_0 : i32, i32
  }
  func.func @transform_11(%arg0: i32) -> (i32, i32, i32) {
    %c0_i32 = arith.constant 0 : i32
    %c0_i32_0 = arith.constant 0 : i32
    %c0_i32_1 = arith.constant 0 : i32
    %c0_i32_2 = arith.constant 0 : i32
    return %c0_i32, %c0_i32_0, %c0_i32_1 : i32, i32, i32
  }
  func.func @transform_12(%arg0: i32) -> (i32, i32) {
    %c0_i32 = arith.constant 0 : i32
    %c0_i32_0 = arith.constant 0 : i32
    %c0_i32_1 = arith.constant 0 : i32
    return %c0_i32, %c0_i32_0 : i32, i32
  }
  func.func @transform_13(%arg0: i32) -> (i32, i32) {
    %c0_i32 = arith.constant 0 : i32
    %c0_i32_0 = arith.constant 0 : i32
    %c0_i32_1 = arith.constant 0 : i32
    return %c0_i32, %c0_i32_0 : i32, i32
  }
  func.func @transform_14(%arg0: i32) -> (i32, i32, i32) {
    %c0_i32 = arith.constant 0 : i32
    %c0_i32_0 = arith.constant 0 : i32
    %c0_i32_1 = arith.constant 0 : i32
    %c0_i32_2 = arith.constant 0 : i32
    return %c0_i32, %c0_i32_0, %c0_i32_1 : i32, i32, i32
  }
  func.func @transform_15(%arg0: i32) -> (i32, i32) {
    %c0_i32 = arith.constant 0 : i32
    %c0_i32_0 = arith.constant 0 : i32
    %c0_i32_1 = arith.constant 0 : i32
    return %c0_i32, %c0_i32_0 : i32, i32
  }
  func.func @transform_16(%arg0: i32) -> (i32, i32) {
    %c0_i32 = arith.constant 0 : i32
    %c0_i32_0 = arith.constant 0 : i32
    %c0_i32_1 = arith.constant 0 : i32
    return %c0_i32, %c0_i32_0 : i32, i32
  }
  func.func @transform_17(%arg0: i32) -> (i32, i32) {
    %c0_i32 = arith.constant 0 : i32
    %c0_i32_0 = arith.constant 0 : i32
    %c0_i32_1 = arith.constant 0 : i32
    return %c0_i32, %c0_i32_0 : i32, i32
  }
  func.func @transform_18(%arg0: i32) -> (i32, i32, i32) {
    %c0_i32 = arith.constant 0 : i32
    %c0_i32_0 = arith.constant 0 : i32
    %c0_i32_1 = arith.constant 0 : i32
    return %arg0, %c0_i32, %c0_i32_0 : i32, i32, i32
  }
  func.func @transform_19(%arg0: i32) -> (i32, i32, i32) {
    %c0_i32 = arith.constant 0 : i32
    %c0_i32_0 = arith.constant 0 : i32
    %c0_i32_1 = arith.constant 0 : i32
    return %arg0, %c0_i32, %c0_i32_0 : i32, i32, i32
  }
}

</mosaic_0001>

<llo_original>
// kernel: tpu_custom_call.1
$region0: #{tpu_custom_call.1}
  #allocation0 [shape = 'u32[]', space=smem, size = 0x4, offset = 0x4, fixed_abs, tag = 'smem constant byte address 0x4 - core index']
  #allocation1 [shape = 'u32[144,128]{1,0:T(1,128)}', space=vmem, size = 0x12000, scoped, tag = 'internal scratch']
  #allocation2 [shape = 'f32[19,152]{1,0:T(8,128)}', space=vmem, size = 0x6000, scoped, tag = 'scratch operand']
  #allocation3 [shape = 'f32[11,176]{1,0:T(8,128)}', space=vmem, size = 0x4000, scoped, tag = 'scratch operand']
  %s0 = inlined_call_operand.vmem [shape: f32[2,36,108], index: 0, kind: input, shape index: {}]
  %s1 = inlined_call_operand.hbm [shape: f32[5,108,256], index: 1, kind: input, shape index: {}]
  %s2 = inlined_call_operand.hbm [shape: f32[1,256], index: 2, kind: input, shape index: {}]
  %s3 = inlined_call_operand.hbm [shape: f32[1,256], index: 3, kind: input, shape index: {}]
  %s4 = inlined_call_operand.hbm [shape: f32[3,19,32], index: 4, kind: input, shape index: {}]
  %s5 = inlined_call_operand.vmem [shape: f32[3,256,152], index: 5, kind: input, shape index: {}]
  %s6 = inlined_call_operand.hbm [shape: f32[5,152,240], index: 6, kind: input, shape index: {}]
  %s7 = inlined_call_operand.hbm [shape: f32[1,240], index: 7, kind: input, shape index: {}]
  %s8 = inlined_call_operand.hbm [shape: f32[1,240], index: 8, kind: input, shape index: {}]
  %s9 = inlined_call_operand.vmem [shape: f32[11,15], index: 9, kind: input, shape index: {}]
  %s10 = inlined_call_operand.vmem [shape: f32[240,176], index: 10, kind: input, shape index: {}]
  %s11 = inlined_call_operand.vmem [shape: f32[5,176,224], index: 11, kind: input, shape index: {}]
  %s12 = inlined_call_operand.hbm [shape: f32[1,224], index: 12, kind: input, shape index: {}]
  %s13 = inlined_call_operand.hbm [shape: f32[1,224], index: 13, kind: input, shape index: {}]
  %s14 = inlined_call_operand.vmem [shape: f32[7,224,128], index: 14, kind: input, shape index: {}]
  %s15 = inlined_call_operand.vmem [shape: f32[1,128], index: 15, kind: input, shape index: {}]
  %s16 = inlined_call_operand.vmem [shape: f32[128,128], index: 16, kind: input, shape index: {}]
  %s17 = inlined_call_operand.hbm [shape: f32[1,128], index: 17, kind: input, shape index: {}]
  %s18 = inlined_call_operand.hbm [shape: f32[2,1,128], index: 18, kind: output, shape index: {0}]
  %s19 = inlined_call_operand.vmem [shape: f32[2,7,224], index: 19, kind: output, shape index: {1}]
  %20 = xla_tuple %s18, %s19
  %s21 = sld [smem:[#allocation0]]
  $region153: #{tpu_custom_call.1} parent=0
    _
  %s23 = ssub.s32 1, %s21
  %s24 = scalar_select 0, %s23, %s21
  $region1: #{tpu_custom_call.1} parent=0
    #allocation4 [shape = 'u8[573440]{0}', space=vmem, size = 0x8c000, scoped, tag = 'input window, operand 1, single buffered']
    #allocation5 [shape = 's32[2]{0}', space=sflag, size = 0x8, scoped, tag = 'scoped memory for tpu_custom_call.1']
    #allocation6 [shape = 's32[2]{0}', space=sflag, size = 0x8, scoped, tag = 'scoped memory for tpu_custom_call.1']
    #allocation7 [shape = 'u8[1024]{0}', space=vmem, size = 0x400, scoped, tag = 'input window, operand 2, single buffered']
    #allocation8 [shape = 's32[1]{0}', space=sflag, size = 0x4, scoped, tag = 'scoped memory for tpu_custom_call.1']
    #allocation9 [shape = 'u8[1024]{0}', space=vmem, size = 0x400, scoped, tag = 'input window, operand 3, single buffered']
    #allocation10 [shape = 'u8[36864]{0}', space=vmem, size = 0x9000, scoped, tag = 'input window, operand 4, single buffered']
    #allocation11 [shape = 's32[1]{0}', space=sflag, size = 0x4, scoped, tag = 'scoped memory for tpu_custom_call.1']
    #allocation12 [shape = 'u8[778240]{0}', space=vmem, size = 0xbe000, scoped, tag = 'input window, operand 6, single buffered']
    #allocation13 [shape = 'u8[1024]{0}', space=vmem, size = 0x400, scoped, tag = 'input window, operand 7, single buffered']
    #allocation14 [shape = 's32[1]{0}', space=sflag, size = 0x4, scoped, tag = 'scoped memory for tpu_custom_call.1']
    #allocation15 [shape = 'u8[1024]{0}', space=vmem, size = 0x400, scoped, tag = 'input window, operand 8, single buffered']
    #allocation16 [shape = 'u8[1024]{0}', space=vmem, size = 0x400, scoped, tag = 'input window, operand 12, single buffered']
    #allocation17 [shape = 's32[1]{0}', space=sflag, size = 0x4, scoped, tag = 'scoped memory for tpu_custom_call.1']
    #allocation18 [shape = 'u8[1024]{0}', space=vmem, size = 0x400, scoped, tag = 'input window, operand 13, single buffered']
    #allocation19 [shape = 'u8[512]{0}', space=vmem, size = 0x400, scoped, tag = 'input window, operand 17, single buffered']
    #allocation20 [shape = 's32[1]{0}', space=sflag, size = 0x4, scoped, tag = 'scoped memory for tpu_custom_call.1']
    #allocation21 [shape = 'u8[1024]{0}', space=vmem, size = 0x400, scoped, tag = 'output window, operand 0']
    %25 = vsyncpa [#allocation5], 0
    %26 = vsyncpa [#allocation8], 0
    %27 = vsyncpa [#allocation11], 0
    %28 = vsyncpa [#allocation14], 0
    %29 = vsyncpa [#allocation17], 0
    %30 = vsyncpa [#allocation20], 0
    %31 = vsyncpa [#allocation6], 0
    %s32 = scalar_lea.sflag [#allocation6], 1
    %33 = vsyncpa %s32, 0
    loop: start=0, step=1, limit=4
    $region2: #{tpu_custom_call.1} parent=1 // loop_pre_header
      _
    $region3: #{tpu_custom_call.1} parent=1 // loop_header
      %s35 = sphi 0, %s39
      %p36 = scmp.ge.s32.totalorder %s35, 4
      %s45 = sphi 0, %s47
      %s48 = sphi 0, %s45
      %s49 = sphi 0, %s48
      %s65 = sphi 0, %s49
      %s69 = sphi 0, %s69
      %s71 = sphi 0, %s69
      %s72 = sphi 0, %s71
      %s86 = sphi 0, %s72
      %s90 = sphi 0, %s90
      %s92 = sphi 0, %s90
      %s93 = sphi 0, %s92
      %s107 = sphi 0, %s93
      %s111 = sphi 0, %s111
      %s113 = sphi 0, %s111
      %s114 = sphi 0, %s113
      %s128 = sphi 0, %s114
      %s132 = sphi 0, %s132
      %s134 = sphi 0, %s132
      %s135 = sphi 0, %s134
      %s149 = sphi 0, %s135
      %s153 = sphi 0, %s153
      %s155 = sphi 0, %s153
      %s156 = sphi 0, %s155
      %s170 = sphi 0, %s156
      %s174 = sphi 0, %s174
      %s176 = sphi 0, %s174
      %s177 = sphi 0, %s176
      %s191 = sphi 0, %s177
      %s195 = sphi 0, %s195
      %s197 = sphi 0, %s195
      %s198 = sphi 0, %s197
      %s212 = sphi 0, %s198
      %s216 = sphi 0, %s216
      %s218 = sphi 0, %s216
      %s219 = sphi 0, %s218
      %s233 = sphi 0, %s219
      %s237 = sphi 0, %s237
      %s239 = sphi 0, %s237
      %s240 = sphi 0, %s239
      %s254 = sphi 0, %s240
      %s258 = sphi 0, %s258
      %s260 = sphi 0, %s258
      %s261 = sphi 0, %s260
      %s275 = sphi 0, %s261
      %s279 = sphi 0, %s279
      %s281 = sphi 0, %s279
      %s282 = sphi 0, %s281
      %s296 = sphi 0, %s282
      %s300 = sphi 0, %s300
      %s302 = sphi 0, %s300
      %s303 = sphi 0, %s302
      %s317 = sphi 0, %s303
      %s321 = sphi 0, %s321
      %s323 = sphi 0, %s321
      %s324 = sphi 0, %s323
      %s338 = sphi 0, %s324
      %s342 = sphi 0, %s342
      %s344 = sphi 0, %s342
      %s345 = sphi 0, %s344
      %s359 = sphi 0, %s345
      %s363 = sphi 0, %s363
      %s365 = sphi 0, %s363
      %s366 = sphi 0, %s365
      %s380 = sphi 0, %s366
      %s384 = sphi 0, %s384
      %s386 = sphi 0, %s384
      %s387 = sphi 0, %s386
      %s401 = sphi 0, %s387
      %s405 = sphi 0, %s405
      %s407 = sphi 0, %s405
      %s408 = sphi 0, %s407
      %s422 = sphi 0, %s408
      %s428 = sphi 0, %s430
      %s431 = sphi 0, %s428
      %s432 = sphi 0, %s431
      %s448 = sphi 0, %s432
      %s454 = sphi 0, %s456
      %s457 = sphi 0, %s454
      %s458 = sphi 0, %s457
      %s474 = sphi 0, %s458
    $region4: #{tpu_custom_call.1} parent=1 // loop_header_branch
      %38 = sbr.rel (%p36) target = $region8
    $region5: #{tpu_custom_call.1} parent=1 // loop_body
      %s40 = ssub.s32 %s35, 1
      %s41 = ssub.s32 %s35, 2
      %s42 = sadd.s32 %s35, 1
      %s43 = ssub.s32 %s35, %s42
      %p44 = scmp.eq.s32.totalorder %s43, 0
      %s46 = sadd.s32 %s45, 1
      %s47 = scalar_select %p44, %s45, %s46
      %p50 = pneg %p44
      %p51 = scmp.eq.s32.totalorder %s35, 1
      %p52 = por %p50, %p51
      %p53 = scmp.ne.s32.totalorder %s45, %s48
      %p54 = scmp.eq.s32.totalorder %s35, 0
      %p55 = por %p53, %p54
      %p56 = scmp.ne.s32.totalorder %s45, %s48
      %p57 = scmp.eq.s32.totalorder %s40, 1
      %p58 = por %p56, %p57
      %p59 = scmp.ne.s32.totalorder %s48, %s49
      %p60 = scmp.eq.s32.totalorder %s40, 0
      %p61 = por %p59, %p60
      %p62 = scmp.ne.s32.totalorder %s48, %s49
      %p63 = scmp.eq.s32.totalorder %s41, 1
      %p64 = por %p62, %p63
      %p66 = scmp.ne.s32.totalorder %s49, %s65
      %p67 = scmp.eq.s32.totalorder %s41, 0
      %p68 = por %p66, %p67
      %s70 = sadd.s32 %s69, 1
      %p73 = scmp.eq.s32.totalorder %s35, 1
      %p74 = scmp.ne.s32.totalorder %s69, %s71
      %p75 = scmp.eq.s32.totalorder %s35, 0
      %p76 = por %p74, %p75
      %p77 = scmp.ne.s32.totalorder %s69, %s71
      %p78 = scmp.eq.s32.totalorder %s40, 1
      %p79 = por %p77, %p78
      %p80 = scmp.ne.s32.totalorder %s71, %s72
      %p81 = scmp.eq.s32.totalorder %s40, 0
      %p82 = por %p80, %p81
      %p83 = scmp.ne.s32.totalorder %s71, %s72
      %p84 = scmp.eq.s32.totalorder %s41, 1
      %p85 = por %p83, %p84
      %p87 = scmp.ne.s32.totalorder %s72, %s86
      %p88 = scmp.eq.s32.totalorder %s41, 0
      %p89 = por %p87, %p88
      %s91 = sadd.s32 %s90, 1
      %p94 = scmp.eq.s32.totalorder %s35, 1
      %p95 = scmp.ne.s32.totalorder %s90, %s92
      %p96 = scmp.eq.s32.totalorder %s35, 0
      %p97 = por %p95, %p96
      %p98 = scmp.ne.s32.totalorder %s90, %s92
      %p99 = scmp.eq.s32.totalorder %s40, 1
      %p100 = por %p98, %p99
      %p101 = scmp.ne.s32.totalorder %s92, %s93
      %p102 = scmp.eq.s32.totalorder %s40, 0
      %p103 = por %p101, %p102
      %p104 = scmp.ne.s32.totalorder %s92, %s93
      %p105 = scmp.eq.s32.totalorder %s41, 1
      %p106 = por %p104, %p105
      %p108 = scmp.ne.s32.totalorder %s93, %s107
      %p109 = scmp.eq.s32.totalorder %s41, 0
      %p110 = por %p108, %p109
      %s112 = sadd.s32 %s111, 1
      %p115 = scmp.eq.s32.totalorder %s35, 1
      %p116 = scmp.ne.s32.totalorder %s111, %s113
      %p117 = scmp.eq.s32.totalorder %s35, 0
      %p118 = por %p116, %p117
      %p119 = scmp.ne.s32.totalorder %s111, %s113
      %p120 = scmp.eq.s32.totalorder %s40, 1
      %p121 = por %p119, %p120
      %p122 = scmp.ne.s32.totalorder %s113, %s114
      %p123 = scmp.eq.s32.totalorder %s40, 0
      %p124 = por %p122, %p123
      %p125 = scmp.ne.s32.totalorder %s113, %s114
      %p126 = scmp.eq.s32.totalorder %s41, 1
      %p127 = por %p125, %p126
      %p129 = scmp.ne.s32.totalorder %s114, %s128
      %p130 = scmp.eq.s32.totalorder %s41, 0
      %p131 = por %p129, %p130
      %s133 = sadd.s32 %s132, 1
      %p136 = scmp.eq.s32.totalorder %s35, 1
      %p137 = scmp.ne.s32.totalorder %s132, %s134
      %p138 = scmp.eq.s32.totalorder %s35, 0
      %p139 = por %p137, %p138
      %p140 = scmp.ne.s32.totalorder %s132, %s134
      %p141 = scmp.eq.s32.totalorder %s40, 1
      %p142 = por %p140, %p141
      %p143 = scmp.ne.s32.totalorder %s134, %s135
      %p144 = scmp.eq.s32.totalorder %s40, 0
      %p145 = por %p143, %p144
      %p146 = scmp.ne.s32.totalorder %s134, %s135
      %p147 = scmp.eq.s32.totalorder %s41, 1
      %p148 = por %p146, %p147
      %p150 = scmp.ne.s32.totalorder %s135, %s149
      %p151 = scmp.eq.s32.totalorder %s41, 0
      %p152 = por %p150, %p151
      %s154 = sadd.s32 %s153, 1
      %p157 = scmp.eq.s32.totalorder %s35, 1
      %p158 = scmp.ne.s32.totalorder %s153, %s155
      %p159 = scmp.eq.s32.totalorder %s35, 0
      %p160 = por %p158, %p159
      %p161 = scmp.ne.s32.totalorder %s153, %s155
      %p162 = scmp.eq.s32.totalorder %s40, 1
      %p163 = por %p161, %p162
      %p164 = scmp.ne.s32.totalorder %s155, %s156
      %p165 = scmp.eq.s32.totalorder %s40, 0
      %p166 = por %p164, %p165
      %p167 = scmp.ne.s32.totalorder %s155, %s156
      %p168 = scmp.eq.s32.totalorder %s41, 1
      %p169 = por %p167, %p168
      %p171 = scmp.ne.s32.totalorder %s156, %s170
      %p172 = scmp.eq.s32.totalorder %s41, 0
      %p173 = por %p171, %p172
      %s175 = sadd.s32 %s174, 1
      %p178 = scmp.eq.s32.totalorder %s35, 1
      %p179 = scmp.ne.s32.totalorder %s174, %s176
      %p180 = scmp.eq.s32.totalorder %s35, 0
      %p181 = por %p179, %p180
      %p182 = scmp.ne.s32.totalorder %s174, %s176
      %p183 = scmp.eq.s32.totalorder %s40, 1
      %p184 = por %p182, %p183
      %p185 = scmp.ne.s32.totalorder %s176, %s177
      %p186 = scmp.eq.s32.totalorder %s40, 0
      %p187 = por %p185, %p186
      %p188 = scmp.ne.s32.totalorder %s176, %s177
      %p189 = scmp.eq.s32.totalorder %s41, 1
      %p190 = por %p188, %p189
      %p192 = scmp.ne.s32.totalorder %s177, %s191
      %p193 = scmp.eq.s32.totalorder %s41, 0
      %p194 = por %p192, %p193
      %s196 = sadd.s32 %s195, 1
      %p199 = scmp.eq.s32.totalorder %s35, 1
      %p200 = scmp.ne.s32.totalorder %s195, %s197
      %p201 = scmp.eq.s32.totalorder %s35, 0
      %p202 = por %p200, %p201
      %p203 = scmp.ne.s32.totalorder %s195, %s197
      %p204 = scmp.eq.s32.totalorder %s40, 1
      %p205 = por %p203, %p204
      %p206 = scmp.ne.s32.totalorder %s197, %s198
      %p207 = scmp.eq.s32.totalorder %s40, 0
      %p208 = por %p206, %p207
      %p209 = scmp.ne.s32.totalorder %s197, %s198
      %p210 = scmp.eq.s32.totalorder %s41, 1
      %p211 = por %p209, %p210
      %p213 = scmp.ne.s32.totalorder %s198, %s212
      %p214 = scmp.eq.s32.totalorder %s41, 0
      %p215 = por %p213, %p214
      %s217 = sadd.s32 %s216, 1
      %p220 = scmp.eq.s32.totalorder %s35, 1
      %p221 = scmp.ne.s32.totalorder %s216, %s218
      %p222 = scmp.eq.s32.totalorder %s35, 0
      %p223 = por %p221, %p222
      %p224 = scmp.ne.s32.totalorder %s216, %s218
      %p225 = scmp.eq.s32.totalorder %s40, 1
      %p226 = por %p224, %p225
      %p227 = scmp.ne.s32.totalorder %s218, %s219
      %p228 = scmp.eq.s32.totalorder %s40, 0
      %p229 = por %p227, %p228
      %p230 = scmp.ne.s32.totalorder %s218, %s219
      %p231 = scmp.eq.s32.totalorder %s41, 1
      %p232 = por %p230, %p231
      %p234 = scmp.ne.s32.totalorder %s219, %s233
      %p235 = scmp.eq.s32.totalorder %s41, 0
      %p236 = por %p234, %p235
      %s238 = sadd.s32 %s237, 1
      %p241 = scmp.eq.s32.totalorder %s35, 1
      %p242 = scmp.ne.s32.totalorder %s237, %s239
      %p243 = scmp.eq.s32.totalorder %s35, 0
      %p244 = por %p242, %p243
      %p245 = scmp.ne.s32.totalorder %s237, %s239
      %p246 = scmp.eq.s32.totalorder %s40, 1
      %p247 = por %p245, %p246
      %p248 = scmp.ne.s32.totalorder %s239, %s240
      %p249 = scmp.eq.s32.totalorder %s40, 0
      %p250 = por %p248, %p249
      %p251 = scmp.ne.s32.totalorder %s239, %s240
      %p252 = scmp.eq.s32.totalorder %s41, 1
      %p253 = por %p251, %p252
      %p255 = scmp.ne.s32.totalorder %s240, %s254
      %p256 = scmp.eq.s32.totalorder %s41, 0
      %p257 = por %p255, %p256
      %s259 = sadd.s32 %s258, 1
      %p262 = scmp.eq.s32.totalorder %s35, 1
      %p263 = scmp.ne.s32.totalorder %s258, %s260
      %p264 = scmp.eq.s32.totalorder %s35, 0
      %p265 = por %p263, %p264
      %p266 = scmp.ne.s32.totalorder %s258, %s260
      %p267 = scmp.eq.s32.totalorder %s40, 1
      %p268 = por %p266, %p267
      %p269 = scmp.ne.s32.totalorder %s260, %s261
      %p270 = scmp.eq.s32.totalorder %s40, 0
      %p271 = por %p269, %p270
      %p272 = scmp.ne.s32.totalorder %s260, %s261
      %p273 = scmp.eq.s32.totalorder %s41, 1
      %p274 = por %p272, %p273
      %p276 = scmp.ne.s32.totalorder %s261, %s275
      %p277 = scmp.eq.s32.totalorder %s41, 0
      %p278 = por %p276, %p277
      %s280 = sadd.s32 %s279, 1
      %p283 = scmp.eq.s32.totalorder %s35, 1
      %p284 = scmp.ne.s32.totalorder %s279, %s281
      %p285 = scmp.eq.s32.totalorder %s35, 0
      %p286 = por %p284, %p285
      %p287 = scmp.ne.s32.totalorder %s279, %s281
      %p288 = scmp.eq.s32.totalorder %s40, 1
      %p289 = por %p287, %p288
      %p290 = scmp.ne.s32.totalorder %s281, %s282
      %p291 = scmp.eq.s32.totalorder %s40, 0
      %p292 = por %p290, %p291
      %p293 = scmp.ne.s32.totalorder %s281, %s282
      %p294 = scmp.eq.s32.totalorder %s41, 1
      %p295 = por %p293, %p294
      %p297 = scmp.ne.s32.totalorder %s282, %s296
      %p298 = scmp.eq.s32.totalorder %s41, 0
      %p299 = por %p297, %p298
      %s301 = sadd.s32 %s300, 1
      %p304 = scmp.eq.s32.totalorder %s35, 1
      %p305 = scmp.ne.s32.totalorder %s300, %s302
      %p306 = scmp.eq.s32.totalorder %s35, 0
      %p307 = por %p305, %p306
      %p308 = scmp.ne.s32.totalorder %s300, %s302
      %p309 = scmp.eq.s32.totalorder %s40, 1
      %p310 = por %p308, %p309
      %p311 = scmp.ne.s32.totalorder %s302, %s303
      %p312 = scmp.eq.s32.totalorder %s40, 0
      %p313 = por %p311, %p312
      %p314 = scmp.ne.s32.totalorder %s302, %s303
      %p315 = scmp.eq.s32.totalorder %s41, 1
      %p316 = por %p314, %p315
      %p318 = scmp.ne.s32.totalorder %s303, %s317
      %p319 = scmp.eq.s32.totalorder %s41, 0
      %p320 = por %p318, %p319
      %s322 = sadd.s32 %s321, 1
      %p325 = scmp.eq.s32.totalorder %s35, 1
      %p326 = scmp.ne.s32.totalorder %s321, %s323
      %p327 = scmp.eq.s32.totalorder %s35, 0
      %p328 = por %p326, %p327
      %p329 = scmp.ne.s32.totalorder %s321, %s323
      %p330 = scmp.eq.s32.totalorder %s40, 1
      %p331 = por %p329, %p330
      %p332 = scmp.ne.s32.totalorder %s323, %s324
      %p333 = scmp.eq.s32.totalorder %s40, 0
      %p334 = por %p332, %p333
      %p335 = scmp.ne.s32.totalorder %s323, %s324
      %p336 = scmp.eq.s32.totalorder %s41, 1
      %p337 = por %p335, %p336
      %p339 = scmp.ne.s32.totalorder %s324, %s338
      %p340 = scmp.eq.s32.totalorder %s41, 0
      %p341 = por %p339, %p340
      %s343 = sadd.s32 %s342, 1
      %p346 = scmp.eq.s32.totalorder %s35, 1
      %p347 = scmp.ne.s32.totalorder %s342, %s344
      %p348 = scmp.eq.s32.totalorder %s35, 0
      %p349 = por %p347, %p348
      %p350 = scmp.ne.s32.totalorder %s342, %s344
      %p351 = scmp.eq.s32.totalorder %s40, 1
      %p352 = por %p350, %p351
      %p353 = scmp.ne.s32.totalorder %s344, %s345
      %p354 = scmp.eq.s32.totalorder %s40, 0
      %p355 = por %p353, %p354
      %p356 = scmp.ne.s32.totalorder %s344, %s345
      %p357 = scmp.eq.s32.totalorder %s41, 1
      %p358 = por %p356, %p357
      %p360 = scmp.ne.s32.totalorder %s345, %s359
      %p361 = scmp.eq.s32.totalorder %s41, 0
      %p362 = por %p360, %p361
      %s364 = sadd.s32 %s363, 1
      %p367 = scmp.eq.s32.totalorder %s35, 1
      %p368 = scmp.ne.s32.totalorder %s363, %s365
      %p369 = scmp.eq.s32.totalorder %s35, 0
      %p370 = por %p368, %p369
      %p371 = scmp.ne.s32.totalorder %s363, %s365
      %p372 = scmp.eq.s32.totalorder %s40, 1
      %p373 = por %p371, %p372
      %p374 = scmp.ne.s32.totalorder %s365, %s366
      %p375 = scmp.eq.s32.totalorder %s40, 0
      %p376 = por %p374, %p375
      %p377 = scmp.ne.s32.totalorder %s365, %s366
      %p378 = scmp.eq.s32.totalorder %s41, 1
      %p379 = por %p377, %p378
      %p381 = scmp.ne.s32.totalorder %s366, %s380
      %p382 = scmp.eq.s32.totalorder %s41, 0
      %p383 = por %p381, %p382
      %s385 = sadd.s32 %s384, 1
      %p388 = scmp.eq.s32.totalorder %s35, 1
      %p389 = scmp.ne.s32.totalorder %s384, %s386
      %p390 = scmp.eq.s32.totalorder %s35, 0
      %p391 = por %p389, %p390
      %p392 = scmp.ne.s32.totalorder %s384, %s386
      %p393 = scmp.eq.s32.totalorder %s40, 1
      %p394 = por %p392, %p393
      %p395 = scmp.ne.s32.totalorder %s386, %s387
      %p396 = scmp.eq.s32.totalorder %s40, 0
      %p397 = por %p395, %p396
      %p398 = scmp.ne.s32.totalorder %s386, %s387
      %p399 = scmp.eq.s32.totalorder %s41, 1
      %p400 = por %p398, %p399
      %p402 = scmp.ne.s32.totalorder %s387, %s401
      %p403 = scmp.eq.s32.totalorder %s41, 0
      %p404 = por %p402, %p403
      %s406 = sadd.s32 %s405, 1
      %p409 = scmp.eq.s32.totalorder %s35, 1
      %p410 = scmp.ne.s32.totalorder %s405, %s407
      %p411 = scmp.eq.s32.totalorder %s35, 0
      %p412 = por %p410, %p411
      %p413 = scmp.ne.s32.totalorder %s405, %s407
      %p414 = scmp.eq.s32.totalorder %s40, 1
      %p415 = por %p413, %p414
      %p416 = scmp.ne.s32.totalorder %s407, %s408
      %p417 = scmp.eq.s32.totalorder %s40, 0
      %p418 = por %p416, %p417
      %p419 = scmp.ne.s32.totalorder %s407, %s408
      %p420 = scmp.eq.s32.totalorder %s41, 1
      %p421 = por %p419, %p420
      %p423 = scmp.ne.s32.totalorder %s408, %s422
      %p424 = scmp.eq.s32.totalorder %s41, 0
      %p425 = por %p423, %p424
      %s426 = ssub.s32 %s35, %s42
      %p427 = scmp.eq.s32.totalorder %s426, 0
      %s429 = sadd.s32 %s428, 1
      %s430 = scalar_select %p427, %s428, %s429
      %p433 = pneg %p427
      %p434 = scmp.eq.s32.totalorder %s35, 1
      %p435 = por %p433, %p434
      %p436 = scmp.ne.s32.totalorder %s428, %s431
      %p437 = scmp.eq.s32.totalorder %s35, 0
      %p438 = por %p436, %p437
      %p439 = scmp.ne.s32.totalorder %s428, %s431
      %p440 = scmp.eq.s32.totalorder %s40, 1
      %p441 = por %p439, %p440
      %p442 = scmp.ne.s32.totalorder %s431, %s432
      %p443 = scmp.eq.s32.totalorder %s40, 0
      %p444 = por %p442, %p443
      %p445 = scmp.ne.s32.totalorder %s431, %s432
      %p446 = scmp.eq.s32.totalorder %s41, 1
      %p447 = por %p445, %p446
      %p449 = scmp.ne.s32.totalorder %s432, %s448
      %p450 = scmp.eq.s32.totalorder %s41, 0
      %p451 = por %p449, %p450
      %s452 = ssub.s32 %s35, %s42
      %p453 = scmp.eq.s32.totalorder %s452, 0
      %s455 = sadd.s32 %s454, 1
      %s456 = scalar_select %p453, %s454, %s455
      %p459 = pneg %p453
      %p460 = scmp.eq.s32.totalorder %s35, 1
      %p461 = por %p459, %p460
      %p462 = scmp.ne.s32.totalorder %s454, %s457
      %p463 = scmp.eq.s32.totalorder %s35, 0
      %p464 = por %p462, %p463
      %p465 = scmp.ne.s32.totalorder %s454, %s457
      %p466 = scmp.eq.s32.totalorder %s40, 1
      %p467 = por %p465, %p466
      %p468 = scmp.ne.s32.totalorder %s457, %s458
      %p469 = scmp.eq.s32.totalorder %s40, 0
      %p470 = por %p468, %p469
      %p471 = scmp.ne.s32.totalorder %s457, %s458
      %p472 = scmp.eq.s32.totalorder %s41, 1
      %p473 = por %p471, %p472
      %p475 = scmp.ne.s32.totalorder %s458, %s474
      %p476 = scmp.eq.s32.totalorder %s41, 0
      %p477 = por %p475, %p476
      %p478 = scmp.le.s32.totalorder 1, %s35
      %p479 = scmp.lt.s32.totalorder %s35, 3
      %p480 = pnand %p478, %p479
      %p481 = pneg %p480
      // Predicated region
      $region9: #{tpu_custom_call.1} parent=5 // pred_check
        _
      $region10: #{tpu_custom_call.1} parent=5 // pred_check_branch
        %483 = sbr.rel (%p480) target = $region12
      $region11: #{tpu_custom_call.1} parent=5 // pred_region
        %s484 = ssub.s32 %s35, 1
        // Predicated region
        $region13: #{tpu_custom_call.1} parent=11 // pred_check
          %p485 = pneg %p82
        $region14: #{tpu_custom_call.1} parent=11 // pred_check_branch
          %487 = sbr.rel (%p485) target = $region16
        $region15: #{tpu_custom_call.1} parent=11 // pred_region
          %s489 = ssub.s32 17920, 17920
          %490 = vsyncadd [#allocation5], %s489
          %s491 = sshll.u32 [#allocation4], 4
          %s492 = int_to_ptr.vmem [resolvable:$true] %s491
          %497 = dma.hbm_to_vmem [thread:$0]  %s1, 17920, %s492, [#allocation5], 256, 256, 16
        $region16: #{tpu_custom_call.1} parent=11 // pred_fallthru
          _
        // Predicated region
        $region17: #{tpu_custom_call.1} parent=11 // pred_check
          %p498 = pneg %p103
        $region18: #{tpu_custom_call.1} parent=11 // pred_check_branch
          %500 = sbr.rel (%p498) target = $region20
        $region19: #{tpu_custom_call.1} parent=11 // pred_region
          %s502 = ssub.s32 32, 32
          %503 = vsyncadd [#allocation8], %s502
          %s505 = sshll.u32 [#allocation7], 4
          %s506 = int_to_ptr.vmem [resolvable:$true] %s505
          %508 = dma.hbm_to_vmem [thread:$0]  %s2, 32, %s506, [#allocation8]
        $region20: #{tpu_custom_call.1} parent=11 // pred_fallthru
          _
        // Predicated region
        $region21: #{tpu_custom_call.1} parent=11 // pred_check
          %p509 = pneg %p124
        $region22: #{tpu_custom_call.1} parent=11 // pred_check_branch
          %511 = sbr.rel (%p509) target = $region24
        $region23: #{tpu_custom_call.1} parent=11 // pred_region
          %s513 = ssub.s32 32, 32
          %514 = vsyncadd [#allocation8], %s513
          %s516 = sshll.u32 [#allocation9], 4
          %s517 = int_to_ptr.vmem [resolvable:$true] %s516
          %519 = dma.hbm_to_vmem [thread:$0]  %s3, 32, %s517, [#allocation8]
        $region24: #{tpu_custom_call.1} parent=11 // pred_fallthru
          _
        // Predicated region
        $region25: #{tpu_custom_call.1} parent=11 // pred_check
          %p520 = pneg %p145
        $region26: #{tpu_custom_call.1} parent=11 // pred_check_branch
          %522 = sbr.rel (%p520) target = $region28
        $region27: #{tpu_custom_call.1} parent=11 // pred_region
          %s524 = ssub.s32 1152, 1152
          %525 = vsyncadd [#allocation11], %s524
          %s526 = sshll.u32 [#allocation10], 4
          %s527 = int_to_ptr.vmem [resolvable:$true] %s526
          %532 = dma.hbm_to_vmem [thread:$0]  %s4, 1152, %s527, [#allocation11], 128, 128, 8
        $region28: #{tpu_custom_call.1} parent=11 // pred_fallthru
          _
        // Predicated region
        $region29: #{tpu_custom_call.1} parent=11 // pred_check
          %p533 = pneg %p166
        $region30: #{tpu_custom_call.1} parent=11 // pred_check_branch
          %535 = sbr.rel (%p533) target = $region32
        $region31: #{tpu_custom_call.1} parent=11 // pred_region
          _
        $region32: #{tpu_custom_call.1} parent=11 // pred_fallthru
          _
        // Predicated region
        $region33: #{tpu_custom_call.1} parent=11 // pred_check
          %p536 = pneg %p187
        $region34: #{tpu_custom_call.1} parent=11 // pred_check_branch
          %538 = sbr.rel (%p536) target = $region36
        $region35: #{tpu_custom_call.1} parent=11 // pred_region
          %s540 = ssub.s32 24320, 24320
          %541 = vsyncadd [#allocation11], %s540
          %s542 = sshll.u32 [#allocation12], 4
          %s543 = int_to_ptr.vmem [resolvable:$true] %s542
          %548 = dma.hbm_to_vmem [thread:$0]  %s6, 24320, %s543, [#allocation11], 256, 256, 16
        $region36: #{tpu_custom_call.1} parent=11 // pred_fallthru
          _
        // Predicated region
        $region37: #{tpu_custom_call.1} parent=11 // pred_check
          %p549 = pneg %p208
        $region38: #{tpu_custom_call.1} parent=11 // pred_check_branch
          %551 = sbr.rel (%p549) target = $region40
        $region39: #{tpu_custom_call.1} parent=11 // pred_region
          %s553 = ssub.s32 32, 32
          %554 = vsyncadd [#allocation14], %s553
          %s556 = sshll.u32 [#allocation13], 4
          %s557 = int_to_ptr.vmem [resolvable:$true] %s556
          %559 = dma.hbm_to_vmem [thread:$0]  %s7, 32, %s557, [#allocation14]
        $region40: #{tpu_custom_call.1} parent=11 // pred_fallthru
          _
        // Predicated region
        $region41: #{tpu_custom_call.1} parent=11 // pred_check
          %p560 = pneg %p229
        $region42: #{tpu_custom_call.1} parent=11 // pred_check_branch
          %562 = sbr.rel (%p560) target = $region44
        $region43: #{tpu_custom_call.1} parent=11 // pred_region
          %s564 = ssub.s32 32, 32
          %565 = vsyncadd [#allocation14], %s564
          %s567 = sshll.u32 [#allocation15], 4
          %s568 = int_to_ptr.vmem [resolvable:$true] %s567
          %570 = dma.hbm_to_vmem [thread:$0]  %s8, 32, %s568, [#allocation14]
        $region44: #{tpu_custom_call.1} parent=11 // pred_fallthru
          _
        // Predicated region
        $region45: #{tpu_custom_call.1} parent=11 // pred_check
          %p571 = pneg %p250
        $region46: #{tpu_custom_call.1} parent=11 // pred_check_branch
          %573 = sbr.rel (%p571) target = $region48
        $region47: #{tpu_custom_call.1} parent=11 // pred_region
          _
        $region48: #{tpu_custom_call.1} parent=11 // pred_fallthru
          _
        // Predicated region
        $region49: #{tpu_custom_call.1} parent=11 // pred_check
          %p574 = pneg %p271
        $region50: #{tpu_custom_call.1} parent=11 // pred_check_branch
          %576 = sbr.rel (%p574) target = $region52
        $region51: #{tpu_custom_call.1} parent=11 // pred_region
          _
        $region52: #{tpu_custom_call.1} parent=11 // pred_fallthru
          _
        // Predicated region
        $region53: #{tpu_custom_call.1} parent=11 // pred_check
          %p577 = pneg %p292
        $region54: #{tpu_custom_call.1} parent=11 // pred_check_branch
          %579 = sbr.rel (%p577) target = $region56
        $region55: #{tpu_custom_call.1} parent=11 // pred_region
          _
        $region56: #{tpu_custom_call.1} parent=11 // pred_fallthru
          _
        // Predicated region
        $region57: #{tpu_custom_call.1} parent=11 // pred_check
          %p580 = pneg %p313
        $region58: #{tpu_custom_call.1} parent=11 // pred_check_branch
          %582 = sbr.rel (%p580) target = $region60
        $region59: #{tpu_custom_call.1} parent=11 // pred_region
          %s584 = ssub.s32 32, 32
          %585 = vsyncadd [#allocation17], %s584
          %s587 = sshll.u32 [#allocation16], 4
          %s588 = int_to_ptr.vmem [resolvable:$true] %s587
          %590 = dma.hbm_to_vmem [thread:$0]  %s12, 32, %s588, [#allocation17]
        $region60: #{tpu_custom_call.1} parent=11 // pred_fallthru
          _
        // Predicated region
        $region61: #{tpu_custom_call.1} parent=11 // pred_check
          %p591 = pneg %p334
        $region62: #{tpu_custom_call.1} parent=11 // pred_check_branch
          %593 = sbr.rel (%p591) target = $region64
        $region63: #{tpu_custom_call.1} parent=11 // pred_region
          %s595 = ssub.s32 32, 32
          %596 = vsyncadd [#allocation17], %s595
          %s598 = sshll.u32 [#allocation18], 4
          %s599 = int_to_ptr.vmem [resolvable:$true] %s598
          %601 = dma.hbm_to_vmem [thread:$0]  %s13, 32, %s599, [#allocation17]
        $region64: #{tpu_custom_call.1} parent=11 // pred_fallthru
          _
        // Predicated region
        $region65: #{tpu_custom_call.1} parent=11 // pred_check
          %p602 = pneg %p355
        $region66: #{tpu_custom_call.1} parent=11 // pred_check_branch
          %604 = sbr.rel (%p602) target = $region68
        $region67: #{tpu_custom_call.1} parent=11 // pred_region
          _
        $region68: #{tpu_custom_call.1} parent=11 // pred_fallthru
          _
        // Predicated region
        $region69: #{tpu_custom_call.1} parent=11 // pred_check
          %p605 = pneg %p376
        $region70: #{tpu_custom_call.1} parent=11 // pred_check_branch
          %607 = sbr.rel (%p605) target = $region72
        $region71: #{tpu_custom_call.1} parent=11 // pred_region
          _
        $region72: #{tpu_custom_call.1} parent=11 // pred_fallthru
          _
        // Predicated region
        $region73: #{tpu_custom_call.1} parent=11 // pred_check
          %p608 = pneg %p397
        $region74: #{tpu_custom_call.1} parent=11 // pred_check_branch
          %610 = sbr.rel (%p608) target = $region76
        $region75: #{tpu_custom_call.1} parent=11 // pred_region
          _
        $region76: #{tpu_custom_call.1} parent=11 // pred_fallthru
          _
        // Predicated region
        $region77: #{tpu_custom_call.1} parent=11 // pred_check
          %p611 = pneg %p418
        $region78: #{tpu_custom_call.1} parent=11 // pred_check_branch
          %613 = sbr.rel (%p611) target = $region80
        $region79: #{tpu_custom_call.1} parent=11 // pred_region
          %s615 = ssub.s32 16, 16
          %616 = vsyncadd [#allocation20], %s615
          %s618 = sshll.u32 [#allocation19], 4
          %s619 = int_to_ptr.vmem [resolvable:$true] %s618
          %621 = dma.hbm_to_vmem [thread:$0]  %s17, 16, %s619, [#allocation20]
        $region80: #{tpu_custom_call.1} parent=11 // pred_fallthru
          _
      $region12: #{tpu_custom_call.1} parent=5 // pred_fallthru
        _
      %p622 = scmp.lt.s32.totalorder %s35, 2
      // Predicated region
      $region81: #{tpu_custom_call.1} parent=5 // pred_check
        %p623 = pneg %p622
      $region82: #{tpu_custom_call.1} parent=5 // pred_check_branch
        %625 = sbr.rel (%p623) target = $region84
      $region83: #{tpu_custom_call.1} parent=5 // pred_region
        // Predicated region
        $region85: #{tpu_custom_call.1} parent=83 // pred_check
          %p626 = pneg %p55
        $region86: #{tpu_custom_call.1} parent=83 // pred_check_branch
          %628 = sbr.rel (%p626) target = $region88
        $region87: #{tpu_custom_call.1} parent=83 // pred_region
          %p629 = scmp.lt.s32.totalorder %s35, 1
          %s630 = scalar_select %p629, %s35, 1
          %s631 = smul.addr %s630, 5
          %s632 = smul.addr %s631, 8
          %s633 = scalar_lea.vmem %s0, %s632
        $region88: #{tpu_custom_call.1} parent=83 // pred_fallthru
          _
      $region84: #{tpu_custom_call.1} parent=5 // pred_fallthru
        _
      %p634 = scmp.le.s32.totalorder 1, %s35
      %p635 = scmp.lt.s32.totalorder %s35, 3
      %p636 = pnand %p634, %p635
      %p637 = pneg %p636
      // Predicated region
      $region89: #{tpu_custom_call.1} parent=5 // pred_check
        _
      $region90: #{tpu_custom_call.1} parent=5 // pred_check_branch
        %639 = sbr.rel (%p636) target = $region92
      $region91: #{tpu_custom_call.1} parent=5 // pred_region
        %s640 = ssub.s32 %s35, 1
        // Predicated region
        $region93: #{tpu_custom_call.1} parent=91 // pred_check
          %p641 = pneg %p82
        $region94: #{tpu_custom_call.1} parent=91 // pred_check_branch
          %643 = sbr.rel (%p641) target = $region96
        $region95: #{tpu_custom_call.1} parent=91 // pred_region
          %644 = dma.done [#allocation5], 17920
        $region96: #{tpu_custom_call.1} parent=91 // pred_fallthru
          _
        // Predicated region
        $region97: #{tpu_custom_call.1} parent=91 // pred_check
          %p645 = pneg %p103
        $region98: #{tpu_custom_call.1} parent=91 // pred_check_branch
          %647 = sbr.rel (%p645) target = $region100
        $region99: #{tpu_custom_call.1} parent=91 // pred_region
          %648 = dma.done [#allocation8], 32
        $region100: #{tpu_custom_call.1} parent=91 // pred_fallthru
          _
        // Predicated region
        $region101: #{tpu_custom_call.1} parent=91 // pred_check
          %p649 = pneg %p124
        $region102: #{tpu_custom_call.1} parent=91 // pred_check_branch
          %651 = sbr.rel (%p649) target = $region104
        $region103: #{tpu_custom_call.1} parent=91 // pred_region
          %652 = dma.done [#allocation8], 32
        $region104: #{tpu_custom_call.1} parent=91 // pred_fallthru
          _
        // Predicated region
        $region105: #{tpu_custom_call.1} parent=91 // pred_check
          %p653 = pneg %p145
        $region106: #{tpu_custom_call.1} parent=91 // pred_check_branch
          %655 = sbr.rel (%p653) target = $region108
        $region107: #{tpu_custom_call.1} parent=91 // pred_region
          %656 = dma.done [#allocation11], 1152
        $region108: #{tpu_custom_call.1} parent=91 // pred_fallthru
          _
        // Predicated region
        $region109: #{tpu_custom_call.1} parent=91 // pred_check
          %p657 = pneg %p187
        $region110: #{tpu_custom_call.1} parent=91 // pred_check_branch
          %659 = sbr.rel (%p657) target = $region112
        $region111: #{tpu_custom_call.1} parent=91 // pred_region
          %660 = dma.done [#allocation11], 24320
        $region112: #{tpu_custom_call.1} parent=91 // pred_fallthru
          _
        // Predicated region
        $region113: #{tpu_custom_call.1} parent=91 // pred_check
          %p661 = pneg %p208
        $region114: #{tpu_custom_call.1} parent=91 // pred_check_branch
          %663 = sbr.rel (%p661) target = $region116
        $region115: #{tpu_custom_call.1} parent=91 // pred_region
          %664 = dma.done [#allocation14], 32
        $region116: #{tpu_custom_call.1} parent=91 // pred_fallthru
          _
        // Predicated region
        $region117: #{tpu_custom_call.1} parent=91 // pred_check
          %p665 = pneg %p229
        $region118: #{tpu_custom_call.1} parent=91 // pred_check_branch
          %667 = sbr.rel (%p665) target = $region120
        $region119: #{tpu_custom_call.1} parent=91 // pred_region
          %668 = dma.done [#allocation14], 32
        $region120: #{tpu_custom_call.1} parent=91 // pred_fallthru
          _
        // Predicated region
        $region121: #{tpu_custom_call.1} parent=91 // pred_check
          %p669 = pneg %p313
        $region122: #{tpu_custom_call.1} parent=91 // pred_check_branch
          %671 = sbr.rel (%p669) target = $region124
        $region123: #{tpu_custom_call.1} parent=91 // pred_region
          %672 = dma.done [#allocation17], 32
        $region124: #{tpu_custom_call.1} parent=91 // pred_fallthru
          _
        // Predicated region
        $region125: #{tpu_custom_call.1} parent=91 // pred_check
          %p673 = pneg %p334
        $region126: #{tpu_custom_call.1} parent=91 // pred_check_branch
          %675 = sbr.rel (%p673) target = $region128
        $region127: #{tpu_custom_call.1} parent=91 // pred_region
          %676 = dma.done [#allocation17], 32
        $region128: #{tpu_custom_call.1} parent=91 // pred_fallthru
          _
        // Predicated region
        $region129: #{tpu_custom_call.1} parent=91 // pred_check
          %p677 = pneg %p418
        $region130: #{tpu_custom_call.1} parent=91 // pred_check_branch
          %679 = sbr.rel (%p677) target = $region132
        $region131: #{tpu_custom_call.1} parent=91 // pred_region
          %680 = dma.done [#allocation20], 16
        $region132: #{tpu_custom_call.1} parent=91 // pred_fallthru
          _
        %p681 = scmp.lt.s32.totalorder %s40, 1
        %s682 = scalar_select %p681, %s40, 1
        %s683 = smul.addr %s682, 5
        %s684 = smul.addr %s683, 8
        %s685 = scalar_lea.vmem %s0, %s684
        %p686 = pneg %p61
        %p687 = pneg %p58
        %p688 = pneg %p82
        %p689 = pneg %p79
        %p690 = pneg %p103
        %p691 = pneg %p100
        %p692 = pneg %p124
        %p693 = pneg %p121
        %p694 = pneg %p145
        %p695 = pneg %p142
        %p696 = pneg %p166
        %p697 = pneg %p163
        %p698 = pneg %p187
        %p699 = pneg %p184
        %p700 = pneg %p208
        %p701 = pneg %p205
        %p702 = pneg %p229
        %p703 = pneg %p226
        %p704 = pneg %p250
        %p705 = pneg %p247
        %p706 = pneg %p271
        %p707 = pneg %p268
        %p708 = pneg %p292
        %p709 = pneg %p289
        %p710 = pneg %p313
        %p711 = pneg %p310
        %p712 = pneg %p334
        %p713 = pneg %p331
        %p714 = pneg %p355
        %p715 = pneg %p352
        %p716 = pneg %p376
        %p717 = pneg %p373
        %p718 = pneg %p397
        %p719 = pneg %p394
        %p720 = pneg %p418
        %p721 = pneg %p415
        %p722 = pneg %p444
        %p723 = pneg %p441
        %s724 = sand.u32 %s431, 1
        %s725 = scalar_lea.sflag [#allocation6], %s724
        %s726 = sand.u32 %s431, 1
        %s727 = scalar_lea.vmem [#allocation21], %s726
        %p728 = pneg %p470
        %p729 = pneg %p467
        %p730 = scmp.lt.s32.totalorder %s40, 1
        %s731 = scalar_select %p730, %s40, 1
        %s732 = smul.addr %s731, 2
        %s733 = smul.addr %s732, 8
        %s734 = scalar_lea.vmem %s19, %s733
        %p735 = scmp.lt.s32.totalorder %s40, 1
        %s736 = scalar_select %p735, %s40, 1
        %s737 = smul.addr %s736, 5
        %s738 = smul.addr %s737, 8
        %s739 = scalar_lea.vmem %s0, %s738
        %p740 = scmp.lt.s32.totalorder %s40, 1
        %s741 = scalar_select %p740, %s40, 1
        %s742 = smul.addr %s741, 2
        %s743 = smul.addr %s742, 8
        %s744 = scalar_lea.vmem %s19, %s743
        %v745 = vld [vmem:[%s739] sm:$0xff]
        %v746 = vld [vmem:[%s739 + $0x8] sm:$0xff]
        %v747 = vld [vmem:[%s739 + $0x10] sm:$0xff]
        %v748 = vld [vmem:[%s739 + $0x18] sm:$0xff]
        %v749 = vld [vmem:[#allocation4] sm:$0xff]
        %v750 = vld [vmem:[#allocation4 + $0x8] sm:$0xff]
        %v751 = vld [vmem:[#allocation4 + $0x10] sm:$0xff]
        %v752 = vld [vmem:[#allocation4 + $0x18] sm:$0xff]
        %v753 = vld [vmem:[#allocation4 + $0x20] sm:$0xff]
        %v754 = vld [vmem:[#allocation4 + $0x28] sm:$0xff]
        %v755 = vld [vmem:[#allocation4 + $0x30] sm:$0xff]
        %v756 = vld [vmem:[#allocation4 + $0x38] sm:$0xff]
        %v757 = vld [vmem:[#allocation4 + $0x40] sm:$0xff]
        %v758 = vld [vmem:[#allocation4 + $0x48] sm:$0xff]
        %v759 = vld [vmem:[#allocation4 + $0x50] sm:$0xff]
        %v760 = vld [vmem:[#allocation4 + $0x58] sm:$0xff]
        %v761 = vld [vmem:[#allocation4 + $0x60] sm:$0xff]
        %v762 = vld [vmem:[#allocation4 + $0x68] sm:$0xff]
        %v763 = vld [vmem:[#allocation4 + $0x70] sm:$0xff]
        %v764 = vld [vmem:[#allocation4 + $0x78] sm:$0xff]
        %v765 = vld [vmem:[#allocation4 + $0x80] sm:$0xff]
        %v766 = vld [vmem:[#allocation4 + $0x88] sm:$0xff]
        %v767 = vld [vmem:[#allocation4 + $0x90] sm:$0xff]
        %v768 = vld [vmem:[#allocation4 + $0x98] sm:$0xff]
        %v769 = vld [vmem:[#allocation4 + $0xa0] sm:$0xff]
        %v770 = vld [vmem:[#allocation4 + $0xa8] sm:$0xff]
        %v771 = vld [vmem:[#allocation4 + $0xb0] sm:$0xff]
        %v772 = vld [vmem:[#allocation4 + $0xb8] sm:$0xff]
        %v773 = vld [vmem:[#allocation4 + $0xc0] sm:$0xff]
        %v774 = vld [vmem:[#allocation4 + $0xc8] sm:$0xff]
        %v775 = vld [vmem:[#allocation4 + $0xd0] sm:$0xf]
        %v776 = vld [vmem:[#allocation4 + $0xd8] sm:$0xf]
        %v777 = vld [vmem:[%s739 + $0x1] sm:$0xff]
        %v778 = vld [vmem:[%s739 + $0x9] sm:$0xff]
        %v779 = vld [vmem:[%s739 + $0x11] sm:$0xff]
        %v780 = vld [vmem:[%s739 + $0x19] sm:$0xff]
        %s781 = scalar_lea.vmem [#allocation4], 224
        %v782 = vld [vmem:[%s781] sm:$0xff]
        %v783 = vld [vmem:[%s781 + $0x8] sm:$0xff]
        %v784 = vld [vmem:[%s781 + $0x10] sm:$0xff]
        %v785 = vld [vmem:[%s781 + $0x18] sm:$0xff]
        %v786 = vld [vmem:[%s781 + $0x20] sm:$0xff]
        %v787 = vld [vmem:[%s781 + $0x28] sm:$0xff]
        %v788 = vld [vmem:[%s781 + $0x30] sm:$0xff]
        %v789 = vld [vmem:[%s781 + $0x38] sm:$0xff]
        %v790 = vld [vmem:[%s781 + $0x40] sm:$0xff]
        %v791 = vld [vmem:[%s781 + $0x48] sm:$0xff]
        %v792 = vld [vmem:[%s781 + $0x50] sm:$0xff]
        %v793 = vld [vmem:[%s781 + $0x58] sm:$0xff]
        %v794 = vld [vmem:[%s781 + $0x60] sm:$0xff]
        %v795 = vld [vmem:[%s781 + $0x68] sm:$0xff]
        %v796 = vld [vmem:[%s781 + $0x70] sm:$0xff]
        %v797 = vld [vmem:[%s781 + $0x78] sm:$0xff]
        %v798 = vld [vmem:[%s781 + $0x80] sm:$0xff]
        %v799 = vld [vmem:[%s781 + $0x88] sm:$0xff]
        %v800 = vld [vmem:[%s781 + $0x90] sm:$0xff]
        %v801 = vld [vmem:[%s781 + $0x98] sm:$0xff]
        %v802 = vld [vmem:[%s781 + $0xa0] sm:$0xff]
        %v803 = vld [vmem:[%s781 + $0xa8] sm:$0xff]
        %v804 = vld [vmem:[%s781 + $0xb0] sm:$0xff]
        %v805 = vld [vmem:[%s781 + $0xb8] sm:$0xff]
        %v806 = vld [vmem:[%s781 + $0xc0] sm:$0xff]
        %v807 = vld [vmem:[%s781 + $0xc8] sm:$0xff]
        %v808 = vld [vmem:[%s781 + $0xd0] sm:$0xf]
        %v809 = vld [vmem:[%s781 + $0xd8] sm:$0xf]
        %vm810 = vcmask 883712
        %v812 = vsel %vm810, %v777, 0
        %v815 = vsel %vm810, %v778, 0
        %v818 = vsel %vm810, %v779, 0
        %v821 = vsel %vm810, %v780, 0
        %vm823 = vcmask 1043456
        %v825 = vsel %vm823, %v808, 0
        %v828 = vsel %vm823, %v809, 0
        %830 = vmatprep.subr.mxu0 %v783
        %831 = vmatpush1.msra.mxu0 %v782
        %832 = vmatprep.subr.mxu0 %v785
        %833 = vmatpush1.msra.mxu0 %v784
        %834 = vmatprep.subr.mxu0 %v787
        %835 = vmatpush1.msra.mxu0 %v786
        %836 = vmatprep.subr.mxu0 %v789
        %837 = vmatpush1.msra.mxu0 %v788
        %838 = vmatprep.subr.mxu0 %v791
        %839 = vmatpush1.msra.mxu0 %v790
        %840 = vmatprep.subr.mxu0 %v793
        %841 = vmatpush1.msra.mxu0 %v792
        %842 = vmatprep.subr.mxu0 %v795
        %843 = vmatpush1.msra.mxu0 %v794
        %844 = vmatprep.subr.mxu0 %v797
        %845 = vmatpush1.msra.mxu0 %v796
        %846 = vmatprep.subr.mxu0 %v799
        %847 = vmatpush1.msra.mxu0 %v798
        %848 = vmatprep.subr.mxu0 %v801
        %849 = vmatpush1.msra.mxu0 %v800
        %850 = vmatprep.subr.mxu0 %v803
        %851 = vmatpush1.msra.mxu0 %v802
        %852 = vmatprep.subr.mxu0 %v805
        %853 = vmatpush1.msra.mxu0 %v804
        %854 = vmatprep.subr.mxu0 %v807
        %855 = vmatpush1.msra.mxu0 %v806
        %856 = vmatprep.subr.mxu0 %v828
        %857 = vmatpush1.msra.mxu0 %v825
        %858 = vmatprep.subr.mxu0 0.0
        %859 = vmatpush1.msra.mxu0 0.0
        %860 = vmatprep.subr.mxu0 0.0
        %861 = vmatpush1.msra.mxu0 0.0
        %862 = vmatprep.subr.mxu0 0.0
        %863 = vmatpush1.msra.mxu0 0.0
        %864 = vmatprep.subr.mxu0 0.0
        %865 = vmatpush1.msra.mxu0 0.0
        %866 = vmatprep.subr.mxu0 0.0
        %867 = vmatpush1.msra.mxu0 0.0
        %868 = vmatprep.subr.mxu0 0.0
        %869 = vmatpush1.msra.mxu0 0.0
        %870 = vmatprep.subr.mxu0 0.0
        %871 = vmatpush1.msra.mxu0 0.0
        %872 = vmatprep.subr.mxu0 0.0
        %873 = vmatpush1.msra.mxu0 0.0
        %874 = vmatprep.subr.mxu0 0.0
        %875 = vmatpush1.msra.mxu0 0.0
        %876 = vmatprep.subr.mxu0 0.0
        %877 = vmatpush1.msra.mxu0 0.0
        %878 = vmatprep.subr.mxu0 0.0
        %879 = vmatpush1.msra.mxu0 0.0
        %880 = vmatprep.subr.mxu0 0.0
        %881 = vmatpush1.msra.mxu0 0.0
        %882 = vmatprep.subr.mxu0 0.0
        %883 = vmatpush1.msra.mxu0 0.0
        %884 = vmatprep.subr.mxu0 0.0
        %885 = vmatpush1.msra.mxu0 0.0
        %886 = vmatprep.subr.mxu0 0.0
        %887 = vmatpush1.msra.mxu0 0.0
        %888 = vmatprep.subr.mxu0 0.0
        %889 = vmatpush1.msra.mxu0 0.0
        %890 = vmatprep.subr.mxu0 0.0
        %891 = vmatpush1.msra.mxu0 0.0
        %892 = vmatprep.subr.mxu0 0.0
        %893 = vmatpush1.msra.mxu0 0.0
        %894 = vmatprep.mubr.f32.mxu0 0.0
        %895 = vmatmul.mubr.f32.gmra.mrb[0].mxu0 %v812
        %v896 = vpop.f32.mrb[0].mxu0
        %v897 = vadd.f32 0.0, %v896
        %v898 = vpop.f32.mrb[0].mxu0
        %v899 = vadd.f32 0.0, %v898
        %900 = vmatprep.mubr.f32.mxu0 0.0
        %901 = vmatmul.mubr.f32.gmra.mrb[0].mxu0 %v815
        %v902 = vpop.f32.mrb[0].mxu0
        %v903 = vadd.f32 0.0, %v902
        %v904 = vpop.f32.mrb[0].mxu0
        %v905 = vadd.f32 0.0, %v904
        %906 = vmatprep.mubr.f32.mxu0 0.0
        %907 = vmatmul.mubr.f32.gmra.mrb[0].mxu0 %v818
        %v908 = vpop.f32.mrb[0].mxu0
        %v909 = vadd.f32 0.0, %v908
        %v910 = vpop.f32.mrb[0].mxu0
        %v911 = vadd.f32 0.0, %v910
        %912 = vmatprep.mubr.f32.mxu0 0.0
        %913 = vmatmul.mubr.f32.gmra.mrb[0].mxu0 %v821
        %v914 = vpop.f32.mrb[0].mxu0
        %v915 = vadd.f32 0.0, %v914
        %v916 = vpop.f32.mrb[0].mxu0
        %v917 = vadd.f32 0.0, %v916
        %918 = vdwg.mxu0
        %v920 = vsel %vm810, %v745, 0
        %v923 = vsel %vm810, %v746, 0
        %v926 = vsel %vm810, %v747, 0
        %v929 = vsel %vm810, %v748, 0
        %v932 = vsel %vm823, %v775, 0
        %v935 = vsel %vm823, %v776, 0
        %937 = vmatprep.subr.mxu0 %v750
        %938 = vmatpush1.msra.mxu0 %v749
        %939 = vmatprep.subr.mxu0 %v752
        %940 = vmatpush1.msra.mxu0 %v751
        %941 = vmatprep.subr.mxu0 %v754
        %942 = vmatpush1.msra.mxu0 %v753
        %943 = vmatprep.subr.mxu0 %v756
        %944 = vmatpush1.msra.mxu0 %v755
        %945 = vmatprep.subr.mxu0 %v758
        %946 = vmatpush1.msra.mxu0 %v757
        %947 = vmatprep.subr.mxu0 %v760
        %948 = vmatpush1.msra.mxu0 %v759
        %949 = vmatprep.subr.mxu0 %v762
        %950 = vmatpush1.msra.mxu0 %v761
        %951 = vmatprep.subr.mxu0 %v764
        %952 = vmatpush1.msra.mxu0 %v763
        %953 = vmatprep.subr.mxu0 %v766
        %954 = vmatpush1.msra.mxu0 %v765
        %955 = vmatprep.subr.mxu0 %v768
        %956 = vmatpush1.msra.mxu0 %v767
        %957 = vmatprep.subr.mxu0 %v770
        %958 = vmatpush1.msra.mxu0 %v769
        %959 = vmatprep.subr.mxu0 %v772
        %960 = vmatpush1.msra.mxu0 %v771
        %961 = vmatprep.subr.mxu0 %v774
        %962 = vmatpush1.msra.mxu0 %v773
        %963 = vmatprep.subr.mxu0 %v935
        %964 = vmatpush1.msra.mxu0 %v932
        %965 = vmatprep.subr.mxu0 0.0
        %966 = vmatpush1.msra.mxu0 0.0
        %967 = vmatprep.subr.mxu0 0.0
        %968 = vmatpush1.msra.mxu0 0.0
        %969 = vmatprep.subr.mxu0 0.0
        %970 = vmatpush1.msra.mxu0 0.0
        %971 = vmatprep.subr.mxu0 0.0
        %972 = vmatpush1.msra.mxu0 0.0
        %973 = vmatprep.subr.mxu0 0.0
        %974 = vmatpush1.msra.mxu0 0.0
        %975 = vmatprep.subr.mxu0 0.0
        %976 = vmatpush1.msra.mxu0 0.0
        %977 = vmatprep.subr.mxu0 0.0
        %978 = vmatpush1.msra.mxu0 0.0
        %979 = vmatprep.subr.mxu0 0.0
        %980 = vmatpush1.msra.mxu0 0.0
        %981 = vmatprep.subr.mxu0 0.0
        %982 = vmatpush1.msra.mxu0 0.0
        %983 = vmatprep.subr.mxu0 0.0
        %984 = vmatpush1.msra.mxu0 0.0
        %985 = vmatprep.subr.mxu0 0.0
        %986 = vmatpush1.msra.mxu0 0.0
        %987 = vmatprep.subr.mxu0 0.0
        %988 = vmatpush1.msra.mxu0 0.0
        %989 = vmatprep.subr.mxu0 0.0
        %990 = vmatpush1.msra.mxu0 0.0
        %991 = vmatprep.subr.mxu0 0.0
        %992 = vmatpush1.msra.mxu0 0.0
        %993 = vmatprep.subr.mxu0 0.0
        %994 = vmatpush1.msra.mxu0 0.0
        %995 = vmatprep.subr.mxu0 0.0
        %996 = vmatpush1.msra.mxu0 0.0
        %997 = vmatprep.subr.mxu0 0.0
        %998 = vmatpush1.msra.mxu0 0.0
        %999 = vmatprep.subr.mxu0 0.0
        %1000 = vmatpush1.msra.mxu0 0.0
        %1001 = vmatprep.mubr.f32.mxu0 0.0
        %1002 = vmatmul.mubr.f32.gmra.mrb[0].mxu0 %v920
        %v1003 = vpop.f32.mrb[0].mxu0
        %v1004 = vadd.f32 %v897, %v1003
        %v1005 = vpop.f32.mrb[0].mxu0
        %v1006 = vadd.f32 %v899, %v1005
        %1007 = vmatprep.mubr.f32.mxu0 0.0
        %1008 = vmatmul.mubr.f32.gmra.mrb[0].mxu0 %v923
        %v1009 = vpop.f32.mrb[0].mxu0
        %v1010 = vadd.f32 %v903, %v1009
        %v1011 = vpop.f32.mrb[0].mxu0
        %v1012 = vadd.f32 %v905, %v1011
        %1013 = vmatprep.mubr.f32.mxu0 0.0
        %1014 = vmatmul.mubr.f32.gmra.mrb[0].mxu0 %v926
        %v1015 = vpop.f32.mrb[0].mxu0
        %v1016 = vadd.f32 %v909, %v1015
        %v1017 = vpop.f32.mrb[0].mxu0
        %v1018 = vadd.f32 %v911, %v1017
        %1019 = vmatprep.mubr.f32.mxu0 0.0
        %1020 = vmatmul.mubr.f32.gmra.mrb[0].mxu0 %v929
        %v1021 = vpop.f32.mrb[0].mxu0
        %v1022 = vadd.f32 %v915, %v1021
        %v1023 = vpop.f32.mrb[0].mxu0
        %v1024 = vadd.f32 %v917, %v1023
        %1025 = vdwg.mxu0
        %v1026 = vld [vmem:[%s739 + $0x2] sm:$0xff]
        %v1027 = vld [vmem:[%s739 + $0xa] sm:$0xff]
        %v1028 = vld [vmem:[%s739 + $0x12] sm:$0xff]
        %v1029 = vld [vmem:[%s739 + $0x1a] sm:$0xff]
        %s1030 = scalar_lea.vmem [#allocation4], 448
        %v1031 = vld [vmem:[%s1030] sm:$0xff]
        %v1032 = vld [vmem:[%s1030 + $0x8] sm:$0xff]
        %v1033 = vld [vmem:[%s1030 + $0x10] sm:$0xff]
        %v1034 = vld [vmem:[%s1030 + $0x18] sm:$0xff]
        %v1035 = vld [vmem:[%s1030 + $0x20] sm:$0xff]
        %v1036 = vld [vmem:[%s1030 + $0x28] sm:$0xff]
        %v1037 = vld [vmem:[%s1030 + $0x30] sm:$0xff]
        %v1038 = vld [vmem:[%s1030 + $0x38] sm:$0xff]
        %v1039 = vld [vmem:[%s1030 + $0x40] sm:$0xff]
        %v1040 = vld [vmem:[%s1030 + $0x48] sm:$0xff]
        %v1041 = vld [vmem:[%s1030 + $0x50] sm:$0xff]
        %v1042 = vld [vmem:[%s1030 + $0x58] sm:$0xff]
        %v1043 = vld [vmem:[%s1030 + $0x60] sm:$0xff]
        %v1044 = vld [vmem:[%s1030 + $0x68] sm:$0xff]
        %v1045 = vld [vmem:[%s1030 + $0x70] sm:$0xff]
        %v1046 = vld [vmem:[%s1030 + $0x78] sm:$0xff]
        %v1047 = vld [vmem:[%s1030 + $0x80] sm:$0xff]
        %v1048 = vld [vmem:[%s1030 + $0x88] sm:$0xff]
        %v1049 = vld [vmem:[%s1030 + $0x90] sm:$0xff]
        %v1050 = vld [vmem:[%s1030 + $0x98] sm:$0xff]
        %v1051 = vld [vmem:[%s1030 + $0xa0] sm:$0xff]
        %v1052 = vld [vmem:[%s1030 + $0xa8] sm:$0xff]
        %v1053 = vld [vmem:[%s1030 + $0xb0] sm:$0xff]
        %v1054 = vld [vmem:[%s1030 + $0xb8] sm:$0xff]
        %v1055 = vld [vmem:[%s1030 + $0xc0] sm:$0xff]
        %v1056 = vld [vmem:[%s1030 + $0xc8] sm:$0xff]
        %v1057 = vld [vmem:[%s1030 + $0xd0] sm:$0xf]
        %v1058 = vld [vmem:[%s1030 + $0xd8] sm:$0xf]
        %v1060 = vsel %vm810, %v1026, 0
        %v1063 = vsel %vm810, %v1027, 0
        %v1066 = vsel %vm810, %v1028, 0
        %v1069 = vsel %vm810, %v1029, 0
        %v1072 = vsel %vm823, %v1057, 0
        %v1075 = vsel %vm823, %v1058, 0
        %1077 = vmatprep.subr.mxu0 %v1032
        %1078 = vmatpush1.msra.mxu0 %v1031
        %1079 = vmatprep.subr.mxu0 %v1034
        %1080 = vmatpush1.msra.mxu0 %v1033
        %1081 = vmatprep.subr.mxu0 %v1036
        %1082 = vmatpush1.msra.mxu0 %v1035
        %1083 = vmatprep.subr.mxu0 %v1038
        %1084 = vmatpush1.msra.mxu0 %v1037
        %1085 = vmatprep.subr.mxu0 %v1040
        %1086 = vmatpush1.msra.mxu0 %v1039
        %1087 = vmatprep.subr.mxu0 %v1042
        %1088 = vmatpush1.msra.mxu0 %v1041
        %1089 = vmatprep.subr.mxu0 %v1044
        %1090 = vmatpush1.msra.mxu0 %v1043
        %1091 = vmatprep.subr.mxu0 %v1046
        %1092 = vmatpush1.msra.mxu0 %v1045
        %1093 = vmatprep.subr.mxu0 %v1048
        %1094 = vmatpush1.msra.mxu0 %v1047
        %1095 = vmatprep.subr.mxu0 %v1050
        %1096 = vmatpush1.msra.mxu0 %v1049
        %1097 = vmatprep.subr.mxu0 %v1052
        %1098 = vmatpush1.msra.mxu0 %v1051
        %1099 = vmatprep.subr.mxu0 %v1054
        %1100 = vmatpush1.msra.mxu0 %v1053
        %1101 = vmatprep.subr.mxu0 %v1056
        %1102 = vmatpush1.msra.mxu0 %v1055
        %1103 = vmatprep.subr.mxu0 %v1075
        %1104 = vmatpush1.msra.mxu0 %v1072
        %1105 = vmatprep.subr.mxu0 0.0
        %1106 = vmatpush1.msra.mxu0 0.0
        %1107 = vmatprep.subr.mxu0 0.0
        %1108 = vmatpush1.msra.mxu0 0.0
        %1109 = vmatprep.subr.mxu0 0.0
        %1110 = vmatpush1.msra.mxu0 0.0
        %1111 = vmatprep.subr.mxu0 0.0
        %1112 = vmatpush1.msra.mxu0 0.0
        %1113 = vmatprep.subr.mxu0 0.0
        %1114 = vmatpush1.msra.mxu0 0.0
        %1115 = vmatprep.subr.mxu0 0.0
        %1116 = vmatpush1.msra.mxu0 0.0
        %1117 = vmatprep.subr.mxu0 0.0
        %1118 = vmatpush1.msra.mxu0 0.0
        %1119 = vmatprep.subr.mxu0 0.0
        %1120 = vmatpush1.msra.mxu0 0.0
        %1121 = vmatprep.subr.mxu0 0.0
        %1122 = vmatpush1.msra.mxu0 0.0
        %1123 = vmatprep.subr.mxu0 0.0
        %1124 = vmatpush1.msra.mxu0 0.0
        %1125 = vmatprep.subr.mxu0 0.0
        %1126 = vmatpush1.msra.mxu0 0.0
        %1127 = vmatprep.subr.mxu0 0.0
        %1128 = vmatpush1.msra.mxu0 0.0
        %1129 = vmatprep.subr.mxu0 0.0
        %1130 = vmatpush1.msra.mxu0 0.0
        %1131 = vmatprep.subr.mxu0 0.0
        %1132 = vmatpush1.msra.mxu0 0.0
        %1133 = vmatprep.subr.mxu0 0.0
        %1134 = vmatpush1.msra.mxu0 0.0
        %1135 = vmatprep.subr.mxu0 0.0
        %1136 = vmatpush1.msra.mxu0 0.0
        %1137 = vmatprep.subr.mxu0 0.0
        %1138 = vmatpush1.msra.mxu0 0.0
        %1139 = vmatprep.subr.mxu0 0.0
        %1140 = vmatpush1.msra.mxu0 0.0
        %1141 = vmatprep.mubr.f32.mxu0 0.0
        %1142 = vmatmul.mubr.f32.gmra.mrb[0].mxu0 %v1060
        %v1143 = vpop.f32.mrb[0].mxu0
        %v1144 = vadd.f32 0.0, %v1143
        %v1145 = vpop.f32.mrb[0].mxu0
        %v1146 = vadd.f32 0.0, %v1145
        %1147 = vmatprep.mubr.f32.mxu0 0.0
        %1148 = vmatmul.mubr.f32.gmra.mrb[0].mxu0 %v1063
        %v1149 = vpop.f32.mrb[0].mxu0
        %v1150 = vadd.f32 0.0, %v1149
        %v1151 = vpop.f32.mrb[0].mxu0
        %v1152 = vadd.f32 0.0, %v1151
        %1153 = vmatprep.mubr.f32.mxu0 0.0
        %1154 = vmatmul.mubr.f32.gmra.mrb[0].mxu0 %v1066
        %v1155 = vpop.f32.mrb[0].mxu0
        %v1156 = vadd.f32 0.0, %v1155
        %v1157 = vpop.f32.mrb[0].mxu0
        %v1158 = vadd.f32 0.0, %v1157
        %1159 = vmatprep.mubr.f32.mxu0 0.0
        %1160 = vmatmul.mubr.f32.gmra.mrb[0].mxu0 %v1069
        %v1161 = vpop.f32.mrb[0].mxu0
        %v1162 = vadd.f32 0.0, %v1161
        %v1163 = vpop.f32.mrb[0].mxu0
        %v1164 = vadd.f32 0.0, %v1163
        %1165 = vdwg.mxu0
        %v1166 = vadd.f32 %v1004, %v1144
        %v1167 = vadd.f32 %v1006, %v1146
        %v1168 = vadd.f32 %v1010, %v1150
        %v1169 = vadd.f32 %v1012, %v1152
        %v1170 = vadd.f32 %v1016, %v1156
        %v1171 = vadd.f32 %v1018, %v1158
        %v1172 = vadd.f32 %v1022, %v1162
        %v1173 = vadd.f32 %v1024, %v1164
        %v1174 = vld [vmem:[%s739 + $0x3] sm:$0xff]
        %v1175 = vld [vmem:[%s739 + $0xb] sm:$0xff]
        %v1176 = vld [vmem:[%s739 + $0x13] sm:$0xff]
        %v1177 = vld [vmem:[%s739 + $0x1b] sm:$0xff]
        %s1178 = scalar_lea.vmem [#allocation4], 672
        %v1179 = vld [vmem:[%s1178] sm:$0xff]
        %v1180 = vld [vmem:[%s1178 + $0x8] sm:$0xff]
        %v1181 = vld [vmem:[%s1178 + $0x10] sm:$0xff]
        %v1182 = vld [vmem:[%s1178 + $0x18] sm:$0xff]
        %v1183 = vld [vmem:[%s1178 + $0x20] sm:$0xff]
        %v1184 = vld [vmem:[%s1178 + $0x28] sm:$0xff]
        %v1185 = vld [vmem:[%s1178 + $0x30] sm:$0xff]
        %v1186 = vld [vmem:[%s1178 + $0x38] sm:$0xff]
        %v1187 = vld [vmem:[%s1178 + $0x40] sm:$0xff]
        %v1188 = vld [vmem:[%s1178 + $0x48] sm:$0xff]
        %v1189 = vld [vmem:[%s1178 + $0x50] sm:$0xff]
        %v1190 = vld [vmem:[%s1178 + $0x58] sm:$0xff]
        %v1191 = vld [vmem:[%s1178 + $0x60] sm:$0xff]
        %v1192 = vld [vmem:[%s1178 + $0x68] sm:$0xff]
        %v1193 = vld [vmem:[%s1178 + $0x70] sm:$0xff]
        %v1194 = vld [vmem:[%s1178 + $0x78] sm:$0xff]
        %v1195 = vld [vmem:[%s1178 + $0x80] sm:$0xff]
        %v1196 = vld [vmem:[%s1178 + $0x88] sm:$0xff]
        %v1197 = vld [vmem:[%s1178 + $0x90] sm:$0xff]
        %v1198 = vld [vmem:[%s1178 + $0x98] sm:$0xff]
        %v1199 = vld [vmem:[%s1178 + $0xa0] sm:$0xff]
        %v1200 = vld [vmem:[%s1178 + $0xa8] sm:$0xff]
        %v1201 = vld [vmem:[%s1178 + $0xb0] sm:$0xff]
        %v1202 = vld [vmem:[%s1178 + $0xb8] sm:$0xff]
        %v1203 = vld [vmem:[%s1178 + $0xc0] sm:$0xff]
        %v1204 = vld [vmem:[%s1178 + $0xc8] sm:$0xff]
        %v1205 = vld [vmem:[%s1178 + $0xd0] sm:$0xf]
        %v1206 = vld [vmem:[%s1178 + $0xd8] sm:$0xf]
        %v1208 = vsel %vm810, %v1174, 0
        %v1211 = vsel %vm810, %v1175, 0
        %v1214 = vsel %vm810, %v1176, 0
        %v1217 = vsel %vm810, %v1177, 0
        %v1220 = vsel %vm823, %v1205, 0
        %v1223 = vsel %vm823, %v1206, 0
        %1225 = vmatprep.subr.mxu0 %v1180
        %1226 = vmatpush1.msra.mxu0 %v1179
        %1227 = vmatprep.subr.mxu0 %v1182
        %1228 = vmatpush1.msra.mxu0 %v1181
        %1229 = vmatprep.subr.mxu0 %v1184
        %1230 = vmatpush1.msra.mxu0 %v1183
        %1231 = vmatprep.subr.mxu0 %v1186
        %1232 = vmatpush1.msra.mxu0 %v1185
        %1233 = vmatprep.subr.mxu0 %v1188
        %1234 = vmatpush1.msra.mxu0 %v1187
        %1235 = vmatprep.subr.mxu0 %v1190
        %1236 = vmatpush1.msra.mxu0 %v1189
        %1237 = vmatprep.subr.mxu0 %v1192
        %1238 = vmatpush1.msra.mxu0 %v1191
        %1239 = vmatprep.subr.mxu0 %v1194
        %1240 = vmatpush1.msra.mxu0 %v1193
        %1241 = vmatprep.subr.mxu0 %v1196
        %1242 = vmatpush1.msra.mxu0 %v1195
        %1243 = vmatprep.subr.mxu0 %v1198
        %1244 = vmatpush1.msra.mxu0 %v1197
        %1245 = vmatprep.subr.mxu0 %v1200
        %1246 = vmatpush1.msra.mxu0 %v1199
        %1247 = vmatprep.subr.mxu0 %v1202
        %1248 = vmatpush1.msra.mxu0 %v1201
        %1249 = vmatprep.subr.mxu0 %v1204
        %1250 = vmatpush1.msra.mxu0 %v1203
        %1251 = vmatprep.subr.mxu0 %v1223
        %1252 = vmatpush1.msra.mxu0 %v1220
        %1253 = vmatprep.subr.mxu0 0.0
        %1254 = vmatpush1.msra.mxu0 0.0
        %1255 = vmatprep.subr.mxu0 0.0
        %1256 = vmatpush1.msra.mxu0 0.0
        %1257 = vmatprep.subr.mxu0 0.0
        %1258 = vmatpush1.msra.mxu0 0.0
        %1259 = vmatprep.subr.mxu0 0.0
        %1260 = vmatpush1.msra.mxu0 0.0
        %1261 = vmatprep.subr.mxu0 0.0
        %1262 = vmatpush1.msra.mxu0 0.0
        %1263 = vmatprep.subr.mxu0 0.0
        %1264 = vmatpush1.msra.mxu0 0.0
        %1265 = vmatprep.subr.mxu0 0.0
        %1266 = vmatpush1.msra.mxu0 0.0
        %1267 = vmatprep.subr.mxu0 0.0
        %1268 = vmatpush1.msra.mxu0 0.0
        %1269 = vmatprep.subr.mxu0 0.0
        %1270 = vmatpush1.msra.mxu0 0.0
        %1271 = vmatprep.subr.mxu0 0.0
        %1272 = vmatpush1.msra.mxu0 0.0
        %1273 = vmatprep.subr.mxu0 0.0
        %1274 = vmatpush1.msra.mxu0 0.0
        %1275 = vmatprep.subr.mxu0 0.0
        %1276 = vmatpush1.msra.mxu0 0.0
        %1277 = vmatprep.subr.mxu0 0.0
        %1278 = vmatpush1.msra.mxu0 0.0
        %1279 = vmatprep.subr.mxu0 0.0
        %1280 = vmatpush1.msra.mxu0 0.0
        %1281 = vmatprep.subr.mxu0 0.0
        %1282 = vmatpush1.msra.mxu0 0.0
        %1283 = vmatprep.subr.mxu0 0.0
        %1284 = vmatpush1.msra.mxu0 0.0
        %1285 = vmatprep.subr.mxu0 0.0
        %1286 = vmatpush1.msra.mxu0 0.0
        %1287 = vmatprep.subr.mxu0 0.0
        %1288 = vmatpush1.msra.mxu0 0.0
        %1289 = vmatprep.mubr.f32.mxu0 0.0
        %1290 = vmatmul.mubr.f32.gmra.mrb[0].mxu0 %v1208
        %v1291 = vpop.f32.mrb[0].mxu0
        %v1292 = vadd.f32 0.0, %v1291
        %v1293 = vpop.f32.mrb[0].mxu0
        %v1294 = vadd.f32 0.0, %v1293
        %1295 = vmatprep.mubr.f32.mxu0 0.0
        %1296 = vmatmul.mubr.f32.gmra.mrb[0].mxu0 %v1211
        %v1297 = vpop.f32.mrb[0].mxu0
        %v1298 = vadd.f32 0.0, %v1297
        %v1299 = vpop.f32.mrb[0].mxu0
        %v1300 = vadd.f32 0.0, %v1299
        %1301 = vmatprep.mubr.f32.mxu0 0.0
        %1302 = vmatmul.mubr.f32.gmra.mrb[0].mxu0 %v1214
        %v1303 = vpop.f32.mrb[0].mxu0
        %v1304 = vadd.f32 0.0, %v1303
        %v1305 = vpop.f32.mrb[0].mxu0
        %v1306 = vadd.f32 0.0, %v1305
        %1307 = vmatprep.mubr.f32.mxu0 0.0
        %1308 = vmatmul.mubr.f32.gmra.mrb[0].mxu0 %v1217
        %v1309 = vpop.f32.mrb[0].mxu0
        %v1310 = vadd.f32 0.0, %v1309
        %v1311 = vpop.f32.mrb[0].mxu0
        %v1312 = vadd.f32 0.0, %v1311
        %1313 = vdwg.mxu0
        %v1314 = vadd.f32 %v1166, %v1292
        %v1315 = vadd.f32 %v1167, %v1294
        %v1316 = vadd.f32 %v1168, %v1298
        %v1317 = vadd.f32 %v1169, %v1300
        %v1318 = vadd.f32 %v1170, %v1304
        %v1319 = vadd.f32 %v1171, %v1306
        %v1320 = vadd.f32 %v1172, %v1310
        %v1321 = vadd.f32 %v1173, %v1312
        %v1322 = vld [vmem:[%s739 + $0x4] sm:$0xff]
        %v1323 = vld [vmem:[%s739 + $0xc] sm:$0xff]
        %v1324 = vld [vmem:[%s739 + $0x14] sm:$0xff]
        %v1325 = vld [vmem:[%s739 + $0x1c] sm:$0xff]
        %s1326 = scalar_lea.vmem [#allocation4], 896
        %v1327 = vld [vmem:[%s1326] sm:$0xff]
        %v1328 = vld [vmem:[%s1326 + $0x8] sm:$0xff]
        %v1329 = vld [vmem:[%s1326 + $0x10] sm:$0xff]
        %v1330 = vld [vmem:[%s1326 + $0x18] sm:$0xff]
        %v1331 = vld [vmem:[%s1326 + $0x20] sm:$0xff]
        %v1332 = vld [vmem:[%s1326 + $0x28] sm:$0xff]
        %v1333 = vld [vmem:[%s1326 + $0x30] sm:$0xff]
        %v1334 = vld [vmem:[%s1326 + $0x38] sm:$0xff]
        %v1335 = vld [vmem:[%s1326 + $0x40] sm:$0xff]
        %v1336 = vld [vmem:[%s1326 + $0x48] sm:$0xff]
        %v1337 = vld [vmem:[%s1326 + $0x50] sm:$0xff]
        %v1338 = vld [vmem:[%s1326 + $0x58] sm:$0xff]
        %v1339 = vld [vmem:[%s1326 + $0x60] sm:$0xff]
        %v1340 = vld [vmem:[%s1326 + $0x68] sm:$0xff]
        %v1341 = vld [vmem:[%s1326 + $0x70] sm:$0xff]
        %v1342 = vld [vmem:[%s1326 + $0x78] sm:$0xff]
        %v1343 = vld [vmem:[%s1326 + $0x80] sm:$0xff]
        %v1344 = vld [vmem:[%s1326 + $0x88] sm:$0xff]
        %v1345 = vld [vmem:[%s1326 + $0x90] sm:$0xff]
        %v1346 = vld [vmem:[%s1326 + $0x98] sm:$0xff]
        %v1347 = vld [vmem:[%s1326 + $0xa0] sm:$0xff]
        %v1348 = vld [vmem:[%s1326 + $0xa8] sm:$0xff]
        %v1349 = vld [vmem:[%s1326 + $0xb0] sm:$0xff]
        %v1350 = vld [vmem:[%s1326 + $0xb8] sm:$0xff]
        %v1351 = vld [vmem:[%s1326 + $0xc0] sm:$0xff]
        %v1352 = vld [vmem:[%s1326 + $0xc8] sm:$0xff]
        %v1353 = vld [vmem:[%s1326 + $0xd0] sm:$0xf]
        %v1354 = vld [vmem:[%s1326 + $0xd8] sm:$0xf]
        %v1356 = vsel %vm810, %v1322, 0
        %v1359 = vsel %vm810, %v1323, 0
        %v1362 = vsel %vm810, %v1324, 0
        %v1365 = vsel %vm810, %v1325, 0
        %v1368 = vsel %vm823, %v1353, 0
        %v1371 = vsel %vm823, %v1354, 0
        %1373 = vmatprep.subr.mxu0 %v1328
        %1374 = vmatpush1.msra.mxu0 %v1327
        %1375 = vmatprep.subr.mxu0 %v1330
        %1376 = vmatpush1.msra.mxu0 %v1329
        %1377 = vmatprep.subr.mxu0 %v1332
        %1378 = vmatpush1.msra.mxu0 %v1331
        %1379 = vmatprep.subr.mxu0 %v1334
        %1380 = vmatpush1.msra.mxu0 %v1333
        %1381 = vmatprep.subr.mxu0 %v1336
        %1382 = vmatpush1.msra.mxu0 %v1335
        %1383 = vmatprep.subr.mxu0 %v1338
        %1384 = vmatpush1.msra.mxu0 %v1337
        %1385 = vmatprep.subr.mxu0 %v1340
        %1386 = vmatpush1.msra.mxu0 %v1339
        %1387 = vmatprep.subr.mxu0 %v1342
        %1388 = vmatpush1.msra.mxu0 %v1341
        %1389 = vmatprep.subr.mxu0 %v1344
        %1390 = vmatpush1.msra.mxu0 %v1343
        %1391 = vmatprep.subr.mxu0 %v1346
        %1392 = vmatpush1.msra.mxu0 %v1345
        %1393 = vmatprep.subr.mxu0 %v1348
        %1394 = vmatpush1.msra.mxu0 %v1347
        %1395 = vmatprep.subr.mxu0 %v1350
        %1396 = vmatpush1.msra.mxu0 %v1349
        %1397 = vmatprep.subr.mxu0 %v1352
        %1398 = vmatpush1.msra.mxu0 %v1351
        %1399 = vmatprep.subr.mxu0 %v1371
        %1400 = vmatpush1.msra.mxu0 %v1368
        %1401 = vmatprep.subr.mxu0 0.0
        %1402 = vmatpush1.msra.mxu0 0.0
        %1403 = vmatprep.subr.mxu0 0.0
        %1404 = vmatpush1.msra.mxu0 0.0
        %1405 = vmatprep.subr.mxu0 0.0
        %1406 = vmatpush1.msra.mxu0 0.0
        %1407 = vmatprep.subr.mxu0 0.0
        %1408 = vmatpush1.msra.mxu0 0.0
        %1409 = vmatprep.subr.mxu0 0.0
        %1410 = vmatpush1.msra.mxu0 0.0
        %1411 = vmatprep.subr.mxu0 0.0
        %1412 = vmatpush1.msra.mxu0 0.0
        %1413 = vmatprep.subr.mxu0 0.0
        %1414 = vmatpush1.msra.mxu0 0.0
        %1415 = vmatprep.subr.mxu0 0.0
        %1416 = vmatpush1.msra.mxu0 0.0
        %1417 = vmatprep.subr.mxu0 0.0
        %1418 = vmatpush1.msra.mxu0 0.0
        %1419 = vmatprep.subr.mxu0 0.0
        %1420 = vmatpush1.msra.mxu0 0.0
        %1421 = vmatprep.subr.mxu0 0.0
        %1422 = vmatpush1.msra.mxu0 0.0
        %1423 = vmatprep.subr.mxu0 0.0
        %1424 = vmatpush1.msra.mxu0 0.0
        %1425 = vmatprep.subr.mxu0 0.0
        %1426 = vmatpush1.msra.mxu0 0.0
        %1427 = vmatprep.subr.mxu0 0.0
        %1428 = vmatpush1.msra.mxu0 0.0
        %1429 = vmatprep.subr.mxu0 0.0
        %1430 = vmatpush1.msra.mxu0 0.0
        %1431 = vmatprep.subr.mxu0 0.0
        %1432 = vmatpush1.msra.mxu0 0.0
        %1433 = vmatprep.subr.mxu0 0.0
        %1434 = vmatpush1.msra.mxu0 0.0
        %1435 = vmatprep.subr.mxu0 0.0
        %1436 = vmatpush1.msra.mxu0 0.0
        %1437 = vmatprep.mubr.f32.mxu0 0.0
        %1438 = vmatmul.mubr.f32.gmra.mrb[0].mxu0 %v1356
        %v1439 = vpop.f32.mrb[0].mxu0
        %v1440 = vadd.f32 0.0, %v1439
        %v1441 = vpop.f32.mrb[0].mxu0
        %v1442 = vadd.f32 0.0, %v1441
        %1443 = vmatprep.mubr.f32.mxu0 0.0
        %1444 = vmatmul.mubr.f32.gmra.mrb[0].mxu0 %v1359
        %v1445 = vpop.f32.mrb[0].mxu0
        %v1446 = vadd.f32 0.0, %v1445
        %v1447 = vpop.f32.mrb[0].mxu0
        %v1448 = vadd.f32 0.0, %v1447
        %1449 = vmatprep.mubr.f32.mxu0 0.0
        %1450 = vmatmul.mubr.f32.gmra.mrb[0].mxu0 %v1362
        %v1451 = vpop.f32.mrb[0].mxu0
        %v1452 = vadd.f32 0.0, %v1451
        %v1453 = vpop.f32.mrb[0].mxu0
        %v1454 = vadd.f32 0.0, %v1453
        %1455 = vmatprep.mubr.f32.mxu0 0.0
        %1456 = vmatmul.mubr.f32.gmra.mrb[0].mxu0 %v1365
        %v1457 = vpop.f32.mrb[0].mxu0
        %v1458 = vadd.f32 0.0, %v1457
        %v1459 = vpop.f32.mrb[0].mxu0
        %v1460 = vadd.f32 0.0, %v1459
        %1461 = vdwg.mxu0
        %v1462 = vadd.f32 %v1314, %v1440
        %v1463 = vadd.f32 %v1315, %v1442
        %v1464 = vadd.f32 %v1316, %v1446
        %v1465 = vadd.f32 %v1317, %v1448
        %v1466 = vadd.f32 %v1318, %v1452
        %v1467 = vadd.f32 %v1319, %v1454
        %v1468 = vadd.f32 %v1320, %v1458
        %v1469 = vadd.f32 %v1321, %v1460
        %v1470 = vld [vmem:[#allocation7] sm:$0x3]
        %v1472 = vlaneseq
        %v1473 = vshrl.u32 %v1472, 7
        %v1474 = vsub.s32 0, %v1473
        %v1475 = vrot.slane %v1470, %v1474
        %v1476 = vlaneseq
        %v1477 = vshrl.u32 %v1476, 7
        %v1478 = vsub.s32 1, %v1477
        %v1479 = vrot.slane %v1470, %v1478
        %v1482 = vmul.f32 %v1462, %v1475
        %v1483 = vmul.f32 %v1463, %v1479
        %v1484 = vmul.f32 %v1464, %v1475
        %v1485 = vmul.f32 %v1465, %v1479
        %v1486 = vmul.f32 %v1466, %v1475
        %v1487 = vmul.f32 %v1467, %v1479
        %v1488 = vmul.f32 %v1468, %v1475
        %v1489 = vmul.f32 %v1469, %v1479
        %v1490 = vld [vmem:[#allocation9] sm:$0x3]
        %v1492 = vlaneseq
        %v1493 = vshrl.u32 %v1492, 7
        %v1494 = vsub.s32 0, %v1493
        %v1495 = vrot.slane %v1490, %v1494
        %v1496 = vlaneseq
        %v1497 = vshrl.u32 %v1496, 7
        %v1498 = vsub.s32 1, %v1497
        %v1499 = vrot.slane %v1490, %v1498
        %v1502 = vadd.f32 %v1482, %v1495
        %v1503 = vadd.f32 %v1483, %v1499
        %v1504 = vadd.f32 %v1484, %v1495
        %v1505 = vadd.f32 %v1485, %v1499
        %v1506 = vadd.f32 %v1486, %v1495
        %v1507 = vadd.f32 %v1487, %v1499
        %v1508 = vadd.f32 %v1488, %v1495
        %v1509 = vadd.f32 %v1489, %v1499
        %v1510 = vmax.f32 %v1502, 0.0
        %v1511 = vmax.f32 %v1503, 0.0
        %v1512 = vmax.f32 %v1504, 0.0
        %v1513 = vmax.f32 %v1505, 0.0
        %v1514 = vmax.f32 %v1506, 0.0
        %v1515 = vmax.f32 %v1507, 0.0
        %v1516 = vmax.f32 %v1508, 0.0
        %v1517 = vmax.f32 %v1509, 0.0
        %v1518 = vld [vmem:[#allocation10] sm:$0xff]
        %v1519 = vld [vmem:[#allocation10 + $0x8] sm:$0xff]
        %v1520 = vld [vmem:[#allocation10 + $0x10] sm:$0x7]
        %vm1521 = vcmask 261120
        %v1523 = vsel %vm1521, %v1518, 0
        %v1526 = vsel %vm1521, %v1519, 0
        %v1529 = vsel %vm1521, %v1520, 0
        %1531 = vmatprep.subr.mxu0 %v1511
        %1532 = vmatpush1.msra.mxu0 %v1510
        %1533 = vmatprep.subr.mxu0 %v1513
        %1534 = vmatpush1.msra.mxu0 %v1512
        %1535 = vmatprep.subr.mxu0 %v1515
        %1536 = vmatpush1.msra.mxu0 %v1514
        %1537 = vmatprep.subr.mxu0 %v1517
        %1538 = vmatpush1.msra.mxu0 %v1516
        %1539 = vmatprep.subr.mxu0 0.0
        %1540 = vmatpush1.msra.mxu0 0.0
        %1541 = vmatprep.subr.mxu0 0.0
        %1542 = vmatpush1.msra.mxu0 0.0
        %1543 = vmatprep.subr.mxu0 0.0
        %1544 = vmatpush1.msra.mxu0 0.0
        %1545 = vmatprep.subr.mxu0 0.0
        %1546 = vmatpush1.msra.mxu0 0.0
        %1547 = vmatprep.subr.mxu0 0.0
        %1548 = vmatpush1.msra.mxu0 0.0
        %1549 = vmatprep.subr.mxu0 0.0
        %1550 = vmatpush1.msra.mxu0 0.0
        %1551 = vmatprep.subr.mxu0 0.0
        %1552 = vmatpush1.msra.mxu0 0.0
        %1553 = vmatprep.subr.mxu0 0.0
        %1554 = vmatpush1.msra.mxu0 0.0
        %1555 = vmatprep.subr.mxu0 0.0
        %1556 = vmatpush1.msra.mxu0 0.0
        %1557 = vmatprep.subr.mxu0 0.0
        %1558 = vmatpush1.msra.mxu0 0.0
        %1559 = vmatprep.subr.mxu0 0.0
        %1560 = vmatpush1.msra.mxu0 0.0
        %1561 = vmatprep.subr.mxu0 0.0
        %1562 = vmatpush1.msra.mxu0 0.0
        %1563 = vmatprep.subr.mxu0 0.0
        %1564 = vmatpush1.msra.mxu0 0.0
        %1565 = vmatprep.subr.mxu0 0.0
        %1566 = vmatpush1.msra.mxu0 0.0
        %1567 = vmatprep.subr.mxu0 0.0
        %1568 = vmatpush1.msra.mxu0 0.0
        %1569 = vmatprep.subr.mxu0 0.0
        %1570 = vmatpush1.msra.mxu0 0.0
        %1571 = vmatprep.subr.mxu0 0.0
        %1572 = vmatpush1.msra.mxu0 0.0
        %1573 = vmatprep.subr.mxu0 0.0
        %1574 = vmatpush1.msra.mxu0 0.0
        %1575 = vmatprep.subr.mxu0 0.0
        %1576 = vmatpush1.msra.mxu0 0.0
        %1577 = vmatprep.subr.mxu0 0.0
        %1578 = vmatpush1.msra.mxu0 0.0
        %1579 = vmatprep.subr.mxu0 0.0
        %1580 = vmatpush1.msra.mxu0 0.0
        %1581 = vmatprep.subr.mxu0 0.0
        %1582 = vmatpush1.msra.mxu0 0.0
        %1583 = vmatprep.subr.mxu0 0.0
        %1584 = vmatpush1.msra.mxu0 0.0
        %1585 = vmatprep.subr.mxu0 0.0
        %1586 = vmatpush1.msra.mxu0 0.0
        %1587 = vmatprep.subr.mxu0 0.0
        %1588 = vmatpush1.msra.mxu0 0.0
        %1589 = vmatprep.subr.mxu0 0.0
        %1590 = vmatpush1.msra.mxu0 0.0
        %1591 = vmatprep.subr.mxu0 0.0
        %1592 = vmatpush1.msra.mxu0 0.0
        %1593 = vmatprep.subr.mxu0 0.0
        %1594 = vmatpush1.msra.mxu0 0.0
        %1595 = vmatprep.mubr.f32.mxu0 0.0
        %1596 = vmatmul.mubr.f32.gmra.mrb[0].mxu0 %v1523
        %v1597 = vpop.f32.mrb[0].mxu0
        %v1598 = vadd.f32 0.0, %v1597
        %v1599 = vpop.f32.mrb[0].mxu0
        %v1600 = vadd.f32 0.0, %v1599
        %1601 = vmatprep.mubr.f32.mxu0 0.0
        %1602 = vmatmul.mubr.f32.gmra.mrb[0].mxu0 %v1526
        %v1603 = vpop.f32.mrb[0].mxu0
        %v1604 = vadd.f32 0.0, %v1603
        %v1605 = vpop.f32.mrb[0].mxu0
        %v1606 = vadd.f32 0.0, %v1605
        %1607 = vmatprep.mubr.f32.mxu0 0.0
        %1608 = vmatmul.mubr.f32.gmra.mrb[0].mxu0 %v1529
        %v1609 = vpop.f32.mrb[0].mxu0
        %v1610 = vadd.f32 0.0, %v1609
        %v1611 = vpop.f32.mrb[0].mxu0
        %v1612 = vadd.f32 0.0, %v1611
        %1613 = vdwg.mxu0
        %s1614 = scalar_lea.vmem [#allocation10], 24
        %v1615 = vld [vmem:[%s1614] sm:$0xff]
        %v1616 = vld [vmem:[%s1614 + $0x8] sm:$0xff]
        %v1617 = vld [vmem:[%s1614 + $0x10] sm:$0x7]
        %v1619 = vsel %vm1521, %v1615, 0
        %v1622 = vsel %vm1521, %v1616, 0
        %v1625 = vsel %vm1521, %v1617, 0
        %1627 = vmatprep.subr.mxu0 %v1511
        %1628 = vmatpush1.msra.mxu0 %v1510
        %1629 = vmatprep.subr.mxu0 %v1513
        %1630 = vmatpush1.msra.mxu0 %v1512
        %1631 = vmatprep.subr.mxu0 %v1515
        %1632 = vmatpush1.msra.mxu0 %v1514
        %1633 = vmatprep.subr.mxu0 %v1517
        %1634 = vmatpush1.msra.mxu0 %v1516
        %1635 = vmatprep.subr.mxu0 0.0
        %1636 = vmatpush1.msra.mxu0 0.0
        %1637 = vmatprep.subr.mxu0 0.0
        %1638 = vmatpush1.msra.mxu0 0.0
        %1639 = vmatprep.subr.mxu0 0.0
        %1640 = vmatpush1.msra.mxu0 0.0
        %1641 = vmatprep.subr.mxu0 0.0
        %1642 = vmatpush1.msra.mxu0 0.0
        %1643 = vmatprep.subr.mxu0 0.0
        %1644 = vmatpush1.msra.mxu0 0.0
        %1645 = vmatprep.subr.mxu0 0.0
        %1646 = vmatpush1.msra.mxu0 0.0
        %1647 = vmatprep.subr.mxu0 0.0
        %1648 = vmatpush1.msra.mxu0 0.0
        %1649 = vmatprep.subr.mxu0 0.0
        %1650 = vmatpush1.msra.mxu0 0.0
        %1651 = vmatprep.subr.mxu0 0.0
        %1652 = vmatpush1.msra.mxu0 0.0
        %1653 = vmatprep.subr.mxu0 0.0
        %1654 = vmatpush1.msra.mxu0 0.0
        %1655 = vmatprep.subr.mxu0 0.0
        %1656 = vmatpush1.msra.mxu0 0.0
        %1657 = vmatprep.subr.mxu0 0.0
        %1658 = vmatpush1.msra.mxu0 0.0
        %1659 = vmatprep.subr.mxu0 0.0
        %1660 = vmatpush1.msra.mxu0 0.0
        %1661 = vmatprep.subr.mxu0 0.0
        %1662 = vmatpush1.msra.mxu0 0.0
        %1663 = vmatprep.subr.mxu0 0.0
        %1664 = vmatpush1.msra.mxu0 0.0
        %1665 = vmatprep.subr.mxu0 0.0
        %1666 = vmatpush1.msra.mxu0 0.0
        %1667 = vmatprep.subr.mxu0 0.0
        %1668 = vmatpush1.msra.mxu0 0.0
        %1669 = vmatprep.subr.mxu0 0.0
        %1670 = vmatpush1.msra.mxu0 0.0
        %1671 = vmatprep.subr.mxu0 0.0
        %1672 = vmatpush1.msra.mxu0 0.0
        %1673 = vmatprep.subr.mxu0 0.0
        %1674 = vmatpush1.msra.mxu0 0.0
        %1675 = vmatprep.subr.mxu0 0.0
        %1676 = vmatpush1.msra.mxu0 0.0
        %1677 = vmatprep.subr.mxu0 0.0
        %1678 = vmatpush1.msra.mxu0 0.0
        %1679 = vmatprep.subr.mxu0 0.0
        %1680 = vmatpush1.msra.mxu0 0.0
        %1681 = vmatprep.subr.mxu0 0.0
        %1682 = vmatpush1.msra.mxu0 0.0
        %1683 = vmatprep.subr.mxu0 0.0
        %1684 = vmatpush1.msra.mxu0 0.0
        %1685 = vmatprep.subr.mxu0 0.0
        %1686 = vmatpush1.msra.mxu0 0.0
        %1687 = vmatprep.subr.mxu0 0.0
        %1688 = vmatpush1.msra.mxu0 0.0
        %1689 = vmatprep.subr.mxu0 0.0
        %1690 = vmatpush1.msra.mxu0 0.0
        %1691 = vmatprep.mubr.f32.mxu0 0.0
        %1692 = vmatmul.mubr.f32.gmra.mrb[0].mxu0 %v1619
        %v1693 = vpop.f32.mrb[0].mxu0
        %v1694 = vadd.f32 0.0, %v1693
        %v1695 = vpop.f32.mrb[0].mxu0
        %v1696 = vadd.f32 0.0, %v1695
        %1697 = vmatprep.mubr.f32.mxu0 0.0
        %1698 = vmatmul.mubr.f32.gmra.mrb[0].mxu0 %v1622
        %v1699 = vpop.f32.mrb[0].mxu0
        %v1700 = vadd.f32 0.0, %v1699
        %v1701 = vpop.f32.mrb[0].mxu0
        %v1702 = vadd.f32 0.0, %v1701
        %1703 = vmatprep.mubr.f32.mxu0 0.0
        %1704 = vmatmul.mubr.f32.gmra.mrb[0].mxu0 %v1625
        %v1705 = vpop.f32.mrb[0].mxu0
        %v1706 = vadd.f32 0.0, %v1705
        %v1707 = vpop.f32.mrb[0].mxu0
        %v1708 = vadd.f32 0.0, %v1707
        %1709 = vdwg.mxu0
        %v1710 = vmax.f32 %v1598, %v1694
        %v1711 = vmax.f32 %v1600, %v1696
        %v1712 = vmax.f32 %v1604, %v1700
        %v1713 = vmax.f32 %v1606, %v1702
        %v1714 = vmax.f32 %v1610, %v1706
        %v1715 = vmax.f32 %v1612, %v1708
        %s1716 = scalar_lea.vmem [#allocation10], 48
        %v1717 = vld [vmem:[%s1716] sm:$0xff]
        %v1718 = vld [vmem:[%s1716 + $0x8] sm:$0xff]
        %v1719 = vld [vmem:[%s1716 + $0x10] sm:$0x7]
        %v1721 = vsel %vm1521, %v1717, 0
        %v1724 = vsel %vm1521, %v1718, 0
        %v1727 = vsel %vm1521, %v1719, 0
        %1729 = vmatprep.subr.mxu0 %v1511
        %1730 = vmatpush1.msra.mxu0 %v1510
        %1731 = vmatprep.subr.mxu0 %v1513
        %1732 = vmatpush1.msra.mxu0 %v1512
        %1733 = vmatprep.subr.mxu0 %v1515
        %1734 = vmatpush1.msra.mxu0 %v1514
        %1735 = vmatprep.subr.mxu0 %v1517
        %1736 = vmatpush1.msra.mxu0 %v1516
        %1737 = vmatprep.subr.mxu0 0.0
        %1738 = vmatpush1.msra.mxu0 0.0
        %1739 = vmatprep.subr.mxu0 0.0
        %1740 = vmatpush1.msra.mxu0 0.0
        %1741 = vmatprep.subr.mxu0 0.0
        %1742 = vmatpush1.msra.mxu0 0.0
        %1743 = vmatprep.subr.mxu0 0.0
        %1744 = vmatpush1.msra.mxu0 0.0
        %1745 = vmatprep.subr.mxu0 0.0
        %1746 = vmatpush1.msra.mxu0 0.0
        %1747 = vmatprep.subr.mxu0 0.0
        %1748 = vmatpush1.msra.mxu0 0.0
        %1749 = vmatprep.subr.mxu0 0.0
        %1750 = vmatpush1.msra.mxu0 0.0
        %1751 = vmatprep.subr.mxu0 0.0
        %1752 = vmatpush1.msra.mxu0 0.0
        %1753 = vmatprep.subr.mxu0 0.0
        %1754 = vmatpush1.msra.mxu0 0.0
        %1755 = vmatprep.subr.mxu0 0.0
        %1756 = vmatpush1.msra.mxu0 0.0
        %1757 = vmatprep.subr.mxu0 0.0
        %1758 = vmatpush1.msra.mxu0 0.0
        %1759 = vmatprep.subr.mxu0 0.0
        %1760 = vmatpush1.msra.mxu0 0.0
        %1761 = vmatprep.subr.mxu0 0.0
        %1762 = vmatpush1.msra.mxu0 0.0
        %1763 = vmatprep.subr.mxu0 0.0
        %1764 = vmatpush1.msra.mxu0 0.0
        %1765 = vmatprep.subr.mxu0 0.0
        %1766 = vmatpush1.msra.mxu0 0.0
        %1767 = vmatprep.subr.mxu0 0.0
        %1768 = vmatpush1.msra.mxu0 0.0
        %1769 = vmatprep.subr.mxu0 0.0
        %1770 = vmatpush1.msra.mxu0 0.0
        %1771 = vmatprep.subr.mxu0 0.0
        %1772 = vmatpush1.msra.mxu0 0.0
        %1773 = vmatprep.subr.mxu0 0.0
        %1774 = vmatpush1.msra.mxu0 0.0
        %1775 = vmatprep.subr.mxu0 0.0
        %1776 = vmatpush1.msra.mxu0 0.0
        %1777 = vmatprep.subr.mxu0 0.0
        %1778 = vmatpush1.msra.mxu0 0.0
        %1779 = vmatprep.subr.mxu0 0.0
        %1780 = vmatpush1.msra.mxu0 0.0
        %1781 = vmatprep.subr.mxu0 0.0
        %1782 = vmatpush1.msra.mxu0 0.0
        %1783 = vmatprep.subr.mxu0 0.0
        %1784 = vmatpush1.msra.mxu0 0.0
        %1785 = vmatprep.subr.mxu0 0.0
        %1786 = vmatpush1.msra.mxu0 0.0
        %1787 = vmatprep.subr.mxu0 0.0
        %1788 = vmatpush1.msra.mxu0 0.0
        %1789 = vmatprep.subr.mxu0 0.0
        %1790 = vmatpush1.msra.mxu0 0.0
        %1791 = vmatprep.subr.mxu0 0.0
        %1792 = vmatpush1.msra.mxu0 0.0
        %1793 = vmatprep.mubr.f32.mxu0 0.0
        %1794 = vmatmul.mubr.f32.gmra.mrb[0].mxu0 %v1721
        %v1795 = vpop.f32.mrb[0].mxu0
        %v1796 = vadd.f32 0.0, %v1795
        %v1797 = vpop.f32.mrb[0].mxu0
        %v1798 = vadd.f32 0.0, %v1797
        %1799 = vmatprep.mubr.f32.mxu0 0.0
        %1800 = vmatmul.mubr.f32.gmra.mrb[0].mxu0 %v1724
        %v1801 = vpop.f32.mrb[0].mxu0
        %v1802 = vadd.f32 0.0, %v1801
        %v1803 = vpop.f32.mrb[0].mxu0
        %v1804 = vadd.f32 0.0, %v1803
        %1805 = vmatprep.mubr.f32.mxu0 0.0
        %1806 = vmatmul.mubr.f32.gmra.mrb[0].mxu0 %v1727
        %v1807 = vpop.f32.mrb[0].mxu0
        %v1808 = vadd.f32 0.0, %v1807
        %v1809 = vpop.f32.mrb[0].mxu0
        %v1810 = vadd.f32 0.0, %v1809
        %1811 = vdwg.mxu0
        %v1812 = vmax.f32 %v1710, %v1796
        %v1813 = vmax.f32 %v1711, %v1798
        %v1814 = vmax.f32 %v1712, %v1802
        %v1815 = vmax.f32 %v1713, %v1804
        %v1816 = vmax.f32 %v1714, %v1808
        %v1817 = vmax.f32 %v1715, %v1810
        %v1818 = vld [vmem:[%s5] sm:$0xff]
        %v1819 = vld [vmem:[%s5 + $0x8] sm:$0xff]
        %v1820 = vld [vmem:[%s5 + $0x10] sm:$0xff]
        %v1821 = vld [vmem:[%s5 + $0x18] sm:$0xff]
        %v1822 = vld [vmem:[%s5 + $0x20] sm:$0xff]
        %v1823 = vld [vmem:[%s5 + $0x28] sm:$0xff]
        %v1824 = vld [vmem:[%s5 + $0x30] sm:$0xff]
        %v1825 = vld [vmem:[%s5 + $0x38] sm:$0xff]
        %v1826 = vld [vmem:[%s5 + $0x40] sm:$0xff]
        %v1827 = vld [vmem:[%s5 + $0x48] sm:$0xff]
        %v1828 = vld [vmem:[%s5 + $0x50] sm:$0xff]
        %v1829 = vld [vmem:[%s5 + $0x58] sm:$0xff]
        %v1830 = vld [vmem:[%s5 + $0x60] sm:$0xff]
        %v1831 = vld [vmem:[%s5 + $0x68] sm:$0xff]
        %v1832 = vld [vmem:[%s5 + $0x70] sm:$0xff]
        %v1833 = vld [vmem:[%s5 + $0x78] sm:$0xff]
        %v1834 = vld [vmem:[%s5 + $0x80] sm:$0xff]
        %v1835 = vld [vmem:[%s5 + $0x88] sm:$0xff]
        %v1836 = vld [vmem:[%s5 + $0x90] sm:$0xff]
        %v1837 = vld [vmem:[%s5 + $0x98] sm:$0xff]
        %v1838 = vld [vmem:[%s5 + $0xa0] sm:$0xff]
        %v1839 = vld [vmem:[%s5 + $0xa8] sm:$0xff]
        %v1840 = vld [vmem:[%s5 + $0xb0] sm:$0xff]
        %v1841 = vld [vmem:[%s5 + $0xb8] sm:$0xff]
        %v1842 = vld [vmem:[%s5 + $0xc0] sm:$0xff]
        %v1843 = vld [vmem:[%s5 + $0xc8] sm:$0xff]
        %v1844 = vld [vmem:[%s5 + $0xd0] sm:$0xff]
        %v1845 = vld [vmem:[%s5 + $0xd8] sm:$0xff]
        %v1846 = vld [vmem:[%s5 + $0xe0] sm:$0xff]
        %v1847 = vld [vmem:[%s5 + $0xe8] sm:$0xff]
        %v1848 = vld [vmem:[%s5 + $0xf0] sm:$0xff]
        %v1849 = vld [vmem:[%s5 + $0xf8] sm:$0xff]
        %v1850 = vld [vmem:[%s5 + $0x100] sm:$0xff]
        %v1851 = vld [vmem:[%s5 + $0x108] sm:$0xff]
        %v1852 = vld [vmem:[%s5 + $0x110] sm:$0xff]
        %v1853 = vld [vmem:[%s5 + $0x118] sm:$0xff]
        %v1854 = vld [vmem:[%s5 + $0x120] sm:$0xff]
        %v1855 = vld [vmem:[%s5 + $0x128] sm:$0xff]
        %v1856 = vld [vmem:[%s5 + $0x130] sm:$0xff]
        %v1857 = vld [vmem:[%s5 + $0x138] sm:$0xff]
        %v1858 = vld [vmem:[%s5 + $0x140] sm:$0xff]
        %v1859 = vld [vmem:[%s5 + $0x148] sm:$0xff]
        %v1860 = vld [vmem:[%s5 + $0x150] sm:$0xff]
        %v1861 = vld [vmem:[%s5 + $0x158] sm:$0xff]
        %v1862 = vld [vmem:[%s5 + $0x160] sm:$0xff]
        %v1863 = vld [vmem:[%s5 + $0x168] sm:$0xff]
        %v1864 = vld [vmem:[%s5 + $0x170] sm:$0xff]
        %v1865 = vld [vmem:[%s5 + $0x178] sm:$0xff]
        %v1866 = vld [vmem:[%s5 + $0x180] sm:$0xff]
        %v1867 = vld [vmem:[%s5 + $0x188] sm:$0xff]
        %v1868 = vld [vmem:[%s5 + $0x190] sm:$0xff]
        %v1869 = vld [vmem:[%s5 + $0x198] sm:$0xff]
        %v1870 = vld [vmem:[%s5 + $0x1a0] sm:$0xff]
        %v1871 = vld [vmem:[%s5 + $0x1a8] sm:$0xff]
        %v1872 = vld [vmem:[%s5 + $0x1b0] sm:$0xff]
        %v1873 = vld [vmem:[%s5 + $0x1b8] sm:$0xff]
        %v1874 = vld [vmem:[%s5 + $0x1c0] sm:$0xff]
        %v1875 = vld [vmem:[%s5 + $0x1c8] sm:$0xff]
        %v1876 = vld [vmem:[%s5 + $0x1d0] sm:$0xff]
        %v1877 = vld [vmem:[%s5 + $0x1d8] sm:$0xff]
        %v1878 = vld [vmem:[%s5 + $0x1e0] sm:$0xff]
        %v1879 = vld [vmem:[%s5 + $0x1e8] sm:$0xff]
        %v1880 = vld [vmem:[%s5 + $0x1f0] sm:$0xff]
        %v1881 = vld [vmem:[%s5 + $0x1f8] sm:$0xff]
        %1882 = vmatprep.subr.mxu0 %v1819
        %1883 = vmatpush1.msra.mxu0 %v1818
        %1884 = vmatprep.subr.mxu0 %v1821
        %1885 = vmatpush1.msra.mxu0 %v1820
        %1886 = vmatprep.subr.mxu0 %v1823
        %1887 = vmatpush1.msra.mxu0 %v1822
        %1888 = vmatprep.subr.mxu0 %v1825
        %1889 = vmatpush1.msra.mxu0 %v1824
        %1890 = vmatprep.subr.mxu0 %v1827
        %1891 = vmatpush1.msra.mxu0 %v1826
        %1892 = vmatprep.subr.mxu0 %v1829
        %1893 = vmatpush1.msra.mxu0 %v1828
        %1894 = vmatprep.subr.mxu0 %v1831
        %1895 = vmatpush1.msra.mxu0 %v1830
        %1896 = vmatprep.subr.mxu0 %v1833
        %1897 = vmatpush1.msra.mxu0 %v1832
        %1898 = vmatprep.subr.mxu0 %v1835
        %1899 = vmatpush1.msra.mxu0 %v1834
        %1900 = vmatprep.subr.mxu0 %v1837
        %1901 = vmatpush1.msra.mxu0 %v1836
        %1902 = vmatprep.subr.mxu0 %v1839
        %1903 = vmatpush1.msra.mxu0 %v1838
        %1904 = vmatprep.subr.mxu0 %v1841
        %1905 = vmatpush1.msra.mxu0 %v1840
        %1906 = vmatprep.subr.mxu0 %v1843
        %1907 = vmatpush1.msra.mxu0 %v1842
        %1908 = vmatprep.subr.mxu0 %v1845
        %1909 = vmatpush1.msra.mxu0 %v1844
        %1910 = vmatprep.subr.mxu0 %v1847
        %1911 = vmatpush1.msra.mxu0 %v1846
        %1912 = vmatprep.subr.mxu0 %v1849
        %1913 = vmatpush1.msra.mxu0 %v1848
        %1914 = vmatprep.subr.mxu0 %v1851
        %1915 = vmatpush1.msra.mxu0 %v1850
        %1916 = vmatprep.subr.mxu0 %v1853
        %1917 = vmatpush1.msra.mxu0 %v1852
        %1918 = vmatprep.subr.mxu0 %v1855
        %1919 = vmatpush1.msra.mxu0 %v1854
        %1920 = vmatprep.subr.mxu0 %v1857
        %1921 = vmatpush1.msra.mxu0 %v1856
        %1922 = vmatprep.subr.mxu0 %v1859
        %1923 = vmatpush1.msra.mxu0 %v1858
        %1924 = vmatprep.subr.mxu0 %v1861
        %1925 = vmatpush1.msra.mxu0 %v1860
        %1926 = vmatprep.subr.mxu0 %v1863
        %1927 = vmatpush1.msra.mxu0 %v1862
        %1928 = vmatprep.subr.mxu0 %v1865
        %1929 = vmatpush1.msra.mxu0 %v1864
        %1930 = vmatprep.subr.mxu0 %v1867
        %1931 = vmatpush1.msra.mxu0 %v1866
        %1932 = vmatprep.subr.mxu0 %v1869
        %1933 = vmatpush1.msra.mxu0 %v1868
        %1934 = vmatprep.subr.mxu0 %v1871
        %1935 = vmatpush1.msra.mxu0 %v1870
        %1936 = vmatprep.subr.mxu0 %v1873
        %1937 = vmatpush1.msra.mxu0 %v1872
        %1938 = vmatprep.subr.mxu0 %v1875
        %1939 = vmatpush1.msra.mxu0 %v1874
        %1940 = vmatprep.subr.mxu0 %v1877
        %1941 = vmatpush1.msra.mxu0 %v1876
        %1942 = vmatprep.subr.mxu0 %v1879
        %1943 = vmatpush1.msra.mxu0 %v1878
        %1944 = vmatprep.subr.mxu0 %v1881
        %1945 = vmatpush1.msra.mxu0 %v1880
        %1946 = vmatprep.mubr.f32.mxu0 %v1813
        %1947 = vmatmul.mubr.f32.gmra.mrb[0].mxu0 %v1812
        %v1948 = vpop.f32.mrb[0].mxu0
        %v1949 = vadd.f32 0.0, %v1948
        %v1950 = vpop.f32.mrb[0].mxu0
        %v1951 = vadd.f32 0.0, %v1950
        %1952 = vmatprep.mubr.f32.mxu0 %v1815
        %1953 = vmatmul.mubr.f32.gmra.mrb[0].mxu0 %v1814
        %v1954 = vpop.f32.mrb[0].mxu0
        %v1955 = vadd.f32 0.0, %v1954
        %v1956 = vpop.f32.mrb[0].mxu0
        %v1957 = vadd.f32 0.0, %v1956
        %1958 = vmatprep.mubr.f32.mxu0 %v1817
        %1959 = vmatmul.mubr.f32.gmra.mrb[0].mxu0 %v1816
        %v1960 = vpop.f32.mrb[0].mxu0
        %v1961 = vadd.f32 0.0, %v1960
        %v1962 = vpop.f32.mrb[0].mxu0
        %v1963 = vadd.f32 0.0, %v1962
        %1964 = vdwg.mxu0
        %s1965 = scalar_lea.vmem %s5, 512
        %v1966 = vld [vmem:[%s1965] sm:$0xff]
        %v1967 = vld [vmem:[%s1965 + $0x8] sm:$0xff]
        %v1968 = vld [vmem:[%s1965 + $0x10] sm:$0xff]
        %v1969 = vld [vmem:[%s1965 + $0x18] sm:$0xff]
        %v1970 = vld [vmem:[%s1965 + $0x20] sm:$0xff]
        %v1971 = vld [vmem:[%s1965 + $0x28] sm:$0xff]
        %v1972 = vld [vmem:[%s1965 + $0x30] sm:$0xff]
        %v1973 = vld [vmem:[%s1965 + $0x38] sm:$0xff]
        %v1974 = vld [vmem:[%s1965 + $0x40] sm:$0xff]
        %v1975 = vld [vmem:[%s1965 + $0x48] sm:$0xff]
        %v1976 = vld [vmem:[%s1965 + $0x50] sm:$0xff]
        %v1977 = vld [vmem:[%s1965 + $0x58] sm:$0xff]
        %v1978 = vld [vmem:[%s1965 + $0x60] sm:$0xff]
        %v1979 = vld [vmem:[%s1965 + $0x68] sm:$0xff]
        %v1980 = vld [vmem:[%s1965 + $0x70] sm:$0xff]
        %v1981 = vld [vmem:[%s1965 + $0x78] sm:$0xff]
        %v1982 = vld [vmem:[%s1965 + $0x80] sm:$0xff]
        %v1983 = vld [vmem:[%s1965 + $0x88] sm:$0xff]
        %v1984 = vld [vmem:[%s1965 + $0x90] sm:$0xff]
        %v1985 = vld [vmem:[%s1965 + $0x98] sm:$0xff]
        %v1986 = vld [vmem:[%s1965 + $0xa0] sm:$0xff]
        %v1987 = vld [vmem:[%s1965 + $0xa8] sm:$0xff]
        %v1988 = vld [vmem:[%s1965 + $0xb0] sm:$0xff]
        %v1989 = vld [vmem:[%s1965 + $0xb8] sm:$0xff]
        %v1990 = vld [vmem:[%s1965 + $0xc0] sm:$0xff]
        %v1991 = vld [vmem:[%s1965 + $0xc8] sm:$0xff]
        %v1992 = vld [vmem:[%s1965 + $0xd0] sm:$0xff]
        %v1993 = vld [vmem:[%s1965 + $0xd8] sm:$0xff]
        %v1994 = vld [vmem:[%s1965 + $0xe0] sm:$0xff]
        %v1995 = vld [vmem:[%s1965 + $0xe8] sm:$0xff]
        %v1996 = vld [vmem:[%s1965 + $0xf0] sm:$0xff]
        %v1997 = vld [vmem:[%s1965 + $0xf8] sm:$0xff]
        %v1998 = vld [vmem:[%s1965 + $0x100] sm:$0xff]
        %v1999 = vld [vmem:[%s1965 + $0x108] sm:$0xff]
        %v2000 = vld [vmem:[%s1965 + $0x110] sm:$0xff]
        %v2001 = vld [vmem:[%s1965 + $0x118] sm:$0xff]
        %v2002 = vld [vmem:[%s1965 + $0x120] sm:$0xff]
        %v2003 = vld [vmem:[%s1965 + $0x128] sm:$0xff]
        %v2004 = vld [vmem:[%s1965 + $0x130] sm:$0xff]
        %v2005 = vld [vmem:[%s1965 + $0x138] sm:$0xff]
        %v2006 = vld [vmem:[%s1965 + $0x140] sm:$0xff]
        %v2007 = vld [vmem:[%s1965 + $0x148] sm:$0xff]
        %v2008 = vld [vmem:[%s1965 + $0x150] sm:$0xff]
        %v2009 = vld [vmem:[%s1965 + $0x158] sm:$0xff]
        %v2010 = vld [vmem:[%s1965 + $0x160] sm:$0xff]
        %v2011 = vld [vmem:[%s1965 + $0x168] sm:$0xff]
        %v2012 = vld [vmem:[%s1965 + $0x170] sm:$0xff]
        %v2013 = vld [vmem:[%s1965 + $0x178] sm:$0xff]
        %v2014 = vld [vmem:[%s1965 + $0x180] sm:$0xff]
        %v2015 = vld [vmem:[%s1965 + $0x188] sm:$0xff]
        %v2016 = vld [vmem:[%s1965 + $0x190] sm:$0xff]
        %v2017 = vld [vmem:[%s1965 + $0x198] sm:$0xff]
        %v2018 = vld [vmem:[%s1965 + $0x1a0] sm:$0xff]
        %v2019 = vld [vmem:[%s1965 + $0x1a8] sm:$0xff]
        %v2020 = vld [vmem:[%s1965 + $0x1b0] sm:$0xff]
        %v2021 = vld [vmem:[%s1965 + $0x1b8] sm:$0xff]
        %v2022 = vld [vmem:[%s1965 + $0x1c0] sm:$0xff]
        %v2023 = vld [vmem:[%s1965 + $0x1c8] sm:$0xff]
        %v2024 = vld [vmem:[%s1965 + $0x1d0] sm:$0xff]
        %v2025 = vld [vmem:[%s1965 + $0x1d8] sm:$0xff]
        %v2026 = vld [vmem:[%s1965 + $0x1e0] sm:$0xff]
        %v2027 = vld [vmem:[%s1965 + $0x1e8] sm:$0xff]
        %v2028 = vld [vmem:[%s1965 + $0x1f0] sm:$0xff]
        %v2029 = vld [vmem:[%s1965 + $0x1f8] sm:$0xff]
        %2030 = vmatprep.subr.mxu0 %v1967
        %2031 = vmatpush1.msra.mxu0 %v1966
        %2032 = vmatprep.subr.mxu0 %v1969
        %2033 = vmatpush1.msra.mxu0 %v1968
        %2034 = vmatprep.subr.mxu0 %v1971
        %2035 = vmatpush1.msra.mxu0 %v1970
        %2036 = vmatprep.subr.mxu0 %v1973
        %2037 = vmatpush1.msra.mxu0 %v1972
        %2038 = vmatprep.subr.mxu0 %v1975
        %2039 = vmatpush1.msra.mxu0 %v1974
        %2040 = vmatprep.subr.mxu0 %v1977
        %2041 = vmatpush1.msra.mxu0 %v1976
        %2042 = vmatprep.subr.mxu0 %v1979
        %2043 = vmatpush1.msra.mxu0 %v1978
        %2044 = vmatprep.subr.mxu0 %v1981
        %2045 = vmatpush1.msra.mxu0 %v1980
        %2046 = vmatprep.subr.mxu0 %v1983
        %2047 = vmatpush1.msra.mxu0 %v1982
        %2048 = vmatprep.subr.mxu0 %v1985
        %2049 = vmatpush1.msra.mxu0 %v1984
        %2050 = vmatprep.subr.mxu0 %v1987
        %2051 = vmatpush1.msra.mxu0 %v1986
        %2052 = vmatprep.subr.mxu0 %v1989
        %2053 = vmatpush1.msra.mxu0 %v1988
        %2054 = vmatprep.subr.mxu0 %v1991
        %2055 = vmatpush1.msra.mxu0 %v1990
        %2056 = vmatprep.subr.mxu0 %v1993
        %2057 = vmatpush1.msra.mxu0 %v1992
        %2058 = vmatprep.subr.mxu0 %v1995
        %2059 = vmatpush1.msra.mxu0 %v1994
        %2060 = vmatprep.subr.mxu0 %v1997
        %2061 = vmatpush1.msra.mxu0 %v1996
        %2062 = vmatprep.subr.mxu0 %v1999
        %2063 = vmatpush1.msra.mxu0 %v1998
        %2064 = vmatprep.subr.mxu0 %v2001
        %2065 = vmatpush1.msra.mxu0 %v2000
        %2066 = vmatprep.subr.mxu0 %v2003
        %2067 = vmatpush1.msra.mxu0 %v2002
        %2068 = vmatprep.subr.mxu0 %v2005
        %2069 = vmatpush1.msra.mxu0 %v2004
        %2070 = vmatprep.subr.mxu0 %v2007
        %2071 = vmatpush1.msra.mxu0 %v2006
        %2072 = vmatprep.subr.mxu0 %v2009
        %2073 = vmatpush1.msra.mxu0 %v2008
        %2074 = vmatprep.subr.mxu0 %v2011
        %2075 = vmatpush1.msra.mxu0 %v2010
        %2076 = vmatprep.subr.mxu0 %v2013
        %2077 = vmatpush1.msra.mxu0 %v2012
        %2078 = vmatprep.subr.mxu0 %v2015
        %2079 = vmatpush1.msra.mxu0 %v2014
        %2080 = vmatprep.subr.mxu0 %v2017
        %2081 = vmatpush1.msra.mxu0 %v2016
        %2082 = vmatprep.subr.mxu0 %v2019
        %2083 = vmatpush1.msra.mxu0 %v2018
        %2084 = vmatprep.subr.mxu0 %v2021
        %2085 = vmatpush1.msra.mxu0 %v2020
        %2086 = vmatprep.subr.mxu0 %v2023
        %2087 = vmatpush1.msra.mxu0 %v2022
        %2088 = vmatprep.subr.mxu0 %v2025
        %2089 = vmatpush1.msra.mxu0 %v2024
        %2090 = vmatprep.subr.mxu0 %v2027
        %2091 = vmatpush1.msra.mxu0 %v2026
        %2092 = vmatprep.subr.mxu0 %v2029
        %2093 = vmatpush1.msra.mxu0 %v2028
        %2094 = vmatprep.mubr.f32.mxu0 %v1813
        %2095 = vmatmul.mubr.f32.gmra.mrb[0].mxu0 %v1812
        %v2096 = vpop.f32.mrb[0].mxu0
        %v2097 = vadd.f32 0.0, %v2096
        %v2098 = vpop.f32.mrb[0].mxu0
        %v2099 = vadd.f32 0.0, %v2098
        %2100 = vmatprep.mubr.f32.mxu0 %v1815
        %2101 = vmatmul.mubr.f32.gmra.mrb[0].mxu0 %v1814
        %v2102 = vpop.f32.mrb[0].mxu0
        %v2103 = vadd.f32 0.0, %v2102
        %v2104 = vpop.f32.mrb[0].mxu0
        %v2105 = vadd.f32 0.0, %v2104
        %2106 = vmatprep.mubr.f32.mxu0 %v1817
        %2107 = vmatmul.mubr.f32.gmra.mrb[0].mxu0 %v1816
        %v2108 = vpop.f32.mrb[0].mxu0
        %v2109 = vadd.f32 0.0, %v2108
        %v2110 = vpop.f32.mrb[0].mxu0
        %v2111 = vadd.f32 0.0, %v2110
        %2112 = vdwg.mxu0
        %v2113 = vmax.f32 %v1949, %v2097
        %v2114 = vmax.f32 %v1951, %v2099
        %v2115 = vmax.f32 %v1955, %v2103
        %v2116 = vmax.f32 %v1957, %v2105
        %v2117 = vmax.f32 %v1961, %v2109
        %v2118 = vmax.f32 %v1963, %v2111
        %s2119 = scalar_lea.vmem %s5, 1024
        %v2120 = vld [vmem:[%s2119] sm:$0xff]
        %v2121 = vld [vmem:[%s2119 + $0x8] sm:$0xff]
        %v2122 = vld [vmem:[%s2119 + $0x10] sm:$0xff]
        %v2123 = vld [vmem:[%s2119 + $0x18] sm:$0xff]
        %v2124 = vld [vmem:[%s2119 + $0x20] sm:$0xff]
        %v2125 = vld [vmem:[%s2119 + $0x28] sm:$0xff]
        %v2126 = vld [vmem:[%s2119 + $0x30] sm:$0xff]
        %v2127 = vld [vmem:[%s2119 + $0x38] sm:$0xff]
        %v2128 = vld [vmem:[%s2119 + $0x40] sm:$0xff]
        %v2129 = vld [vmem:[%s2119 + $0x48] sm:$0xff]
        %v2130 = vld [vmem:[%s2119 + $0x50] sm:$0xff]
        %v2131 = vld [vmem:[%s2119 + $0x58] sm:$0xff]
        %v2132 = vld [vmem:[%s2119 + $0x60] sm:$0xff]
        %v2133 = vld [vmem:[%s2119 + $0x68] sm:$0xff]
        %v2134 = vld [vmem:[%s2119 + $0x70] sm:$0xff]
        %v2135 = vld [vmem:[%s2119 + $0x78] sm:$0xff]
        %v2136 = vld [vmem:[%s2119 + $0x80] sm:$0xff]
        %v2137 = vld [vmem:[%s2119 + $0x88] sm:$0xff]
        %v2138 = vld [vmem:[%s2119 + $0x90] sm:$0xff]
        %v2139 = vld [vmem:[%s2119 + $0x98] sm:$0xff]
        %v2140 = vld [vmem:[%s2119 + $0xa0] sm:$0xff]
        %v2141 = vld [vmem:[%s2119 + $0xa8] sm:$0xff]
        %v2142 = vld [vmem:[%s2119 + $0xb0] sm:$0xff]
        %v2143 = vld [vmem:[%s2119 + $0xb8] sm:$0xff]
        %v2144 = vld [vmem:[%s2119 + $0xc0] sm:$0xff]
        %v2145 = vld [vmem:[%s2119 + $0xc8] sm:$0xff]
        %v2146 = vld [vmem:[%s2119 + $0xd0] sm:$0xff]
        %v2147 = vld [vmem:[%s2119 + $0xd8] sm:$0xff]
        %v2148 = vld [vmem:[%s2119 + $0xe0] sm:$0xff]
        %v2149 = vld [vmem:[%s2119 + $0xe8] sm:$0xff]
        %v2150 = vld [vmem:[%s2119 + $0xf0] sm:$0xff]
        %v2151 = vld [vmem:[%s2119 + $0xf8] sm:$0xff]
        %v2152 = vld [vmem:[%s2119 + $0x100] sm:$0xff]
        %v2153 = vld [vmem:[%s2119 + $0x108] sm:$0xff]
        %v2154 = vld [vmem:[%s2119 + $0x110] sm:$0xff]
        %v2155 = vld [vmem:[%s2119 + $0x118] sm:$0xff]
        %v2156 = vld [vmem:[%s2119 + $0x120] sm:$0xff]
        %v2157 = vld [vmem:[%s2119 + $0x128] sm:$0xff]
        %v2158 = vld [vmem:[%s2119 + $0x130] sm:$0xff]
        %v2159 = vld [vmem:[%s2119 + $0x138] sm:$0xff]
        %v2160 = vld [vmem:[%s2119 + $0x140] sm:$0xff]
        %v2161 = vld [vmem:[%s2119 + $0x148] sm:$0xff]
        %v2162 = vld [vmem:[%s2119 + $0x150] sm:$0xff]
        %v2163 = vld [vmem:[%s2119 + $0x158] sm:$0xff]
        %v2164 = vld [vmem:[%s2119 + $0x160] sm:$0xff]
        %v2165 = vld [vmem:[%s2119 + $0x168] sm:$0xff]
        %v2166 = vld [vmem:[%s2119 + $0x170] sm:$0xff]
        %v2167 = vld [vmem:[%s2119 + $0x178] sm:$0xff]
        %v2168 = vld [vmem:[%s2119 + $0x180] sm:$0xff]
        %v2169 = vld [vmem:[%s2119 + $0x188] sm:$0xff]
        %v2170 = vld [vmem:[%s2119 + $0x190] sm:$0xff]
        %v2171 = vld [vmem:[%s2119 + $0x198] sm:$0xff]
        %v2172 = vld [vmem:[%s2119 + $0x1a0] sm:$0xff]
        %v2173 = vld [vmem:[%s2119 + $0x1a8] sm:$0xff]
        %v2174 = vld [vmem:[%s2119 + $0x1b0] sm:$0xff]
        %v2175 = vld [vmem:[%s2119 + $0x1b8] sm:$0xff]
        %v2176 = vld [vmem:[%s2119 + $0x1c0] sm:$0xff]
        %v2177 = vld [vmem:[%s2119 + $0x1c8] sm:$0xff]
        %v2178 = vld [vmem:[%s2119 + $0x1d0] sm:$0xff]
        %v2179 = vld [vmem:[%s2119 + $0x1d8] sm:$0xff]
        %v2180 = vld [vmem:[%s2119 + $0x1e0] sm:$0xff]
        %v2181 = vld [vmem:[%s2119 + $0x1e8] sm:$0xff]
        %v2182 = vld [vmem:[%s2119 + $0x1f0] sm:$0xff]
        %v2183 = vld [vmem:[%s2119 + $0x1f8] sm:$0xff]
        %2184 = vmatprep.subr.mxu0 %v2121
        %2185 = vmatpush1.msra.mxu0 %v2120
        %2186 = vmatprep.subr.mxu0 %v2123
        %2187 = vmatpush1.msra.mxu0 %v2122
        %2188 = vmatprep.subr.mxu0 %v2125
        %2189 = vmatpush1.msra.mxu0 %v2124
        %2190 = vmatprep.subr.mxu0 %v2127
        %2191 = vmatpush1.msra.mxu0 %v2126
        %2192 = vmatprep.subr.mxu0 %v2129
        %2193 = vmatpush1.msra.mxu0 %v2128
        %2194 = vmatprep.subr.mxu0 %v2131
        %2195 = vmatpush1.msra.mxu0 %v2130
        %2196 = vmatprep.subr.mxu0 %v2133
        %2197 = vmatpush1.msra.mxu0 %v2132
        %2198 = vmatprep.subr.mxu0 %v2135
        %2199 = vmatpush1.msra.mxu0 %v2134
        %2200 = vmatprep.subr.mxu0 %v2137
        %2201 = vmatpush1.msra.mxu0 %v2136
        %2202 = vmatprep.subr.mxu0 %v2139
        %2203 = vmatpush1.msra.mxu0 %v2138
        %2204 = vmatprep.subr.mxu0 %v2141
        %2205 = vmatpush1.msra.mxu0 %v2140
        %2206 = vmatprep.subr.mxu0 %v2143
        %2207 = vmatpush1.msra.mxu0 %v2142
        %2208 = vmatprep.subr.mxu0 %v2145
        %2209 = vmatpush1.msra.mxu0 %v2144
        %2210 = vmatprep.subr.mxu0 %v2147
        %2211 = vmatpush1.msra.mxu0 %v2146
        %2212 = vmatprep.subr.mxu0 %v2149
        %2213 = vmatpush1.msra.mxu0 %v2148
        %2214 = vmatprep.subr.mxu0 %v2151
        %2215 = vmatpush1.msra.mxu0 %v2150
        %2216 = vmatprep.subr.mxu0 %v2153
        %2217 = vmatpush1.msra.mxu0 %v2152
        %2218 = vmatprep.subr.mxu0 %v2155
        %2219 = vmatpush1.msra.mxu0 %v2154
        %2220 = vmatprep.subr.mxu0 %v2157
        %2221 = vmatpush1.msra.mxu0 %v2156
        %2222 = vmatprep.subr.mxu0 %v2159
        %2223 = vmatpush1.msra.mxu0 %v2158
        %2224 = vmatprep.subr.mxu0 %v2161
        %2225 = vmatpush1.msra.mxu0 %v2160
        %2226 = vmatprep.subr.mxu0 %v2163
        %2227 = vmatpush1.msra.mxu0 %v2162
        %2228 = vmatprep.subr.mxu0 %v2165
        %2229 = vmatpush1.msra.mxu0 %v2164
        %2230 = vmatprep.subr.mxu0 %v2167
        %2231 = vmatpush1.msra.mxu0 %v2166
        %2232 = vmatprep.subr.mxu0 %v2169
        %2233 = vmatpush1.msra.mxu0 %v2168
        %2234 = vmatprep.subr.mxu0 %v2171
        %2235 = vmatpush1.msra.mxu0 %v2170
        %2236 = vmatprep.subr.mxu0 %v2173
        %2237 = vmatpush1.msra.mxu0 %v2172
        %2238 = vmatprep.subr.mxu0 %v2175
        %2239 = vmatpush1.msra.mxu0 %v2174
        %2240 = vmatprep.subr.mxu0 %v2177
        %2241 = vmatpush1.msra.mxu0 %v2176
        %2242 = vmatprep.subr.mxu0 %v2179
        %2243 = vmatpush1.msra.mxu0 %v2178
        %2244 = vmatprep.subr.mxu0 %v2181
        %2245 = vmatpush1.msra.mxu0 %v2180
        %2246 = vmatprep.subr.mxu0 %v2183
        %2247 = vmatpush1.msra.mxu0 %v2182
        %2248 = vmatprep.mubr.f32.mxu0 %v1813
        %2249 = vmatmul.mubr.f32.gmra.mrb[0].mxu0 %v1812
        %v2250 = vpop.f32.mrb[0].mxu0
        %v2251 = vadd.f32 0.0, %v2250
        %v2252 = vpop.f32.mrb[0].mxu0
        %v2253 = vadd.f32 0.0, %v2252
        %2254 = vmatprep.mubr.f32.mxu0 %v1815
        %2255 = vmatmul.mubr.f32.gmra.mrb[0].mxu0 %v1814
        %v2256 = vpop.f32.mrb[0].mxu0
        %v2257 = vadd.f32 0.0, %v2256
        %v2258 = vpop.f32.mrb[0].mxu0
        %v2259 = vadd.f32 0.0, %v2258
        %2260 = vmatprep.mubr.f32.mxu0 %v1817
        %2261 = vmatmul.mubr.f32.gmra.mrb[0].mxu0 %v1816
        %v2262 = vpop.f32.mrb[0].mxu0
        %v2263 = vadd.f32 0.0, %v2262
        %v2264 = vpop.f32.mrb[0].mxu0
        %v2265 = vadd.f32 0.0, %v2264
        %2266 = vdwg.mxu0
        %v2267 = vmax.f32 %v2113, %v2251
        %v2268 = vmax.f32 %v2114, %v2253
        %v2269 = vmax.f32 %v2115, %v2257
        %v2270 = vmax.f32 %v2116, %v2259
        %v2271 = vmax.f32 %v2117, %v2263
        %v2272 = vmax.f32 %v2118, %v2265
        %2273 = vst [vmem:[#allocation2] sm:$0xff] %v2267
        %vm2274 = vcmask 195584
        %2275 = vst.msk [vmem:[#allocation2 + $0x8] sm:$0xff] %vm2274, %v2268
        %2276 = vst [vmem:[#allocation2 + $0x10] sm:$0xff] %v2269
        %2277 = vst.msk [vmem:[#allocation2 + $0x18] sm:$0xff] %vm2274, %v2270
        %2278 = vst [vmem:[#allocation2 + $0x20] sm:$0x7] %v2271
        %vm2279 = vcmask 190464
        %2280 = vst.msk [vmem:[#allocation2 + $0x28] sm:$0x7] %vm2279, %v2272
        %v2281 = vld [vmem:[#allocation2] sm:$0xff]
        %v2282 = vld [vmem:[#allocation2 + $0x8] sm:$0xff]
        %v2283 = vld [vmem:[#allocation2 + $0x10] sm:$0x7f]
        %v2284 = vld [vmem:[#allocation2 + $0x18] sm:$0x7f]
        %v2285 = vld [vmem:[#allocation12] sm:$0xff]
        %v2286 = vld [vmem:[#allocation12 + $0x8] sm:$0xff]
        %v2287 = vld [vmem:[#allocation12 + $0x10] sm:$0xff]
        %v2288 = vld [vmem:[#allocation12 + $0x18] sm:$0xff]
        %v2289 = vld [vmem:[#allocation12 + $0x20] sm:$0xff]
        %v2290 = vld [vmem:[#allocation12 + $0x28] sm:$0xff]
        %v2291 = vld [vmem:[#allocation12 + $0x30] sm:$0xff]
        %v2292 = vld [vmem:[#allocation12 + $0x38] sm:$0xff]
        %v2293 = vld [vmem:[#allocation12 + $0x40] sm:$0xff]
        %v2294 = vld [vmem:[#allocation12 + $0x48] sm:$0xff]
        %v2295 = vld [vmem:[#allocation12 + $0x50] sm:$0xff]
        %v2296 = vld [vmem:[#allocation12 + $0x58] sm:$0xff]
        %v2297 = vld [vmem:[#allocation12 + $0x60] sm:$0xff]
        %v2298 = vld [vmem:[#allocation12 + $0x68] sm:$0xff]
        %v2299 = vld [vmem:[#allocation12 + $0x70] sm:$0xff]
        %v2300 = vld [vmem:[#allocation12 + $0x78] sm:$0xff]
        %v2301 = vld [vmem:[#allocation12 + $0x80] sm:$0xff]
        %v2302 = vld [vmem:[#allocation12 + $0x88] sm:$0xff]
        %v2303 = vld [vmem:[#allocation12 + $0x90] sm:$0xff]
        %v2304 = vld [vmem:[#allocation12 + $0x98] sm:$0xff]
        %v2305 = vld [vmem:[#allocation12 + $0xa0] sm:$0xff]
        %v2306 = vld [vmem:[#allocation12 + $0xa8] sm:$0xff]
        %v2307 = vld [vmem:[#allocation12 + $0xb0] sm:$0xff]
        %v2308 = vld [vmem:[#allocation12 + $0xb8] sm:$0xff]
        %v2309 = vld [vmem:[#allocation12 + $0xc0] sm:$0xff]
        %v2310 = vld [vmem:[#allocation12 + $0xc8] sm:$0xff]
        %v2311 = vld [vmem:[#allocation12 + $0xd0] sm:$0xff]
        %v2312 = vld [vmem:[#allocation12 + $0xd8] sm:$0xff]
        %v2313 = vld [vmem:[#allocation12 + $0xe0] sm:$0xff]
        %v2314 = vld [vmem:[#allocation12 + $0xe8] sm:$0xff]
        %v2315 = vld [vmem:[#allocation12 + $0xf0] sm:$0xff]
        %v2316 = vld [vmem:[#allocation12 + $0xf8] sm:$0xff]
        %v2317 = vld [vmem:[#allocation12 + $0x100] sm:$0xff]
        %v2318 = vld [vmem:[#allocation12 + $0x108] sm:$0xff]
        %v2319 = vld [vmem:[#allocation12 + $0x110] sm:$0xff]
        %v2320 = vld [vmem:[#allocation12 + $0x118] sm:$0xff]
        %v2321 = vld [vmem:[#allocation12 + $0x120] sm:$0xff]
        %v2322 = vld [vmem:[#allocation12 + $0x128] sm:$0xff]
        %v2323 = vld [vmem:[#allocation2] sm:$0xfe]
        %v2324 = vld [vmem:[#allocation2 + $0x8] sm:$0xfe]
        %v2325 = vld [vmem:[#allocation2 + $0x10] sm:$0xff]
        %v2326 = vld [vmem:[#allocation2 + $0x18] sm:$0xff]
        %s2327 = scalar_lea.vmem [#allocation12], 304
        %v2328 = vld [vmem:[%s2327] sm:$0xff]
        %v2329 = vld [vmem:[%s2327 + $0x8] sm:$0xff]
        %v2330 = vld [vmem:[%s2327 + $0x10] sm:$0xff]
        %v2331 = vld [vmem:[%s2327 + $0x18] sm:$0xff]
        %v2332 = vld [vmem:[%s2327 + $0x20] sm:$0xff]
        %v2333 = vld [vmem:[%s2327 + $0x28] sm:$0xff]
        %v2334 = vld [vmem:[%s2327 + $0x30] sm:$0xff]
        %v2335 = vld [vmem:[%s2327 + $0x38] sm:$0xff]
        %v2336 = vld [vmem:[%s2327 + $0x40] sm:$0xff]
        %v2337 = vld [vmem:[%s2327 + $0x48] sm:$0xff]
        %v2338 = vld [vmem:[%s2327 + $0x50] sm:$0xff]
        %v2339 = vld [vmem:[%s2327 + $0x58] sm:$0xff]
        %v2340 = vld [vmem:[%s2327 + $0x60] sm:$0xff]
        %v2341 = vld [vmem:[%s2327 + $0x68] sm:$0xff]
        %v2342 = vld [vmem:[%s2327 + $0x70] sm:$0xff]
        %v2343 = vld [vmem:[%s2327 + $0x78] sm:$0xff]
        %v2344 = vld [vmem:[%s2327 + $0x80] sm:$0xff]
        %v2345 = vld [vmem:[%s2327 + $0x88] sm:$0xff]
        %v2346 = vld [vmem:[%s2327 + $0x90] sm:$0xff]
        %v2347 = vld [vmem:[%s2327 + $0x98] sm:$0xff]
        %v2348 = vld [vmem:[%s2327 + $0xa0] sm:$0xff]
        %v2349 = vld [vmem:[%s2327 + $0xa8] sm:$0xff]
        %v2350 = vld [vmem:[%s2327 + $0xb0] sm:$0xff]
        %v2351 = vld [vmem:[%s2327 + $0xb8] sm:$0xff]
        %v2352 = vld [vmem:[%s2327 + $0xc0] sm:$0xff]
        %v2353 = vld [vmem:[%s2327 + $0xc8] sm:$0xff]
        %v2354 = vld [vmem:[%s2327 + $0xd0] sm:$0xff]
        %v2355 = vld [vmem:[%s2327 + $0xd8] sm:$0xff]
        %v2356 = vld [vmem:[%s2327 + $0xe0] sm:$0xff]
        %v2357 = vld [vmem:[%s2327 + $0xe8] sm:$0xff]
        %v2358 = vld [vmem:[%s2327 + $0xf0] sm:$0xff]
        %v2359 = vld [vmem:[%s2327 + $0xf8] sm:$0xff]
        %v2360 = vld [vmem:[%s2327 + $0x100] sm:$0xff]
        %v2361 = vld [vmem:[%s2327 + $0x108] sm:$0xff]
        %v2362 = vld [vmem:[%s2327 + $0x110] sm:$0xff]
        %v2363 = vld [vmem:[%s2327 + $0x118] sm:$0xff]
        %v2364 = vld [vmem:[%s2327 + $0x120] sm:$0xff]
        %v2365 = vld [vmem:[%s2327 + $0x128] sm:$0xff]
        %vm2370 = vcmask 1046528
        %v2371 = vrot.slane %v2323, 1
        %v2372 = vrot.slane %v2325, 1
        %v2373 = vsel %vm2370, %v2371, %v2372
        %v2374 = vrot.slane %v2324, 1
        %v2375 = vrot.slane %v2326, 1
        %v2376 = vsel %vm2370, %v2374, %v2375
        %v2379 = vsel %vm2274, %v2376, 0
        %v2381 = vsel %vm2274, %v2375, 0
        %2383 = vmatprep.subr.mxu0 %v2329
        %2384 = vmatpush1.msra.mxu0 %v2328
        %2385 = vmatprep.subr.mxu0 %v2331
        %2386 = vmatpush1.msra.mxu0 %v2330
        %2387 = vmatprep.subr.mxu0 %v2333
        %2388 = vmatpush1.msra.mxu0 %v2332
        %2389 = vmatprep.subr.mxu0 %v2335
        %2390 = vmatpush1.msra.mxu0 %v2334
        %2391 = vmatprep.subr.mxu0 %v2337
        %2392 = vmatpush1.msra.mxu0 %v2336
        %2393 = vmatprep.subr.mxu0 %v2339
        %2394 = vmatpush1.msra.mxu0 %v2338
        %2395 = vmatprep.subr.mxu0 %v2341
        %2396 = vmatpush1.msra.mxu0 %v2340
        %2397 = vmatprep.subr.mxu0 %v2343
        %2398 = vmatpush1.msra.mxu0 %v2342
        %2399 = vmatprep.subr.mxu0 %v2345
        %2400 = vmatpush1.msra.mxu0 %v2344
        %2401 = vmatprep.subr.mxu0 %v2347
        %2402 = vmatpush1.msra.mxu0 %v2346
        %2403 = vmatprep.subr.mxu0 %v2349
        %2404 = vmatpush1.msra.mxu0 %v2348
        %2405 = vmatprep.subr.mxu0 %v2351
        %2406 = vmatpush1.msra.mxu0 %v2350
        %2407 = vmatprep.subr.mxu0 %v2353
        %2408 = vmatpush1.msra.mxu0 %v2352
        %2409 = vmatprep.subr.mxu0 %v2355
        %2410 = vmatpush1.msra.mxu0 %v2354
        %2411 = vmatprep.subr.mxu0 %v2357
        %2412 = vmatpush1.msra.mxu0 %v2356
        %2413 = vmatprep.subr.mxu0 %v2359
        %2414 = vmatpush1.msra.mxu0 %v2358
        %2415 = vmatprep.subr.mxu0 %v2361
        %2416 = vmatpush1.msra.mxu0 %v2360
        %2417 = vmatprep.subr.mxu0 %v2363
        %2418 = vmatpush1.msra.mxu0 %v2362
        %2419 = vmatprep.subr.mxu0 %v2365
        %2420 = vmatpush1.msra.mxu0 %v2364
        %2421 = vmatprep.subr.mxu0 0.0
        %2422 = vmatpush1.msra.mxu0 0.0
        %2423 = vmatprep.subr.mxu0 0.0
        %2424 = vmatpush1.msra.mxu0 0.0
        %2425 = vmatprep.subr.mxu0 0.0
        %2426 = vmatpush1.msra.mxu0 0.0
        %2427 = vmatprep.subr.mxu0 0.0
        %2428 = vmatpush1.msra.mxu0 0.0
        %2429 = vmatprep.subr.mxu0 0.0
        %2430 = vmatpush1.msra.mxu0 0.0
        %2431 = vmatprep.subr.mxu0 0.0
        %2432 = vmatpush1.msra.mxu0 0.0
        %2433 = vmatprep.subr.mxu0 0.0
        %2434 = vmatpush1.msra.mxu0 0.0
        %2435 = vmatprep.subr.mxu0 0.0
        %2436 = vmatpush1.msra.mxu0 0.0
        %2437 = vmatprep.subr.mxu0 0.0
        %2438 = vmatpush1.msra.mxu0 0.0
        %2439 = vmatprep.subr.mxu0 0.0
        %2440 = vmatpush1.msra.mxu0 0.0
        %2441 = vmatprep.subr.mxu0 0.0
        %2442 = vmatpush1.msra.mxu0 0.0
        %2443 = vmatprep.subr.mxu0 0.0
        %2444 = vmatpush1.msra.mxu0 0.0
        %2445 = vmatprep.subr.mxu0 0.0
        %2446 = vmatpush1.msra.mxu0 0.0
        %2447 = vmatprep.mubr.f32.mxu0 %v2379
        %2448 = vmatmul.mubr.f32.gmra.mrb[0].mxu0 %v2373
        %v2449 = vpop.f32.mrb[0].mxu0
        %v2450 = vadd.f32 0.0, %v2449
        %v2451 = vpop.f32.mrb[0].mxu0
        %v2452 = vadd.f32 0.0, %v2451
        %2453 = vmatprep.mubr.f32.mxu0 %v2381
        %2454 = vmatmul.mubr.f32.gmra.mrb[0].mxu0 %v2372
        %v2455 = vpop.f32.mrb[0].mxu0
        %v2456 = vadd.f32 0.0, %v2455
        %v2457 = vpop.f32.mrb[0].mxu0
        %v2458 = vadd.f32 0.0, %v2457
        %2459 = vdwg.mxu0
        %v2461 = vsel %vm2274, %v2282, 0
        %v2464 = vsel %vm2274, %v2284, 0
        %2466 = vmatprep.subr.mxu0 %v2286
        %2467 = vmatpush1.msra.mxu0 %v2285
        %2468 = vmatprep.subr.mxu0 %v2288
        %2469 = vmatpush1.msra.mxu0 %v2287
        %2470 = vmatprep.subr.mxu0 %v2290
        %2471 = vmatpush1.msra.mxu0 %v2289
        %2472 = vmatprep.subr.mxu0 %v2292
        %2473 = vmatpush1.msra.mxu0 %v2291
        %2474 = vmatprep.subr.mxu0 %v2294
        %2475 = vmatpush1.msra.mxu0 %v2293
        %2476 = vmatprep.subr.mxu0 %v2296
        %2477 = vmatpush1.msra.mxu0 %v2295
        %2478 = vmatprep.subr.mxu0 %v2298
        %2479 = vmatpush1.msra.mxu0 %v2297
        %2480 = vmatprep.subr.mxu0 %v2300
        %2481 = vmatpush1.msra.mxu0 %v2299
        %2482 = vmatprep.subr.mxu0 %v2302
        %2483 = vmatpush1.msra.mxu0 %v2301
        %2484 = vmatprep.subr.mxu0 %v2304
        %2485 = vmatpush1.msra.mxu0 %v2303
        %2486 = vmatprep.subr.mxu0 %v2306
        %2487 = vmatpush1.msra.mxu0 %v2305
        %2488 = vmatprep.subr.mxu0 %v2308
        %2489 = vmatpush1.msra.mxu0 %v2307
        %2490 = vmatprep.subr.mxu0 %v2310
        %2491 = vmatpush1.msra.mxu0 %v2309
        %2492 = vmatprep.subr.mxu0 %v2312
        %2493 = vmatpush1.msra.mxu0 %v2311
        %2494 = vmatprep.subr.mxu0 %v2314
        %2495 = vmatpush1.msra.mxu0 %v2313
        %2496 = vmatprep.subr.mxu0 %v2316
        %2497 = vmatpush1.msra.mxu0 %v2315
        %2498 = vmatprep.subr.mxu0 %v2318
        %2499 = vmatpush1.msra.mxu0 %v2317
        %2500 = vmatprep.subr.mxu0 %v2320
        %2501 = vmatpush1.msra.mxu0 %v2319
        %2502 = vmatprep.subr.mxu0 %v2322
        %2503 = vmatpush1.msra.mxu0 %v2321
        %2504 = vmatprep.subr.mxu0 0.0
        %2505 = vmatpush1.msra.mxu0 0.0
        %2506 = vmatprep.subr.mxu0 0.0
        %2507 = vmatpush1.msra.mxu0 0.0
        %2508 = vmatprep.subr.mxu0 0.0
        %2509 = vmatpush1.msra.mxu0 0.0
        %2510 = vmatprep.subr.mxu0 0.0
        %2511 = vmatpush1.msra.mxu0 0.0
        %2512 = vmatprep.subr.mxu0 0.0
        %2513 = vmatpush1.msra.mxu0 0.0
        %2514 = vmatprep.subr.mxu0 0.0
        %2515 = vmatpush1.msra.mxu0 0.0
        %2516 = vmatprep.subr.mxu0 0.0
        %2517 = vmatpush1.msra.mxu0 0.0
        %2518 = vmatprep.subr.mxu0 0.0
        %2519 = vmatpush1.msra.mxu0 0.0
        %2520 = vmatprep.subr.mxu0 0.0
        %2521 = vmatpush1.msra.mxu0 0.0
        %2522 = vmatprep.subr.mxu0 0.0
        %2523 = vmatpush1.msra.mxu0 0.0
        %2524 = vmatprep.subr.mxu0 0.0
        %2525 = vmatpush1.msra.mxu0 0.0
        %2526 = vmatprep.subr.mxu0 0.0
        %2527 = vmatpush1.msra.mxu0 0.0
        %2528 = vmatprep.subr.mxu0 0.0
        %2529 = vmatpush1.msra.mxu0 0.0
        %2530 = vmatprep.mubr.f32.mxu0 %v2461
        %2531 = vmatmul.mubr.f32.gmra.mrb[0].mxu0 %v2281
        %v2532 = vpop.f32.mrb[0].mxu0
        %v2533 = vadd.f32 %v2450, %v2532
        %v2534 = vpop.f32.mrb[0].mxu0
        %v2535 = vadd.f32 %v2452, %v2534
        %2536 = vmatprep.mubr.f32.mxu0 %v2464
        %2537 = vmatmul.mubr.f32.gmra.mrb[0].mxu0 %v2283
        %v2538 = vpop.f32.mrb[0].mxu0
        %v2539 = vadd.f32 %v2456, %v2538
        %v2540 = vpop.f32.mrb[0].mxu0
        %v2541 = vadd.f32 %v2458, %v2540
        %2542 = vdwg.mxu0
        %v2543 = vld [vmem:[#allocation2] sm:$0xfc]
        %v2544 = vld [vmem:[#allocation2 + $0x8] sm:$0xfc]
        %v2545 = vld [vmem:[#allocation2 + $0x10] sm:$0xff]
        %v2546 = vld [vmem:[#allocation2 + $0x18] sm:$0xff]
        %v2547 = vld [vmem:[#allocation2 + $0x20] sm:$0x1]
        %v2548 = vld [vmem:[#allocation2 + $0x28] sm:$0x1]
        %s2549 = scalar_lea.vmem [#allocation12], 608
        %v2550 = vld [vmem:[%s2549] sm:$0xff]
        %v2551 = vld [vmem:[%s2549 + $0x8] sm:$0xff]
        %v2552 = vld [vmem:[%s2549 + $0x10] sm:$0xff]
        %v2553 = vld [vmem:[%s2549 + $0x18] sm:$0xff]
        %v2554 = vld [vmem:[%s2549 + $0x20] sm:$0xff]
        %v2555 = vld [vmem:[%s2549 + $0x28] sm:$0xff]
        %v2556 = vld [vmem:[%s2549 + $0x30] sm:$0xff]
        %v2557 = vld [vmem:[%s2549 + $0x38] sm:$0xff]
        %v2558 = vld [vmem:[%s2549 + $0x40] sm:$0xff]
        %v2559 = vld [vmem:[%s2549 + $0x48] sm:$0xff]
        %v2560 = vld [vmem:[%s2549 + $0x50] sm:$0xff]
        %v2561 = vld [vmem:[%s2549 + $0x58] sm:$0xff]
        %v2562 = vld [vmem:[%s2549 + $0x60] sm:$0xff]
        %v2563 = vld [vmem:[%s2549 + $0x68] sm:$0xff]
        %v2564 = vld [vmem:[%s2549 + $0x70] sm:$0xff]
        %v2565 = vld [vmem:[%s2549 + $0x78] sm:$0xff]
        %v2566 = vld [vmem:[%s2549 + $0x80] sm:$0xff]
        %v2567 = vld [vmem:[%s2549 + $0x88] sm:$0xff]
        %v2568 = vld [vmem:[%s2549 + $0x90] sm:$0xff]
        %v2569 = vld [vmem:[%s2549 + $0x98] sm:$0xff]
        %v2570 = vld [vmem:[%s2549 + $0xa0] sm:$0xff]
        %v2571 = vld [vmem:[%s2549 + $0xa8] sm:$0xff]
        %v2572 = vld [vmem:[%s2549 + $0xb0] sm:$0xff]
        %v2573 = vld [vmem:[%s2549 + $0xb8] sm:$0xff]
        %v2574 = vld [vmem:[%s2549 + $0xc0] sm:$0xff]
        %v2575 = vld [vmem:[%s2549 + $0xc8] sm:$0xff]
        %v2576 = vld [vmem:[%s2549 + $0xd0] sm:$0xff]
        %v2577 = vld [vmem:[%s2549 + $0xd8] sm:$0xff]
        %v2578 = vld [vmem:[%s2549 + $0xe0] sm:$0xff]
        %v2579 = vld [vmem:[%s2549 + $0xe8] sm:$0xff]
        %v2580 = vld [vmem:[%s2549 + $0xf0] sm:$0xff]
        %v2581 = vld [vmem:[%s2549 + $0xf8] sm:$0xff]
        %v2582 = vld [vmem:[%s2549 + $0x100] sm:$0xff]
        %v2583 = vld [vmem:[%s2549 + $0x108] sm:$0xff]
        %v2584 = vld [vmem:[%s2549 + $0x110] sm:$0xff]
        %v2585 = vld [vmem:[%s2549 + $0x118] sm:$0xff]
        %v2586 = vld [vmem:[%s2549 + $0x120] sm:$0xff]
        %v2587 = vld [vmem:[%s2549 + $0x128] sm:$0xff]
        %vm2594 = vcmask 1045504
        %v2595 = vrot.slane %v2543, 2
        %v2596 = vrot.slane %v2545, 2
        %v2597 = vsel %vm2594, %v2595, %v2596
        %v2598 = vrot.slane %v2544, 2
        %v2599 = vrot.slane %v2546, 2
        %v2600 = vsel %vm2594, %v2598, %v2599
        %v2601 = vrot.slane %v2547, 2
        %v2602 = vsel %vm2594, %v2596, %v2601
        %v2603 = vrot.slane %v2548, 2
        %v2604 = vsel %vm2594, %v2599, %v2603
        %v2607 = vsel %vm2274, %v2600, 0
        %v2609 = vsel %vm2274, %v2604, 0
        %2611 = vmatprep.subr.mxu0 %v2551
        %2612 = vmatpush1.msra.mxu0 %v2550
        %2613 = vmatprep.subr.mxu0 %v2553
        %2614 = vmatpush1.msra.mxu0 %v2552
        %2615 = vmatprep.subr.mxu0 %v2555
        %2616 = vmatpush1.msra.mxu0 %v2554
        %2617 = vmatprep.subr.mxu0 %v2557
        %2618 = vmatpush1.msra.mxu0 %v2556
        %2619 = vmatprep.subr.mxu0 %v2559
        %2620 = vmatpush1.msra.mxu0 %v2558
        %2621 = vmatprep.subr.mxu0 %v2561
        %2622 = vmatpush1.msra.mxu0 %v2560
        %2623 = vmatprep.subr.mxu0 %v2563
        %2624 = vmatpush1.msra.mxu0 %v2562
        %2625 = vmatprep.subr.mxu0 %v2565
        %2626 = vmatpush1.msra.mxu0 %v2564
        %2627 = vmatprep.subr.mxu0 %v2567
        %2628 = vmatpush1.msra.mxu0 %v2566
        %2629 = vmatprep.subr.mxu0 %v2569
        %2630 = vmatpush1.msra.mxu0 %v2568
        %2631 = vmatprep.subr.mxu0 %v2571
        %2632 = vmatpush1.msra.mxu0 %v2570
        %2633 = vmatprep.subr.mxu0 %v2573
        %2634 = vmatpush1.msra.mxu0 %v2572
        %2635 = vmatprep.subr.mxu0 %v2575
        %2636 = vmatpush1.msra.mxu0 %v2574
        %2637 = vmatprep.subr.mxu0 %v2577
        %2638 = vmatpush1.msra.mxu0 %v2576
        %2639 = vmatprep.subr.mxu0 %v2579
        %2640 = vmatpush1.msra.mxu0 %v2578
        %2641 = vmatprep.subr.mxu0 %v2581
        %2642 = vmatpush1.msra.mxu0 %v2580
        %2643 = vmatprep.subr.mxu0 %v2583
        %2644 = vmatpush1.msra.mxu0 %v2582
        %2645 = vmatprep.subr.mxu0 %v2585
        %2646 = vmatpush1.msra.mxu0 %v2584
        %2647 = vmatprep.subr.mxu0 %v2587
        %2648 = vmatpush1.msra.mxu0 %v2586
        %2649 = vmatprep.subr.mxu0 0.0
        %2650 = vmatpush1.msra.mxu0 0.0
        %2651 = vmatprep.subr.mxu0 0.0
        %2652 = vmatpush1.msra.mxu0 0.0
        %2653 = vmatprep.subr.mxu0 0.0
        %2654 = vmatpush1.msra.mxu0 0.0
        %2655 = vmatprep.subr.mxu0 0.0
        %2656 = vmatpush1.msra.mxu0 0.0
        %2657 = vmatprep.subr.mxu0 0.0
        %2658 = vmatpush1.msra.mxu0 0.0
        %2659 = vmatprep.subr.mxu0 0.0
        %2660 = vmatpush1.msra.mxu0 0.0
        %2661 = vmatprep.subr.mxu0 0.0
        %2662 = vmatpush1.msra.mxu0 0.0
        %2663 = vmatprep.subr.mxu0 0.0
        %2664 = vmatpush1.msra.mxu0 0.0
        %2665 = vmatprep.subr.mxu0 0.0
        %2666 = vmatpush1.msra.mxu0 0.0
        %2667 = vmatprep.subr.mxu0 0.0
        %2668 = vmatpush1.msra.mxu0 0.0
        %2669 = vmatprep.subr.mxu0 0.0
        %2670 = vmatpush1.msra.mxu0 0.0
        %2671 = vmatprep.subr.mxu0 0.0
        %2672 = vmatpush1.msra.mxu0 0.0
        %2673 = vmatprep.subr.mxu0 0.0
        %2674 = vmatpush1.msra.mxu0 0.0
        %2675 = vmatprep.mubr.f32.mxu0 %v2607
        %2676 = vmatmul.mubr.f32.gmra.mrb[0].mxu0 %v2597
        %v2677 = vpop.f32.mrb[0].mxu0
        %v2678 = vadd.f32 0.0, %v2677
        %v2679 = vpop.f32.mrb[0].mxu0
        %v2680 = vadd.f32 0.0, %v2679
        %2681 = vmatprep.mubr.f32.mxu0 %v2609
        %2682 = vmatmul.mubr.f32.gmra.mrb[0].mxu0 %v2602
        %v2683 = vpop.f32.mrb[0].mxu0
        %v2684 = vadd.f32 0.0, %v2683
        %v2685 = vpop.f32.mrb[0].mxu0
        %v2686 = vadd.f32 0.0, %v2685
        %2687 = vdwg.mxu0
        %v2688 = vadd.f32 %v2533, %v2678
        %v2689 = vadd.f32 %v2535, %v2680
        %v2690 = vadd.f32 %v2539, %v2684
        %v2691 = vadd.f32 %v2541, %v2686
        %v2692 = vld [vmem:[#allocation2] sm:$0xf8]
        %v2693 = vld [vmem:[#allocation2 + $0x8] sm:$0xf8]
        %v2694 = vld [vmem:[#allocation2 + $0x20] sm:$0x3]
        %v2695 = vld [vmem:[#allocation2 + $0x28] sm:$0x3]
        %s2696 = scalar_lea.vmem [#allocation12], 912
        %v2697 = vld [vmem:[%s2696] sm:$0xff]
        %v2698 = vld [vmem:[%s2696 + $0x8] sm:$0xff]
        %v2699 = vld [vmem:[%s2696 + $0x10] sm:$0xff]
        %v2700 = vld [vmem:[%s2696 + $0x18] sm:$0xff]
        %v2701 = vld [vmem:[%s2696 + $0x20] sm:$0xff]
        %v2702 = vld [vmem:[%s2696 + $0x28] sm:$0xff]
        %v2703 = vld [vmem:[%s2696 + $0x30] sm:$0xff]
        %v2704 = vld [vmem:[%s2696 + $0x38] sm:$0xff]
        %v2705 = vld [vmem:[%s2696 + $0x40] sm:$0xff]
        %v2706 = vld [vmem:[%s2696 + $0x48] sm:$0xff]
        %v2707 = vld [vmem:[%s2696 + $0x50] sm:$0xff]
        %v2708 = vld [vmem:[%s2696 + $0x58] sm:$0xff]
        %v2709 = vld [vmem:[%s2696 + $0x60] sm:$0xff]
        %v2710 = vld [vmem:[%s2696 + $0x68] sm:$0xff]
        %v2711 = vld [vmem:[%s2696 + $0x70] sm:$0xff]
        %v2712 = vld [vmem:[%s2696 + $0x78] sm:$0xff]
        %v2713 = vld [vmem:[%s2696 + $0x80] sm:$0xff]
        %v2714 = vld [vmem:[%s2696 + $0x88] sm:$0xff]
        %v2715 = vld [vmem:[%s2696 + $0x90] sm:$0xff]
        %v2716 = vld [vmem:[%s2696 + $0x98] sm:$0xff]
        %v2717 = vld [vmem:[%s2696 + $0xa0] sm:$0xff]
        %v2718 = vld [vmem:[%s2696 + $0xa8] sm:$0xff]
        %v2719 = vld [vmem:[%s2696 + $0xb0] sm:$0xff]
        %v2720 = vld [vmem:[%s2696 + $0xb8] sm:$0xff]
        %v2721 = vld [vmem:[%s2696 + $0xc0] sm:$0xff]
        %v2722 = vld [vmem:[%s2696 + $0xc8] sm:$0xff]
        %v2723 = vld [vmem:[%s2696 + $0xd0] sm:$0xff]
        %v2724 = vld [vmem:[%s2696 + $0xd8] sm:$0xff]
        %v2725 = vld [vmem:[%s2696 + $0xe0] sm:$0xff]
        %v2726 = vld [vmem:[%s2696 + $0xe8] sm:$0xff]
        %v2727 = vld [vmem:[%s2696 + $0xf0] sm:$0xff]
        %v2728 = vld [vmem:[%s2696 + $0xf8] sm:$0xff]
        %v2729 = vld [vmem:[%s2696 + $0x100] sm:$0xff]
        %v2730 = vld [vmem:[%s2696 + $0x108] sm:$0xff]
        %v2731 = vld [vmem:[%s2696 + $0x110] sm:$0xff]
        %v2732 = vld [vmem:[%s2696 + $0x118] sm:$0xff]
        %v2733 = vld [vmem:[%s2696 + $0x120] sm:$0xff]
        %v2734 = vld [vmem:[%s2696 + $0x128] sm:$0xff]
        %vm2739 = vcmask 1044480
        %v2740 = vrot.slane %v2692, 3
        %v2741 = vrot.slane %v2545, 3
        %v2742 = vsel %vm2739, %v2740, %v2741
        %v2743 = vrot.slane %v2693, 3
        %v2744 = vrot.slane %v2546, 3
        %v2745 = vsel %vm2739, %v2743, %v2744
        %v2746 = vrot.slane %v2694, 3
        %v2747 = vsel %vm2739, %v2741, %v2746
        %v2748 = vrot.slane %v2695, 3
        %v2749 = vsel %vm2739, %v2744, %v2748
        %v2752 = vsel %vm2274, %v2745, 0
        %v2754 = vsel %vm2274, %v2749, 0
        %2756 = vmatprep.subr.mxu0 %v2698
        %2757 = vmatpush1.msra.mxu0 %v2697
        %2758 = vmatprep.subr.mxu0 %v2700
        %2759 = vmatpush1.msra.mxu0 %v2699
        %2760 = vmatprep.subr.mxu0 %v2702
        %2761 = vmatpush1.msra.mxu0 %v2701
        %2762 = vmatprep.subr.mxu0 %v2704
        %2763 = vmatpush1.msra.mxu0 %v2703
        %2764 = vmatprep.subr.mxu0 %v2706
        %2765 = vmatpush1.msra.mxu0 %v2705
        %2766 = vmatprep.subr.mxu0 %v2708
        %2767 = vmatpush1.msra.mxu0 %v2707
        %2768 = vmatprep.subr.mxu0 %v2710
        %2769 = vmatpush1.msra.mxu0 %v2709
        %2770 = vmatprep.subr.mxu0 %v2712
        %2771 = vmatpush1.msra.mxu0 %v2711
        %2772 = vmatprep.subr.mxu0 %v2714
        %2773 = vmatpush1.msra.mxu0 %v2713
        %2774 = vmatprep.subr.mxu0 %v2716
        %2775 = vmatpush1.msra.mxu0 %v2715
        %2776 = vmatprep.subr.mxu0 %v2718
        %2777 = vmatpush1.msra.mxu0 %v2717
        %2778 = vmatprep.subr.mxu0 %v2720
        %2779 = vmatpush1.msra.mxu0 %v2719
        %2780 = vmatprep.subr.mxu0 %v2722
        %2781 = vmatpush1.msra.mxu0 %v2721
        %2782 = vmatprep.subr.mxu0 %v2724
        %2783 = vmatpush1.msra.mxu0 %v2723
        %2784 = vmatprep.subr.mxu0 %v2726
        %2785 = vmatpush1.msra.mxu0 %v2725
        %2786 = vmatprep.subr.mxu0 %v2728
        %2787 = vmatpush1.msra.mxu0 %v2727
        %2788 = vmatprep.subr.mxu0 %v2730
        %2789 = vmatpush1.msra.mxu0 %v2729
        %2790 = vmatprep.subr.mxu0 %v2732
        %2791 = vmatpush1.msra.mxu0 %v2731
        %2792 = vmatprep.subr.mxu0 %v2734
        %2793 = vmatpush1.msra.mxu0 %v2733
        %2794 = vmatprep.subr.mxu0 0.0
        %2795 = vmatpush1.msra.mxu0 0.0
        %2796 = vmatprep.subr.mxu0 0.0
        %2797 = vmatpush1.msra.mxu0 0.0
        %2798 = vmatprep.subr.mxu0 0.0
        %2799 = vmatpush1.msra.mxu0 0.0
        %2800 = vmatprep.subr.mxu0 0.0
        %2801 = vmatpush1.msra.mxu0 0.0
        %2802 = vmatprep.subr.mxu0 0.0
        %2803 = vmatpush1.msra.mxu0 0.0
        %2804 = vmatprep.subr.mxu0 0.0
        %2805 = vmatpush1.msra.mxu0 0.0
        %2806 = vmatprep.subr.mxu0 0.0
        %2807 = vmatpush1.msra.mxu0 0.0
        %2808 = vmatprep.subr.mxu0 0.0
        %2809 = vmatpush1.msra.mxu0 0.0
        %2810 = vmatprep.subr.mxu0 0.0
        %2811 = vmatpush1.msra.mxu0 0.0
        %2812 = vmatprep.subr.mxu0 0.0
        %2813 = vmatpush1.msra.mxu0 0.0
        %2814 = vmatprep.subr.mxu0 0.0
        %2815 = vmatpush1.msra.mxu0 0.0
        %2816 = vmatprep.subr.mxu0 0.0
        %2817 = vmatpush1.msra.mxu0 0.0
        %2818 = vmatprep.subr.mxu0 0.0
        %2819 = vmatpush1.msra.mxu0 0.0
        %2820 = vmatprep.mubr.f32.mxu0 %v2752
        %2821 = vmatmul.mubr.f32.gmra.mrb[0].mxu0 %v2742
        %v2822 = vpop.f32.mrb[0].mxu0
        %v2823 = vadd.f32 0.0, %v2822
        %v2824 = vpop.f32.mrb[0].mxu0
        %v2825 = vadd.f32 0.0, %v2824
        %2826 = vmatprep.mubr.f32.mxu0 %v2754
        %2827 = vmatmul.mubr.f32.gmra.mrb[0].mxu0 %v2747
        %v2828 = vpop.f32.mrb[0].mxu0
        %v2829 = vadd.f32 0.0, %v2828
        %v2830 = vpop.f32.mrb[0].mxu0
        %v2831 = vadd.f32 0.0, %v2830
        %2832 = vdwg.mxu0
        %v2833 = vadd.f32 %v2688, %v2823
        %v2834 = vadd.f32 %v2689, %v2825
        %v2835 = vadd.f32 %v2690, %v2829
        %v2836 = vadd.f32 %v2691, %v2831
        %v2837 = vld [vmem:[#allocation2] sm:$0xf0]
        %v2838 = vld [vmem:[#allocation2 + $0x8] sm:$0xf0]
        %v2839 = vld [vmem:[#allocation2 + $0x20] sm:$0x7]
        %v2840 = vld [vmem:[#allocation2 + $0x28] sm:$0x7]
        %s2841 = scalar_lea.vmem [#allocation12], 1216
        %v2842 = vld [vmem:[%s2841] sm:$0xff]
        %v2843 = vld [vmem:[%s2841 + $0x8] sm:$0xff]
        %v2844 = vld [vmem:[%s2841 + $0x10] sm:$0xff]
        %v2845 = vld [vmem:[%s2841 + $0x18] sm:$0xff]
        %v2846 = vld [vmem:[%s2841 + $0x20] sm:$0xff]
        %v2847 = vld [vmem:[%s2841 + $0x28] sm:$0xff]
        %v2848 = vld [vmem:[%s2841 + $0x30] sm:$0xff]
        %v2849 = vld [vmem:[%s2841 + $0x38] sm:$0xff]
        %v2850 = vld [vmem:[%s2841 + $0x40] sm:$0xff]
        %v2851 = vld [vmem:[%s2841 + $0x48] sm:$0xff]
        %v2852 = vld [vmem:[%s2841 + $0x50] sm:$0xff]
        %v2853 = vld [vmem:[%s2841 + $0x58] sm:$0xff]
        %v2854 = vld [vmem:[%s2841 + $0x60] sm:$0xff]
        %v2855 = vld [vmem:[%s2841 + $0x68] sm:$0xff]
        %v2856 = vld [vmem:[%s2841 + $0x70] sm:$0xff]
        %v2857 = vld [vmem:[%s2841 + $0x78] sm:$0xff]
        %v2858 = vld [vmem:[%s2841 + $0x80] sm:$0xff]
        %v2859 = vld [vmem:[%s2841 + $0x88] sm:$0xff]
        %v2860 = vld [vmem:[%s2841 + $0x90] sm:$0xff]
        %v2861 = vld [vmem:[%s2841 + $0x98] sm:$0xff]
        %v2862 = vld [vmem:[%s2841 + $0xa0] sm:$0xff]
        %v2863 = vld [vmem:[%s2841 + $0xa8] sm:$0xff]
        %v2864 = vld [vmem:[%s2841 + $0xb0] sm:$0xff]
        %v2865 = vld [vmem:[%s2841 + $0xb8] sm:$0xff]
        %v2866 = vld [vmem:[%s2841 + $0xc0] sm:$0xff]
        %v2867 = vld [vmem:[%s2841 + $0xc8] sm:$0xff]
        %v2868 = vld [vmem:[%s2841 + $0xd0] sm:$0xff]
        %v2869 = vld [vmem:[%s2841 + $0xd8] sm:$0xff]
        %v2870 = vld [vmem:[%s2841 + $0xe0] sm:$0xff]
        %v2871 = vld [vmem:[%s2841 + $0xe8] sm:$0xff]
        %v2872 = vld [vmem:[%s2841 + $0xf0] sm:$0xff]
        %v2873 = vld [vmem:[%s2841 + $0xf8] sm:$0xff]
        %v2874 = vld [vmem:[%s2841 + $0x100] sm:$0xff]
        %v2875 = vld [vmem:[%s2841 + $0x108] sm:$0xff]
        %v2876 = vld [vmem:[%s2841 + $0x110] sm:$0xff]
        %v2877 = vld [vmem:[%s2841 + $0x118] sm:$0xff]
        %v2878 = vld [vmem:[%s2841 + $0x120] sm:$0xff]
        %v2879 = vld [vmem:[%s2841 + $0x128] sm:$0xff]
        %v2884 = vrot.slane %v2837, 4
        %v2885 = vrot.slane %v2545, 4
        %v2886 = vsel %vm823, %v2884, %v2885
        %v2887 = vrot.slane %v2838, 4
        %v2888 = vrot.slane %v2546, 4
        %v2889 = vsel %vm823, %v2887, %v2888
        %v2890 = vrot.slane %v2839, 4
        %v2891 = vsel %vm823, %v2885, %v2890
        %v2892 = vrot.slane %v2840, 4
        %v2893 = vsel %vm823, %v2888, %v2892
        %v2896 = vsel %vm2274, %v2889, 0
        %v2898 = vsel %vm2274, %v2893, 0
        %2900 = vmatprep.subr.mxu0 %v2843
        %2901 = vmatpush1.msra.mxu0 %v2842
        %2902 = vmatprep.subr.mxu0 %v2845
        %2903 = vmatpush1.msra.mxu0 %v2844
        %2904 = vmatprep.subr.mxu0 %v2847
        %2905 = vmatpush1.msra.mxu0 %v2846
        %2906 = vmatprep.subr.mxu0 %v2849
        %2907 = vmatpush1.msra.mxu0 %v2848
        %2908 = vmatprep.subr.mxu0 %v2851
        %2909 = vmatpush1.msra.mxu0 %v2850
        %2910 = vmatprep.subr.mxu0 %v2853
        %2911 = vmatpush1.msra.mxu0 %v2852
        %2912 = vmatprep.subr.mxu0 %v2855
        %2913 = vmatpush1.msra.mxu0 %v2854
        %2914 = vmatprep.subr.mxu0 %v2857
        %2915 = vmatpush1.msra.mxu0 %v2856
        %2916 = vmatprep.subr.mxu0 %v2859
        %2917 = vmatpush1.msra.mxu0 %v2858
        %2918 = vmatprep.subr.mxu0 %v2861
        %2919 = vmatpush1.msra.mxu0 %v2860
        %2920 = vmatprep.subr.mxu0 %v2863
        %2921 = vmatpush1.msra.mxu0 %v2862
        %2922 = vmatprep.subr.mxu0 %v2865
        %2923 = vmatpush1.msra.mxu0 %v2864
        %2924 = vmatprep.subr.mxu0 %v2867
        %2925 = vmatpush1.msra.mxu0 %v2866
        %2926 = vmatprep.subr.mxu0 %v2869
        %2927 = vmatpush1.msra.mxu0 %v2868
        %2928 = vmatprep.subr.mxu0 %v2871
        %2929 = vmatpush1.msra.mxu0 %v2870
        %2930 = vmatprep.subr.mxu0 %v2873
        %2931 = vmatpush1.msra.mxu0 %v2872
        %2932 = vmatprep.subr.mxu0 %v2875
        %2933 = vmatpush1.msra.mxu0 %v2874
        %2934 = vmatprep.subr.mxu0 %v2877
        %2935 = vmatpush1.msra.mxu0 %v2876
        %2936 = vmatprep.subr.mxu0 %v2879
        %2937 = vmatpush1.msra.mxu0 %v2878
        %2938 = vmatprep.subr.mxu0 0.0
        %2939 = vmatpush1.msra.mxu0 0.0
        %2940 = vmatprep.subr.mxu0 0.0
        %2941 = vmatpush1.msra.mxu0 0.0
        %2942 = vmatprep.subr.mxu0 0.0
        %2943 = vmatpush1.msra.mxu0 0.0
        %2944 = vmatprep.subr.mxu0 0.0
        %2945 = vmatpush1.msra.mxu0 0.0
        %2946 = vmatprep.subr.mxu0 0.0
        %2947 = vmatpush1.msra.mxu0 0.0
        %2948 = vmatprep.subr.mxu0 0.0
        %2949 = vmatpush1.msra.mxu0 0.0
        %2950 = vmatprep.subr.mxu0 0.0
        %2951 = vmatpush1.msra.mxu0 0.0
        %2952 = vmatprep.subr.mxu0 0.0
        %2953 = vmatpush1.msra.mxu0 0.0
        %2954 = vmatprep.subr.mxu0 0.0
        %2955 = vmatpush1.msra.mxu0 0.0
        %2956 = vmatprep.subr.mxu0 0.0
        %2957 = vmatpush1.msra.mxu0 0.0
        %2958 = vmatprep.subr.mxu0 0.0
        %2959 = vmatpush1.msra.mxu0 0.0
        %2960 = vmatprep.subr.mxu0 0.0
        %2961 = vmatpush1.msra.mxu0 0.0
        %2962 = vmatprep.subr.mxu0 0.0
        %2963 = vmatpush1.msra.mxu0 0.0
        %2964 = vmatprep.mubr.f32.mxu0 %v2896
        %2965 = vmatmul.mubr.f32.gmra.mrb[0].mxu0 %v2886
        %v2966 = vpop.f32.mrb[0].mxu0
        %v2967 = vadd.f32 0.0, %v2966
        %v2968 = vpop.f32.mrb[0].mxu0
        %v2969 = vadd.f32 0.0, %v2968
        %2970 = vmatprep.mubr.f32.mxu0 %v2898
        %2971 = vmatmul.mubr.f32.gmra.mrb[0].mxu0 %v2891
        %v2972 = vpop.f32.mrb[0].mxu0
        %v2973 = vadd.f32 0.0, %v2972
        %v2974 = vpop.f32.mrb[0].mxu0
        %v2975 = vadd.f32 0.0, %v2974
        %2976 = vdwg.mxu0
        %v2977 = vadd.f32 %v2833, %v2967
        %v2978 = vadd.f32 %v2834, %v2969
        %v2979 = vadd.f32 %v2835, %v2973
        %v2980 = vadd.f32 %v2836, %v2975
        %v2981 = vld [vmem:[#allocation13] sm:$0x3]
        %v2983 = vlaneseq
        %v2984 = vshrl.u32 %v2983, 7
        %v2985 = vsub.s32 0, %v2984
        %v2986 = vrot.slane %v2981, %v2985
        %v2987 = vlaneseq
        %v2988 = vshrl.u32 %v2987, 7
        %v2989 = vsub.s32 1, %v2988
        %v2990 = vrot.slane %v2981, %v2989
        %v2993 = vmul.f32 %v2977, %v2986
        %v2994 = vmul.f32 %v2978, %v2990
        %v2995 = vmul.f32 %v2979, %v2986
        %v2996 = vmul.f32 %v2980, %v2990
        %v2997 = vld [vmem:[#allocation15] sm:$0x3]
        %v2999 = vlaneseq
        %v3000 = vshrl.u32 %v2999, 7
        %v3001 = vsub.s32 0, %v3000
        %v3002 = vrot.slane %v2997, %v3001
        %v3003 = vlaneseq
        %v3004 = vshrl.u32 %v3003, 7
        %v3005 = vsub.s32 1, %v3004
        %v3006 = vrot.slane %v2997, %v3005
        %v3009 = vadd.f32 %v2993, %v3002
        %v3010 = vadd.f32 %v2994, %v3006
        %v3011 = vadd.f32 %v2995, %v3002
        %v3012 = vadd.f32 %v2996, %v3006
        %v3013 = vmax.f32 %v3009, 0.0
        %v3014 = vmax.f32 %v3010, 0.0
        %v3015 = vmax.f32 %v3011, 0.0
        %v3016 = vmax.f32 %v3012, 0.0
        %v3017 = vld [vmem:[%s9] sm:$0xff]
        %v3018 = vld [vmem:[%s9 + $0x8] sm:$0x7]
        %vm3019 = vcmask 121856
        %v3021 = vsel %vm3019, %v3017, 0
        %v3024 = vsel %vm3019, %v3018, 0
        %v3027 = vsel %vm2370, %v3015, 0
        %v3030 = vsel %vm2370, %v3016, 0
        %3032 = vmatprep.subr.mxu0 %v3014
        %3033 = vmatpush1.msra.mxu0 %v3013
        %3034 = vmatprep.subr.mxu0 %v3030
        %3035 = vmatpush1.msra.mxu0 %v3027
        %3036 = vmatprep.subr.mxu0 0.0
        %3037 = vmatpush1.msra.mxu0 0.0
        %3038 = vmatprep.subr.mxu0 0.0
        %3039 = vmatpush1.msra.mxu0 0.0
        %3040 = vmatprep.subr.mxu0 0.0
        %3041 = vmatpush1.msra.mxu0 0.0
        %3042 = vmatprep.subr.mxu0 0.0
        %3043 = vmatpush1.msra.mxu0 0.0
        %3044 = vmatprep.subr.mxu0 0.0
        %3045 = vmatpush1.msra.mxu0 0.0
        %3046 = vmatprep.subr.mxu0 0.0
        %3047 = vmatpush1.msra.mxu0 0.0
        %3048 = vmatprep.subr.mxu0 0.0
        %3049 = vmatpush1.msra.mxu0 0.0
        %3050 = vmatprep.subr.mxu0 0.0
        %3051 = vmatpush1.msra.mxu0 0.0
        %3052 = vmatprep.subr.mxu0 0.0
        %3053 = vmatpush1.msra.mxu0 0.0
        %3054 = vmatprep.subr.mxu0 0.0
        %3055 = vmatpush1.msra.mxu0 0.0
        %3056 = vmatprep.subr.mxu0 0.0
        %3057 = vmatpush1.msra.mxu0 0.0
        %3058 = vmatprep.subr.mxu0 0.0
        %3059 = vmatpush1.msra.mxu0 0.0
        %3060 = vmatprep.subr.mxu0 0.0
        %3061 = vmatpush1.msra.mxu0 0.0
        %3062 = vmatprep.subr.mxu0 0.0
        %3063 = vmatpush1.msra.mxu0 0.0
        %3064 = vmatprep.subr.mxu0 0.0
        %3065 = vmatpush1.msra.mxu0 0.0
        %3066 = vmatprep.subr.mxu0 0.0
        %3067 = vmatpush1.msra.mxu0 0.0
        %3068 = vmatprep.subr.mxu0 0.0
        %3069 = vmatpush1.msra.mxu0 0.0
        %3070 = vmatprep.subr.mxu0 0.0
        %3071 = vmatpush1.msra.mxu0 0.0
        %3072 = vmatprep.subr.mxu0 0.0
        %3073 = vmatpush1.msra.mxu0 0.0
        %3074 = vmatprep.subr.mxu0 0.0
        %3075 = vmatpush1.msra.mxu0 0.0
        %3076 = vmatprep.subr.mxu0 0.0
        %3077 = vmatpush1.msra.mxu0 0.0
        %3078 = vmatprep.subr.mxu0 0.0
        %3079 = vmatpush1.msra.mxu0 0.0
        %3080 = vmatprep.subr.mxu0 0.0
        %3081 = vmatpush1.msra.mxu0 0.0
        %3082 = vmatprep.subr.mxu0 0.0
        %3083 = vmatpush1.msra.mxu0 0.0
        %3084 = vmatprep.subr.mxu0 0.0
        %3085 = vmatpush1.msra.mxu0 0.0
        %3086 = vmatprep.subr.mxu0 0.0
        %3087 = vmatpush1.msra.mxu0 0.0
        %3088 = vmatprep.subr.mxu0 0.0
        %3089 = vmatpush1.msra.mxu0 0.0
        %3090 = vmatprep.subr.mxu0 0.0
        %3091 = vmatpush1.msra.mxu0 0.0
        %3092 = vmatprep.subr.mxu0 0.0
        %3093 = vmatpush1.msra.mxu0 0.0
        %3094 = vmatprep.subr.mxu0 0.0
        %3095 = vmatpush1.msra.mxu0 0.0
        %3096 = vmatprep.mubr.f32.mxu0 0.0
        %3097 = vmatmul.mubr.f32.gmra.mrb[0].mxu0 %v3021
        %v3098 = vpop.f32.mrb[0].mxu0
        %v3099 = vadd.f32 0.0, %v3098
        %v3100 = vpop.f32.mrb[0].mxu0
        %v3101 = vadd.f32 0.0, %v3100
        %3102 = vmatprep.mubr.f32.mxu0 0.0
        %3103 = vmatmul.mubr.f32.gmra.mrb[0].mxu0 %v3024
        %v3104 = vpop.f32.mrb[0].mxu0
        %v3105 = vadd.f32 0.0, %v3104
        %v3106 = vpop.f32.mrb[0].mxu0
        %v3107 = vadd.f32 0.0, %v3106
        %3108 = vdwg.mxu0
        %v3109 = vld [vmem:[%s10] sm:$0xff]
        %v3110 = vld [vmem:[%s10 + $0x8] sm:$0xff]
        %v3111 = vld [vmem:[%s10 + $0x10] sm:$0xff]
        %v3112 = vld [vmem:[%s10 + $0x18] sm:$0xff]
        %v3113 = vld [vmem:[%s10 + $0x20] sm:$0xff]
        %v3114 = vld [vmem:[%s10 + $0x28] sm:$0xff]
        %v3115 = vld [vmem:[%s10 + $0x30] sm:$0xff]
        %v3116 = vld [vmem:[%s10 + $0x38] sm:$0xff]
        %v3117 = vld [vmem:[%s10 + $0x40] sm:$0xff]
        %v3118 = vld [vmem:[%s10 + $0x48] sm:$0xff]
        %v3119 = vld [vmem:[%s10 + $0x50] sm:$0xff]
        %v3120 = vld [vmem:[%s10 + $0x58] sm:$0xff]
        %v3121 = vld [vmem:[%s10 + $0x60] sm:$0xff]
        %v3122 = vld [vmem:[%s10 + $0x68] sm:$0xff]
        %v3123 = vld [vmem:[%s10 + $0x70] sm:$0xff]
        %v3124 = vld [vmem:[%s10 + $0x78] sm:$0xff]
        %v3125 = vld [vmem:[%s10 + $0x80] sm:$0xff]
        %v3126 = vld [vmem:[%s10 + $0x88] sm:$0xff]
        %v3127 = vld [vmem:[%s10 + $0x90] sm:$0xff]
        %v3128 = vld [vmem:[%s10 + $0x98] sm:$0xff]
        %v3129 = vld [vmem:[%s10 + $0xa0] sm:$0xff]
        %v3130 = vld [vmem:[%s10 + $0xa8] sm:$0xff]
        %v3131 = vld [vmem:[%s10 + $0xb0] sm:$0xff]
        %v3132 = vld [vmem:[%s10 + $0xb8] sm:$0xff]
        %v3133 = vld [vmem:[%s10 + $0xc0] sm:$0xff]
        %v3134 = vld [vmem:[%s10 + $0xc8] sm:$0xff]
        %v3135 = vld [vmem:[%s10 + $0xd0] sm:$0xff]
        %v3136 = vld [vmem:[%s10 + $0xd8] sm:$0xff]
        %v3137 = vld [vmem:[%s10 + $0xe0] sm:$0xff]
        %v3138 = vld [vmem:[%s10 + $0xe8] sm:$0xff]
        %v3139 = vld [vmem:[%s10 + $0xf0] sm:$0xff]
        %v3140 = vld [vmem:[%s10 + $0xf8] sm:$0xff]
        %v3141 = vld [vmem:[%s10 + $0x100] sm:$0xff]
        %v3142 = vld [vmem:[%s10 + $0x108] sm:$0xff]
        %v3143 = vld [vmem:[%s10 + $0x110] sm:$0xff]
        %v3144 = vld [vmem:[%s10 + $0x118] sm:$0xff]
        %v3145 = vld [vmem:[%s10 + $0x120] sm:$0xff]
        %v3146 = vld [vmem:[%s10 + $0x128] sm:$0xff]
        %v3147 = vld [vmem:[%s10 + $0x130] sm:$0xff]
        %v3148 = vld [vmem:[%s10 + $0x138] sm:$0xff]
        %v3149 = vld [vmem:[%s10 + $0x140] sm:$0xff]
        %v3150 = vld [vmem:[%s10 + $0x148] sm:$0xff]
        %v3151 = vld [vmem:[%s10 + $0x150] sm:$0xff]
        %v3152 = vld [vmem:[%s10 + $0x158] sm:$0xff]
        %v3153 = vld [vmem:[%s10 + $0x160] sm:$0xff]
        %v3154 = vld [vmem:[%s10 + $0x168] sm:$0xff]
        %v3155 = vld [vmem:[%s10 + $0x170] sm:$0xff]
        %v3156 = vld [vmem:[%s10 + $0x178] sm:$0xff]
        %v3157 = vld [vmem:[%s10 + $0x180] sm:$0xff]
        %v3158 = vld [vmem:[%s10 + $0x188] sm:$0xff]
        %v3159 = vld [vmem:[%s10 + $0x190] sm:$0xff]
        %v3160 = vld [vmem:[%s10 + $0x198] sm:$0xff]
        %v3161 = vld [vmem:[%s10 + $0x1a0] sm:$0xff]
        %v3162 = vld [vmem:[%s10 + $0x1a8] sm:$0xff]
        %v3163 = vld [vmem:[%s10 + $0x1b0] sm:$0xff]
        %v3164 = vld [vmem:[%s10 + $0x1b8] sm:$0xff]
        %v3165 = vld [vmem:[%s10 + $0x1c0] sm:$0xff]
        %v3166 = vld [vmem:[%s10 + $0x1c8] sm:$0xff]
        %v3167 = vld [vmem:[%s10 + $0x1d0] sm:$0xff]
        %v3168 = vld [vmem:[%s10 + $0x1d8] sm:$0xff]
        %vm3169 = vcmask 916480
        %v3171 = vsel %vm3169, %v3101, 0
        %v3174 = vsel %vm3169, %v3107, 0
        %3176 = vmatprep.subr.mxu0 %v3110
        %3177 = vmatpush1.msra.mxu0 %v3109
        %3178 = vmatprep.subr.mxu0 %v3112
        %3179 = vmatpush1.msra.mxu0 %v3111
        %3180 = vmatprep.subr.mxu0 %v3114
        %3181 = vmatpush1.msra.mxu0 %v3113
        %3182 = vmatprep.subr.mxu0 %v3116
        %3183 = vmatpush1.msra.mxu0 %v3115
        %3184 = vmatprep.subr.mxu0 %v3118
        %3185 = vmatpush1.msra.mxu0 %v3117
        %3186 = vmatprep.subr.mxu0 %v3120
        %3187 = vmatpush1.msra.mxu0 %v3119
        %3188 = vmatprep.subr.mxu0 %v3122
        %3189 = vmatpush1.msra.mxu0 %v3121
        %3190 = vmatprep.subr.mxu0 %v3124
        %3191 = vmatpush1.msra.mxu0 %v3123
        %3192 = vmatprep.subr.mxu0 %v3126
        %3193 = vmatpush1.msra.mxu0 %v3125
        %3194 = vmatprep.subr.mxu0 %v3128
        %3195 = vmatpush1.msra.mxu0 %v3127
        %3196 = vmatprep.subr.mxu0 %v3130
        %3197 = vmatpush1.msra.mxu0 %v3129
        %3198 = vmatprep.subr.mxu0 %v3132
        %3199 = vmatpush1.msra.mxu0 %v3131
        %3200 = vmatprep.subr.mxu0 %v3134
        %3201 = vmatpush1.msra.mxu0 %v3133
        %3202 = vmatprep.subr.mxu0 %v3136
        %3203 = vmatpush1.msra.mxu0 %v3135
        %3204 = vmatprep.subr.mxu0 %v3138
        %3205 = vmatpush1.msra.mxu0 %v3137
        %3206 = vmatprep.subr.mxu0 %v3140
        %3207 = vmatpush1.msra.mxu0 %v3139
        %3208 = vmatprep.subr.mxu0 %v3142
        %3209 = vmatpush1.msra.mxu0 %v3141
        %3210 = vmatprep.subr.mxu0 %v3144
        %3211 = vmatpush1.msra.mxu0 %v3143
        %3212 = vmatprep.subr.mxu0 %v3146
        %3213 = vmatpush1.msra.mxu0 %v3145
        %3214 = vmatprep.subr.mxu0 %v3148
        %3215 = vmatpush1.msra.mxu0 %v3147
        %3216 = vmatprep.subr.mxu0 %v3150
        %3217 = vmatpush1.msra.mxu0 %v3149
        %3218 = vmatprep.subr.mxu0 %v3152
        %3219 = vmatpush1.msra.mxu0 %v3151
        %3220 = vmatprep.subr.mxu0 %v3154
        %3221 = vmatpush1.msra.mxu0 %v3153
        %3222 = vmatprep.subr.mxu0 %v3156
        %3223 = vmatpush1.msra.mxu0 %v3155
        %3224 = vmatprep.subr.mxu0 %v3158
        %3225 = vmatpush1.msra.mxu0 %v3157
        %3226 = vmatprep.subr.mxu0 %v3160
        %3227 = vmatpush1.msra.mxu0 %v3159
        %3228 = vmatprep.subr.mxu0 %v3162
        %3229 = vmatpush1.msra.mxu0 %v3161
        %3230 = vmatprep.subr.mxu0 %v3164
        %3231 = vmatpush1.msra.mxu0 %v3163
        %3232 = vmatprep.subr.mxu0 %v3166
        %3233 = vmatpush1.msra.mxu0 %v3165
        %3234 = vmatprep.subr.mxu0 %v3168
        %3235 = vmatpush1.msra.mxu0 %v3167
        %3236 = vmatprep.subr.mxu0 0.0
        %3237 = vmatpush1.msra.mxu0 0.0
        %3238 = vmatprep.subr.mxu0 0.0
        %3239 = vmatpush1.msra.mxu0 0.0
        %3240 = vmatprep.mubr.f32.mxu0 %v3171
        %3241 = vmatmul.mubr.f32.gmra.mrb[0].mxu0 %v3099
        %v3242 = vpop.f32.mrb[0].mxu0
        %v3243 = vadd.f32 0.0, %v3242
        %v3244 = vpop.f32.mrb[0].mxu0
        %v3245 = vadd.f32 0.0, %v3244
        %3246 = vmatprep.mubr.f32.mxu0 %v3174
        %3247 = vmatmul.mubr.f32.gmra.mrb[0].mxu0 %v3105
        %v3248 = vpop.f32.mrb[0].mxu0
        %v3249 = vadd.f32 0.0, %v3248
        %v3250 = vpop.f32.mrb[0].mxu0
        %v3251 = vadd.f32 0.0, %v3250
        %3252 = vdwg.mxu0
        %3253 = vst [vmem:[#allocation3] sm:$0xff] %v3243
        %vm3254 = vcmask 392192
        %3255 = vst.msk [vmem:[#allocation3 + $0x8] sm:$0xff] %vm3254, %v3245
        %3256 = vst [vmem:[#allocation3 + $0x10] sm:$0x7] %v3249
        %vm3257 = vcmask 387072
        %3258 = vst.msk [vmem:[#allocation3 + $0x18] sm:$0x7] %vm3257, %v3251
        %v3259 = vld [vmem:[#allocation3] sm:$0x7f]
        %v3260 = vld [vmem:[#allocation3 + $0x8] sm:$0x7f]
        %v3261 = vld [vmem:[%s11] sm:$0xff]
        %v3262 = vld [vmem:[%s11 + $0x8] sm:$0xff]
        %v3263 = vld [vmem:[%s11 + $0x10] sm:$0xff]
        %v3264 = vld [vmem:[%s11 + $0x18] sm:$0xff]
        %v3265 = vld [vmem:[%s11 + $0x20] sm:$0xff]
        %v3266 = vld [vmem:[%s11 + $0x28] sm:$0xff]
        %v3267 = vld [vmem:[%s11 + $0x30] sm:$0xff]
        %v3268 = vld [vmem:[%s11 + $0x38] sm:$0xff]
        %v3269 = vld [vmem:[%s11 + $0x40] sm:$0xff]
        %v3270 = vld [vmem:[%s11 + $0x48] sm:$0xff]
        %v3271 = vld [vmem:[%s11 + $0x50] sm:$0xff]
        %v3272 = vld [vmem:[%s11 + $0x58] sm:$0xff]
        %v3273 = vld [vmem:[%s11 + $0x60] sm:$0xff]
        %v3274 = vld [vmem:[%s11 + $0x68] sm:$0xff]
        %v3275 = vld [vmem:[%s11 + $0x70] sm:$0xff]
        %v3276 = vld [vmem:[%s11 + $0x78] sm:$0xff]
        %v3277 = vld [vmem:[%s11 + $0x80] sm:$0xff]
        %v3278 = vld [vmem:[%s11 + $0x88] sm:$0xff]
        %v3279 = vld [vmem:[%s11 + $0x90] sm:$0xff]
        %v3280 = vld [vmem:[%s11 + $0x98] sm:$0xff]
        %v3281 = vld [vmem:[%s11 + $0xa0] sm:$0xff]
        %v3282 = vld [vmem:[%s11 + $0xa8] sm:$0xff]
        %v3283 = vld [vmem:[%s11 + $0xb0] sm:$0xff]
        %v3284 = vld [vmem:[%s11 + $0xb8] sm:$0xff]
        %v3285 = vld [vmem:[%s11 + $0xc0] sm:$0xff]
        %v3286 = vld [vmem:[%s11 + $0xc8] sm:$0xff]
        %v3287 = vld [vmem:[%s11 + $0xd0] sm:$0xff]
        %v3288 = vld [vmem:[%s11 + $0xd8] sm:$0xff]
        %v3289 = vld [vmem:[%s11 + $0xe0] sm:$0xff]
        %v3290 = vld [vmem:[%s11 + $0xe8] sm:$0xff]
        %v3291 = vld [vmem:[%s11 + $0xf0] sm:$0xff]
        %v3292 = vld [vmem:[%s11 + $0xf8] sm:$0xff]
        %v3293 = vld [vmem:[%s11 + $0x100] sm:$0xff]
        %v3294 = vld [vmem:[%s11 + $0x108] sm:$0xff]
        %v3295 = vld [vmem:[%s11 + $0x110] sm:$0xff]
        %v3296 = vld [vmem:[%s11 + $0x118] sm:$0xff]
        %v3297 = vld [vmem:[%s11 + $0x120] sm:$0xff]
        %v3298 = vld [vmem:[%s11 + $0x128] sm:$0xff]
        %v3299 = vld [vmem:[%s11 + $0x130] sm:$0xff]
        %v3300 = vld [vmem:[%s11 + $0x138] sm:$0xff]
        %v3301 = vld [vmem:[%s11 + $0x140] sm:$0xff]
        %v3302 = vld [vmem:[%s11 + $0x148] sm:$0xff]
        %v3303 = vld [vmem:[%s11 + $0x150] sm:$0xff]
        %v3304 = vld [vmem:[%s11 + $0x158] sm:$0xff]
        %v3305 = vld [vmem:[#allocation3] sm:$0xfe]
        %v3306 = vld [vmem:[#allocation3 + $0x8] sm:$0xfe]
        %s3307 = scalar_lea.vmem %s11, 352
        %v3308 = vld [vmem:[%s3307] sm:$0xff]
        %v3309 = vld [vmem:[%s3307 + $0x8] sm:$0xff]
        %v3310 = vld [vmem:[%s3307 + $0x10] sm:$0xff]
        %v3311 = vld [vmem:[%s3307 + $0x18] sm:$0xff]
        %v3312 = vld [vmem:[%s3307 + $0x20] sm:$0xff]
        %v3313 = vld [vmem:[%s3307 + $0x28] sm:$0xff]
        %v3314 = vld [vmem:[%s3307 + $0x30] sm:$0xff]
        %v3315 = vld [vmem:[%s3307 + $0x38] sm:$0xff]
        %v3316 = vld [vmem:[%s3307 + $0x40] sm:$0xff]
        %v3317 = vld [vmem:[%s3307 + $0x48] sm:$0xff]
        %v3318 = vld [vmem:[%s3307 + $0x50] sm:$0xff]
        %v3319 = vld [vmem:[%s3307 + $0x58] sm:$0xff]
        %v3320 = vld [vmem:[%s3307 + $0x60] sm:$0xff]
        %v3321 = vld [vmem:[%s3307 + $0x68] sm:$0xff]
        %v3322 = vld [vmem:[%s3307 + $0x70] sm:$0xff]
        %v3323 = vld [vmem:[%s3307 + $0x78] sm:$0xff]
        %v3324 = vld [vmem:[%s3307 + $0x80] sm:$0xff]
        %v3325 = vld [vmem:[%s3307 + $0x88] sm:$0xff]
        %v3326 = vld [vmem:[%s3307 + $0x90] sm:$0xff]
        %v3327 = vld [vmem:[%s3307 + $0x98] sm:$0xff]
        %v3328 = vld [vmem:[%s3307 + $0xa0] sm:$0xff]
        %v3329 = vld [vmem:[%s3307 + $0xa8] sm:$0xff]
        %v3330 = vld [vmem:[%s3307 + $0xb0] sm:$0xff]
        %v3331 = vld [vmem:[%s3307 + $0xb8] sm:$0xff]
        %v3332 = vld [vmem:[%s3307 + $0xc0] sm:$0xff]
        %v3333 = vld [vmem:[%s3307 + $0xc8] sm:$0xff]
        %v3334 = vld [vmem:[%s3307 + $0xd0] sm:$0xff]
        %v3335 = vld [vmem:[%s3307 + $0xd8] sm:$0xff]
        %v3336 = vld [vmem:[%s3307 + $0xe0] sm:$0xff]
        %v3337 = vld [vmem:[%s3307 + $0xe8] sm:$0xff]
        %v3338 = vld [vmem:[%s3307 + $0xf0] sm:$0xff]
        %v3339 = vld [vmem:[%s3307 + $0xf8] sm:$0xff]
        %v3340 = vld [vmem:[%s3307 + $0x100] sm:$0xff]
        %v3341 = vld [vmem:[%s3307 + $0x108] sm:$0xff]
        %v3342 = vld [vmem:[%s3307 + $0x110] sm:$0xff]
        %v3343 = vld [vmem:[%s3307 + $0x118] sm:$0xff]
        %v3344 = vld [vmem:[%s3307 + $0x120] sm:$0xff]
        %v3345 = vld [vmem:[%s3307 + $0x128] sm:$0xff]
        %v3346 = vld [vmem:[%s3307 + $0x130] sm:$0xff]
        %v3347 = vld [vmem:[%s3307 + $0x138] sm:$0xff]
        %v3348 = vld [vmem:[%s3307 + $0x140] sm:$0xff]
        %v3349 = vld [vmem:[%s3307 + $0x148] sm:$0xff]
        %v3350 = vld [vmem:[%s3307 + $0x150] sm:$0xff]
        %v3351 = vld [vmem:[%s3307 + $0x158] sm:$0xff]
        %v3354 = vrot.slane %v3305, 1
        %v3355 = vrot.slane %v3306, 1
        %v3357 = vsel %vm3254, %v3355, 0
        %3359 = vmatprep.subr.mxu0 %v3309
        %3360 = vmatpush1.msra.mxu0 %v3308
        %3361 = vmatprep.subr.mxu0 %v3311
        %3362 = vmatpush1.msra.mxu0 %v3310
        %3363 = vmatprep.subr.mxu0 %v3313
        %3364 = vmatpush1.msra.mxu0 %v3312
        %3365 = vmatprep.subr.mxu0 %v3315
        %3366 = vmatpush1.msra.mxu0 %v3314
        %3367 = vmatprep.subr.mxu0 %v3317
        %3368 = vmatpush1.msra.mxu0 %v3316
        %3369 = vmatprep.subr.mxu0 %v3319
        %3370 = vmatpush1.msra.mxu0 %v3318
        %3371 = vmatprep.subr.mxu0 %v3321
        %3372 = vmatpush1.msra.mxu0 %v3320
        %3373 = vmatprep.subr.mxu0 %v3323
        %3374 = vmatpush1.msra.mxu0 %v3322
        %3375 = vmatprep.subr.mxu0 %v3325
        %3376 = vmatpush1.msra.mxu0 %v3324
        %3377 = vmatprep.subr.mxu0 %v3327
        %3378 = vmatpush1.msra.mxu0 %v3326
        %3379 = vmatprep.subr.mxu0 %v3329
        %3380 = vmatpush1.msra.mxu0 %v3328
        %3381 = vmatprep.subr.mxu0 %v3331
        %3382 = vmatpush1.msra.mxu0 %v3330
        %3383 = vmatprep.subr.mxu0 %v3333
        %3384 = vmatpush1.msra.mxu0 %v3332
        %3385 = vmatprep.subr.mxu0 %v3335
        %3386 = vmatpush1.msra.mxu0 %v3334
        %3387 = vmatprep.subr.mxu0 %v3337
        %3388 = vmatpush1.msra.mxu0 %v3336
        %3389 = vmatprep.subr.mxu0 %v3339
        %3390 = vmatpush1.msra.mxu0 %v3338
        %3391 = vmatprep.subr.mxu0 %v3341
        %3392 = vmatpush1.msra.mxu0 %v3340
        %3393 = vmatprep.subr.mxu0 %v3343
        %3394 = vmatpush1.msra.mxu0 %v3342
        %3395 = vmatprep.subr.mxu0 %v3345
        %3396 = vmatpush1.msra.mxu0 %v3344
        %3397 = vmatprep.subr.mxu0 %v3347
        %3398 = vmatpush1.msra.mxu0 %v3346
        %3399 = vmatprep.subr.mxu0 %v3349
        %3400 = vmatpush1.msra.mxu0 %v3348
        %3401 = vmatprep.subr.mxu0 %v3351
        %3402 = vmatpush1.msra.mxu0 %v3350
        %3403 = vmatprep.subr.mxu0 0.0
        %3404 = vmatpush1.msra.mxu0 0.0
        %3405 = vmatprep.subr.mxu0 0.0
        %3406 = vmatpush1.msra.mxu0 0.0
        %3407 = vmatprep.subr.mxu0 0.0
        %3408 = vmatpush1.msra.mxu0 0.0
        %3409 = vmatprep.subr.mxu0 0.0
        %3410 = vmatpush1.msra.mxu0 0.0
        %3411 = vmatprep.subr.mxu0 0.0
        %3412 = vmatpush1.msra.mxu0 0.0
        %3413 = vmatprep.subr.mxu0 0.0
        %3414 = vmatpush1.msra.mxu0 0.0
        %3415 = vmatprep.subr.mxu0 0.0
        %3416 = vmatpush1.msra.mxu0 0.0
        %3417 = vmatprep.subr.mxu0 0.0
        %3418 = vmatpush1.msra.mxu0 0.0
        %3419 = vmatprep.subr.mxu0 0.0
        %3420 = vmatpush1.msra.mxu0 0.0
        %3421 = vmatprep.subr.mxu0 0.0
        %3422 = vmatpush1.msra.mxu0 0.0
        %3423 = vmatprep.mubr.f32.mxu0 %v3357
        %3424 = vmatmul.mubr.f32.gmra.mrb[0].mxu0 %v3354
        %v3425 = vpop.f32.mrb[0].mxu0
        %v3426 = vadd.f32 0.0, %v3425
        %v3427 = vpop.f32.mrb[0].mxu0
        %v3428 = vadd.f32 0.0, %v3427
        %3429 = vdwg.mxu0
        %v3431 = vsel %vm3254, %v3260, 0
        %3433 = vmatprep.subr.mxu0 %v3262
        %3434 = vmatpush1.msra.mxu0 %v3261
        %3435 = vmatprep.subr.mxu0 %v3264
        %3436 = vmatpush1.msra.mxu0 %v3263
        %3437 = vmatprep.subr.mxu0 %v3266
        %3438 = vmatpush1.msra.mxu0 %v3265
        %3439 = vmatprep.subr.mxu0 %v3268
        %3440 = vmatpush1.msra.mxu0 %v3267
        %3441 = vmatprep.subr.mxu0 %v3270
        %3442 = vmatpush1.msra.mxu0 %v3269
        %3443 = vmatprep.subr.mxu0 %v3272
        %3444 = vmatpush1.msra.mxu0 %v3271
        %3445 = vmatprep.subr.mxu0 %v3274
        %3446 = vmatpush1.msra.mxu0 %v3273
        %3447 = vmatprep.subr.mxu0 %v3276
        %3448 = vmatpush1.msra.mxu0 %v3275
        %3449 = vmatprep.subr.mxu0 %v3278
        %3450 = vmatpush1.msra.mxu0 %v3277
        %3451 = vmatprep.subr.mxu0 %v3280
        %3452 = vmatpush1.msra.mxu0 %v3279
        %3453 = vmatprep.subr.mxu0 %v3282
        %3454 = vmatpush1.msra.mxu0 %v3281
        %3455 = vmatprep.subr.mxu0 %v3284
        %3456 = vmatpush1.msra.mxu0 %v3283
        %3457 = vmatprep.subr.mxu0 %v3286
        %3458 = vmatpush1.msra.mxu0 %v3285
        %3459 = vmatprep.subr.mxu0 %v3288
        %3460 = vmatpush1.msra.mxu0 %v3287
        %3461 = vmatprep.subr.mxu0 %v3290
        %3462 = vmatpush1.msra.mxu0 %v3289
        %3463 = vmatprep.subr.mxu0 %v3292
        %3464 = vmatpush1.msra.mxu0 %v3291
        %3465 = vmatprep.subr.mxu0 %v3294
        %3466 = vmatpush1.msra.mxu0 %v3293
        %3467 = vmatprep.subr.mxu0 %v3296
        %3468 = vmatpush1.msra.mxu0 %v3295
        %3469 = vmatprep.subr.mxu0 %v3298
        %3470 = vmatpush1.msra.mxu0 %v3297
        %3471 = vmatprep.subr.mxu0 %v3300
        %3472 = vmatpush1.msra.mxu0 %v3299
        %3473 = vmatprep.subr.mxu0 %v3302
        %3474 = vmatpush1.msra.mxu0 %v3301
        %3475 = vmatprep.subr.mxu0 %v3304
        %3476 = vmatpush1.msra.mxu0 %v3303
        %3477 = vmatprep.subr.mxu0 0.0
        %3478 = vmatpush1.msra.mxu0 0.0
        %3479 = vmatprep.subr.mxu0 0.0
        %3480 = vmatpush1.msra.mxu0 0.0
        %3481 = vmatprep.subr.mxu0 0.0
        %3482 = vmatpush1.msra.mxu0 0.0
        %3483 = vmatprep.subr.mxu0 0.0
        %3484 = vmatpush1.msra.mxu0 0.0
        %3485 = vmatprep.subr.mxu0 0.0
        %3486 = vmatpush1.msra.mxu0 0.0
        %3487 = vmatprep.subr.mxu0 0.0
        %3488 = vmatpush1.msra.mxu0 0.0
        %3489 = vmatprep.subr.mxu0 0.0
        %3490 = vmatpush1.msra.mxu0 0.0
        %3491 = vmatprep.subr.mxu0 0.0
        %3492 = vmatpush1.msra.mxu0 0.0
        %3493 = vmatprep.subr.mxu0 0.0
        %3494 = vmatpush1.msra.mxu0 0.0
        %3495 = vmatprep.subr.mxu0 0.0
        %3496 = vmatpush1.msra.mxu0 0.0
        %3497 = vmatprep.mubr.f32.mxu0 %v3431
        %3498 = vmatmul.mubr.f32.gmra.mrb[0].mxu0 %v3259
        %v3499 = vpop.f32.mrb[0].mxu0
        %v3500 = vadd.f32 %v3426, %v3499
        %v3501 = vpop.f32.mrb[0].mxu0
        %v3502 = vadd.f32 %v3428, %v3501
        %3503 = vdwg.mxu0
        %v3504 = vld [vmem:[#allocation3] sm:$0xfc]
        %v3505 = vld [vmem:[#allocation3 + $0x8] sm:$0xfc]
        %v3506 = vld [vmem:[#allocation3 + $0x10] sm:$0x1]
        %v3507 = vld [vmem:[#allocation3 + $0x18] sm:$0x1]
        %s3508 = scalar_lea.vmem %s11, 704
        %v3509 = vld [vmem:[%s3508] sm:$0xff]
        %v3510 = vld [vmem:[%s3508 + $0x8] sm:$0xff]
        %v3511 = vld [vmem:[%s3508 + $0x10] sm:$0xff]
        %v3512 = vld [vmem:[%s3508 + $0x18] sm:$0xff]
        %v3513 = vld [vmem:[%s3508 + $0x20] sm:$0xff]
        %v3514 = vld [vmem:[%s3508 + $0x28] sm:$0xff]
        %v3515 = vld [vmem:[%s3508 + $0x30] sm:$0xff]
        %v3516 = vld [vmem:[%s3508 + $0x38] sm:$0xff]
        %v3517 = vld [vmem:[%s3508 + $0x40] sm:$0xff]
        %v3518 = vld [vmem:[%s3508 + $0x48] sm:$0xff]
        %v3519 = vld [vmem:[%s3508 + $0x50] sm:$0xff]
        %v3520 = vld [vmem:[%s3508 + $0x58] sm:$0xff]
        %v3521 = vld [vmem:[%s3508 + $0x60] sm:$0xff]
        %v3522 = vld [vmem:[%s3508 + $0x68] sm:$0xff]
        %v3523 = vld [vmem:[%s3508 + $0x70] sm:$0xff]
        %v3524 = vld [vmem:[%s3508 + $0x78] sm:$0xff]
        %v3525 = vld [vmem:[%s3508 + $0x80] sm:$0xff]
        %v3526 = vld [vmem:[%s3508 + $0x88] sm:$0xff]
        %v3527 = vld [vmem:[%s3508 + $0x90] sm:$0xff]
        %v3528 = vld [vmem:[%s3508 + $0x98] sm:$0xff]
        %v3529 = vld [vmem:[%s3508 + $0xa0] sm:$0xff]
        %v3530 = vld [vmem:[%s3508 + $0xa8] sm:$0xff]
        %v3531 = vld [vmem:[%s3508 + $0xb0] sm:$0xff]
        %v3532 = vld [vmem:[%s3508 + $0xb8] sm:$0xff]
        %v3533 = vld [vmem:[%s3508 + $0xc0] sm:$0xff]
        %v3534 = vld [vmem:[%s3508 + $0xc8] sm:$0xff]
        %v3535 = vld [vmem:[%s3508 + $0xd0] sm:$0xff]
        %v3536 = vld [vmem:[%s3508 + $0xd8] sm:$0xff]
        %v3537 = vld [vmem:[%s3508 + $0xe0] sm:$0xff]
        %v3538 = vld [vmem:[%s3508 + $0xe8] sm:$0xff]
        %v3539 = vld [vmem:[%s3508 + $0xf0] sm:$0xff]
        %v3540 = vld [vmem:[%s3508 + $0xf8] sm:$0xff]
        %v3541 = vld [vmem:[%s3508 + $0x100] sm:$0xff]
        %v3542 = vld [vmem:[%s3508 + $0x108] sm:$0xff]
        %v3543 = vld [vmem:[%s3508 + $0x110] sm:$0xff]
        %v3544 = vld [vmem:[%s3508 + $0x118] sm:$0xff]
        %v3545 = vld [vmem:[%s3508 + $0x120] sm:$0xff]
        %v3546 = vld [vmem:[%s3508 + $0x128] sm:$0xff]
        %v3547 = vld [vmem:[%s3508 + $0x130] sm:$0xff]
        %v3548 = vld [vmem:[%s3508 + $0x138] sm:$0xff]
        %v3549 = vld [vmem:[%s3508 + $0x140] sm:$0xff]
        %v3550 = vld [vmem:[%s3508 + $0x148] sm:$0xff]
        %v3551 = vld [vmem:[%s3508 + $0x150] sm:$0xff]
        %v3552 = vld [vmem:[%s3508 + $0x158] sm:$0xff]
        %v3557 = vrot.slane %v3504, 2
        %v3558 = vrot.slane %v3506, 2
        %v3559 = vsel %vm2594, %v3557, %v3558
        %v3560 = vrot.slane %v3505, 2
        %v3561 = vrot.slane %v3507, 2
        %v3562 = vsel %vm2594, %v3560, %v3561
        %v3564 = vsel %vm3254, %v3562, 0
        %3566 = vmatprep.subr.mxu0 %v3510
        %3567 = vmatpush1.msra.mxu0 %v3509
        %3568 = vmatprep.subr.mxu0 %v3512
        %3569 = vmatpush1.msra.mxu0 %v3511
        %3570 = vmatprep.subr.mxu0 %v3514
        %3571 = vmatpush1.msra.mxu0 %v3513
        %3572 = vmatprep.subr.mxu0 %v3516
        %3573 = vmatpush1.msra.mxu0 %v3515
        %3574 = vmatprep.subr.mxu0 %v3518
        %3575 = vmatpush1.msra.mxu0 %v3517
        %3576 = vmatprep.subr.mxu0 %v3520
        %3577 = vmatpush1.msra.mxu0 %v3519
        %3578 = vmatprep.subr.mxu0 %v3522
        %3579 = vmatpush1.msra.mxu0 %v3521
        %3580 = vmatprep.subr.mxu0 %v3524
        %3581 = vmatpush1.msra.mxu0 %v3523
        %3582 = vmatprep.subr.mxu0 %v3526
        %3583 = vmatpush1.msra.mxu0 %v3525
        %3584 = vmatprep.subr.mxu0 %v3528
        %3585 = vmatpush1.msra.mxu0 %v3527
        %3586 = vmatprep.subr.mxu0 %v3530
        %3587 = vmatpush1.msra.mxu0 %v3529
        %3588 = vmatprep.subr.mxu0 %v3532
        %3589 = vmatpush1.msra.mxu0 %v3531
        %3590 = vmatprep.subr.mxu0 %v3534
        %3591 = vmatpush1.msra.mxu0 %v3533
        %3592 = vmatprep.subr.mxu0 %v3536
        %3593 = vmatpush1.msra.mxu0 %v3535
        %3594 = vmatprep.subr.mxu0 %v3538
        %3595 = vmatpush1.msra.mxu0 %v3537
        %3596 = vmatprep.subr.mxu0 %v3540
        %3597 = vmatpush1.msra.mxu0 %v3539
        %3598 = vmatprep.subr.mxu0 %v3542
        %3599 = vmatpush1.msra.mxu0 %v3541
        %3600 = vmatprep.subr.mxu0 %v3544
        %3601 = vmatpush1.msra.mxu0 %v3543
        %3602 = vmatprep.subr.mxu0 %v3546
        %3603 = vmatpush1.msra.mxu0 %v3545
        %3604 = vmatprep.subr.mxu0 %v3548
        %3605 = vmatpush1.msra.mxu0 %v3547
        %3606 = vmatprep.subr.mxu0 %v3550
        %3607 = vmatpush1.msra.mxu0 %v3549
        %3608 = vmatprep.subr.mxu0 %v3552
        %3609 = vmatpush1.msra.mxu0 %v3551
        %3610 = vmatprep.subr.mxu0 0.0
        %3611 = vmatpush1.msra.mxu0 0.0
        %3612 = vmatprep.subr.mxu0 0.0
        %3613 = vmatpush1.msra.mxu0 0.0
        %3614 = vmatprep.subr.mxu0 0.0
        %3615 = vmatpush1.msra.mxu0 0.0
        %3616 = vmatprep.subr.mxu0 0.0
        %3617 = vmatpush1.msra.mxu0 0.0
        %3618 = vmatprep.subr.mxu0 0.0
        %3619 = vmatpush1.msra.mxu0 0.0
        %3620 = vmatprep.subr.mxu0 0.0
        %3621 = vmatpush1.msra.mxu0 0.0
        %3622 = vmatprep.subr.mxu0 0.0
        %3623 = vmatpush1.msra.mxu0 0.0
        %3624 = vmatprep.subr.mxu0 0.0
        %3625 = vmatpush1.msra.mxu0 0.0
        %3626 = vmatprep.subr.mxu0 0.0
        %3627 = vmatpush1.msra.mxu0 0.0
        %3628 = vmatprep.subr.mxu0 0.0
        %3629 = vmatpush1.msra.mxu0 0.0
        %3630 = vmatprep.mubr.f32.mxu0 %v3564
        %3631 = vmatmul.mubr.f32.gmra.mrb[0].mxu0 %v3559
        %v3632 = vpop.f32.mrb[0].mxu0
        %v3633 = vadd.f32 0.0, %v3632
        %v3634 = vpop.f32.mrb[0].mxu0
        %v3635 = vadd.f32 0.0, %v3634
        %3636 = vdwg.mxu0
        %v3637 = vadd.f32 %v3500, %v3633
        %v3638 = vadd.f32 %v3502, %v3635
        %v3639 = vld [vmem:[#allocation3] sm:$0xf8]
        %v3640 = vld [vmem:[#allocation3 + $0x8] sm:$0xf8]
        %v3641 = vld [vmem:[#allocation3 + $0x10] sm:$0x3]
        %v3642 = vld [vmem:[#allocation3 + $0x18] sm:$0x3]
        %s3643 = scalar_lea.vmem %s11, 1056
        %v3644 = vld [vmem:[%s3643] sm:$0xff]
        %v3645 = vld [vmem:[%s3643 + $0x8] sm:$0xff]
        %v3646 = vld [vmem:[%s3643 + $0x10] sm:$0xff]
        %v3647 = vld [vmem:[%s3643 + $0x18] sm:$0xff]
        %v3648 = vld [vmem:[%s3643 + $0x20] sm:$0xff]
        %v3649 = vld [vmem:[%s3643 + $0x28] sm:$0xff]
        %v3650 = vld [vmem:[%s3643 + $0x30] sm:$0xff]
        %v3651 = vld [vmem:[%s3643 + $0x38] sm:$0xff]
        %v3652 = vld [vmem:[%s3643 + $0x40] sm:$0xff]
        %v3653 = vld [vmem:[%s3643 + $0x48] sm:$0xff]
        %v3654 = vld [vmem:[%s3643 + $0x50] sm:$0xff]
        %v3655 = vld [vmem:[%s3643 + $0x58] sm:$0xff]
        %v3656 = vld [vmem:[%s3643 + $0x60] sm:$0xff]
        %v3657 = vld [vmem:[%s3643 + $0x68] sm:$0xff]
        %v3658 = vld [vmem:[%s3643 + $0x70] sm:$0xff]
        %v3659 = vld [vmem:[%s3643 + $0x78] sm:$0xff]
        %v3660 = vld [vmem:[%s3643 + $0x80] sm:$0xff]
        %v3661 = vld [vmem:[%s3643 + $0x88] sm:$0xff]
        %v3662 = vld [vmem:[%s3643 + $0x90] sm:$0xff]
        %v3663 = vld [vmem:[%s3643 + $0x98] sm:$0xff]
        %v3664 = vld [vmem:[%s3643 + $0xa0] sm:$0xff]
        %v3665 = vld [vmem:[%s3643 + $0xa8] sm:$0xff]
        %v3666 = vld [vmem:[%s3643 + $0xb0] sm:$0xff]
        %v3667 = vld [vmem:[%s3643 + $0xb8] sm:$0xff]
        %v3668 = vld [vmem:[%s3643 + $0xc0] sm:$0xff]
        %v3669 = vld [vmem:[%s3643 + $0xc8] sm:$0xff]
        %v3670 = vld [vmem:[%s3643 + $0xd0] sm:$0xff]
        %v3671 = vld [vmem:[%s3643 + $0xd8] sm:$0xff]
        %v3672 = vld [vmem:[%s3643 + $0xe0] sm:$0xff]
        %v3673 = vld [vmem:[%s3643 + $0xe8] sm:$0xff]
        %v3674 = vld [vmem:[%s3643 + $0xf0] sm:$0xff]
        %v3675 = vld [vmem:[%s3643 + $0xf8] sm:$0xff]
        %v3676 = vld [vmem:[%s3643 + $0x100] sm:$0xff]
        %v3677 = vld [vmem:[%s3643 + $0x108] sm:$0xff]
        %v3678 = vld [vmem:[%s3643 + $0x110] sm:$0xff]
        %v3679 = vld [vmem:[%s3643 + $0x118] sm:$0xff]
        %v3680 = vld [vmem:[%s3643 + $0x120] sm:$0xff]
        %v3681 = vld [vmem:[%s3643 + $0x128] sm:$0xff]
        %v3682 = vld [vmem:[%s3643 + $0x130] sm:$0xff]
        %v3683 = vld [vmem:[%s3643 + $0x138] sm:$0xff]
        %v3684 = vld [vmem:[%s3643 + $0x140] sm:$0xff]
        %v3685 = vld [vmem:[%s3643 + $0x148] sm:$0xff]
        %v3686 = vld [vmem:[%s3643 + $0x150] sm:$0xff]
        %v3687 = vld [vmem:[%s3643 + $0x158] sm:$0xff]
        %v3692 = vrot.slane %v3639, 3
        %v3693 = vrot.slane %v3641, 3
        %v3694 = vsel %vm2739, %v3692, %v3693
        %v3695 = vrot.slane %v3640, 3
        %v3696 = vrot.slane %v3642, 3
        %v3697 = vsel %vm2739, %v3695, %v3696
        %v3699 = vsel %vm3254, %v3697, 0
        %3701 = vmatprep.subr.mxu0 %v3645
        %3702 = vmatpush1.msra.mxu0 %v3644
        %3703 = vmatprep.subr.mxu0 %v3647
        %3704 = vmatpush1.msra.mxu0 %v3646
        %3705 = vmatprep.subr.mxu0 %v3649
        %3706 = vmatpush1.msra.mxu0 %v3648
        %3707 = vmatprep.subr.mxu0 %v3651
        %3708 = vmatpush1.msra.mxu0 %v3650
        %3709 = vmatprep.subr.mxu0 %v3653
        %3710 = vmatpush1.msra.mxu0 %v3652
        %3711 = vmatprep.subr.mxu0 %v3655
        %3712 = vmatpush1.msra.mxu0 %v3654
        %3713 = vmatprep.subr.mxu0 %v3657
        %3714 = vmatpush1.msra.mxu0 %v3656
        %3715 = vmatprep.subr.mxu0 %v3659
        %3716 = vmatpush1.msra.mxu0 %v3658
        %3717 = vmatprep.subr.mxu0 %v3661
        %3718 = vmatpush1.msra.mxu0 %v3660
        %3719 = vmatprep.subr.mxu0 %v3663
        %3720 = vmatpush1.msra.mxu0 %v3662
        %3721 = vmatprep.subr.mxu0 %v3665
        %3722 = vmatpush1.msra.mxu0 %v3664
        %3723 = vmatprep.subr.mxu0 %v3667
        %3724 = vmatpush1.msra.mxu0 %v3666
        %3725 = vmatprep.subr.mxu0 %v3669
        %3726 = vmatpush1.msra.mxu0 %v3668
        %3727 = vmatprep.subr.mxu0 %v3671
        %3728 = vmatpush1.msra.mxu0 %v3670
        %3729 = vmatprep.subr.mxu0 %v3673
        %3730 = vmatpush1.msra.mxu0 %v3672
        %3731 = vmatprep.subr.mxu0 %v3675
        %3732 = vmatpush1.msra.mxu0 %v3674
        %3733 = vmatprep.subr.mxu0 %v3677
        %3734 = vmatpush1.msra.mxu0 %v3676
        %3735 = vmatprep.subr.mxu0 %v3679
        %3736 = vmatpush1.msra.mxu0 %v3678
        %3737 = vmatprep.subr.mxu0 %v3681
        %3738 = vmatpush1.msra.mxu0 %v3680
        %3739 = vmatprep.subr.mxu0 %v3683
        %3740 = vmatpush1.msra.mxu0 %v3682
        %3741 = vmatprep.subr.mxu0 %v3685
        %3742 = vmatpush1.msra.mxu0 %v3684
        %3743 = vmatprep.subr.mxu0 %v3687
        %3744 = vmatpush1.msra.mxu0 %v3686
        %3745 = vmatprep.subr.mxu0 0.0
        %3746 = vmatpush1.msra.mxu0 0.0
        %3747 = vmatprep.subr.mxu0 0.0
        %3748 = vmatpush1.msra.mxu0 0.0
        %3749 = vmatprep.subr.mxu0 0.0
        %3750 = vmatpush1.msra.mxu0 0.0
        %3751 = vmatprep.subr.mxu0 0.0
        %3752 = vmatpush1.msra.mxu0 0.0
        %3753 = vmatprep.subr.mxu0 0.0
        %3754 = vmatpush1.msra.mxu0 0.0
        %3755 = vmatprep.subr.mxu0 0.0
        %3756 = vmatpush1.msra.mxu0 0.0
        %3757 = vmatprep.subr.mxu0 0.0
        %3758 = vmatpush1.msra.mxu0 0.0
        %3759 = vmatprep.subr.mxu0 0.0
        %3760 = vmatpush1.msra.mxu0 0.0
        %3761 = vmatprep.subr.mxu0 0.0
        %3762 = vmatpush1.msra.mxu0 0.0
        %3763 = vmatprep.subr.mxu0 0.0
        %3764 = vmatpush1.msra.mxu0 0.0
        %3765 = vmatprep.mubr.f32.mxu0 %v3699
        %3766 = vmatmul.mubr.f32.gmra.mrb[0].mxu0 %v3694
        %v3767 = vpop.f32.mrb[0].mxu0
        %v3768 = vadd.f32 0.0, %v3767
        %v3769 = vpop.f32.mrb[0].mxu0
        %v3770 = vadd.f32 0.0, %v3769
        %3771 = vdwg.mxu0
        %v3772 = vadd.f32 %v3637, %v3768
        %v3773 = vadd.f32 %v3638, %v3770
        %v3774 = vld [vmem:[#allocation3] sm:$0xf0]
        %v3775 = vld [vmem:[#allocation3 + $0x8] sm:$0xf0]
        %v3776 = vld [vmem:[#allocation3 + $0x10] sm:$0x7]
        %v3777 = vld [vmem:[#allocation3 + $0x18] sm:$0x7]
        %s3778 = scalar_lea.vmem %s11, 1408
        %v3779 = vld [vmem:[%s3778] sm:$0xff]
        %v3780 = vld [vmem:[%s3778 + $0x8] sm:$0xff]
        %v3781 = vld [vmem:[%s3778 + $0x10] sm:$0xff]
        %v3782 = vld [vmem:[%s3778 + $0x18] sm:$0xff]
        %v3783 = vld [vmem:[%s3778 + $0x20] sm:$0xff]
        %v3784 = vld [vmem:[%s3778 + $0x28] sm:$0xff]
        %v3785 = vld [vmem:[%s3778 + $0x30] sm:$0xff]
        %v3786 = vld [vmem:[%s3778 + $0x38] sm:$0xff]
        %v3787 = vld [vmem:[%s3778 + $0x40] sm:$0xff]
        %v3788 = vld [vmem:[%s3778 + $0x48] sm:$0xff]
        %v3789 = vld [vmem:[%s3778 + $0x50] sm:$0xff]
        %v3790 = vld [vmem:[%s3778 + $0x58] sm:$0xff]
        %v3791 = vld [vmem:[%s3778 + $0x60] sm:$0xff]
        %v3792 = vld [vmem:[%s3778 + $0x68] sm:$0xff]
        %v3793 = vld [vmem:[%s3778 + $0x70] sm:$0xff]
        %v3794 = vld [vmem:[%s3778 + $0x78] sm:$0xff]
        %v3795 = vld [vmem:[%s3778 + $0x80] sm:$0xff]
        %v3796 = vld [vmem:[%s3778 + $0x88] sm:$0xff]
        %v3797 = vld [vmem:[%s3778 + $0x90] sm:$0xff]
        %v3798 = vld [vmem:[%s3778 + $0x98] sm:$0xff]
        %v3799 = vld [vmem:[%s3778 + $0xa0] sm:$0xff]
        %v3800 = vld [vmem:[%s3778 + $0xa8] sm:$0xff]
        %v3801 = vld [vmem:[%s3778 + $0xb0] sm:$0xff]
        %v3802 = vld [vmem:[%s3778 + $0xb8] sm:$0xff]
        %v3803 = vld [vmem:[%s3778 + $0xc0] sm:$0xff]
        %v3804 = vld [vmem:[%s3778 + $0xc8] sm:$0xff]
        %v3805 = vld [vmem:[%s3778 + $0xd0] sm:$0xff]
        %v3806 = vld [vmem:[%s3778 + $0xd8] sm:$0xff]
        %v3807 = vld [vmem:[%s3778 + $0xe0] sm:$0xff]
        %v3808 = vld [vmem:[%s3778 + $0xe8] sm:$0xff]
        %v3809 = vld [vmem:[%s3778 + $0xf0] sm:$0xff]
        %v3810 = vld [vmem:[%s3778 + $0xf8] sm:$0xff]
        %v3811 = vld [vmem:[%s3778 + $0x100] sm:$0xff]
        %v3812 = vld [vmem:[%s3778 + $0x108] sm:$0xff]
        %v3813 = vld [vmem:[%s3778 + $0x110] sm:$0xff]
        %v3814 = vld [vmem:[%s3778 + $0x118] sm:$0xff]
        %v3815 = vld [vmem:[%s3778 + $0x120] sm:$0xff]
        %v3816 = vld [vmem:[%s3778 + $0x128] sm:$0xff]
        %v3817 = vld [vmem:[%s3778 + $0x130] sm:$0xff]
        %v3818 = vld [vmem:[%s3778 + $0x138] sm:$0xff]
        %v3819 = vld [vmem:[%s3778 + $0x140] sm:$0xff]
        %v3820 = vld [vmem:[%s3778 + $0x148] sm:$0xff]
        %v3821 = vld [vmem:[%s3778 + $0x150] sm:$0xff]
        %v3822 = vld [vmem:[%s3778 + $0x158] sm:$0xff]
        %v3827 = vrot.slane %v3774, 4
        %v3828 = vrot.slane %v3776, 4
        %v3829 = vsel %vm823, %v3827, %v3828
        %v3830 = vrot.slane %v3775, 4
        %v3831 = vrot.slane %v3777, 4
        %v3832 = vsel %vm823, %v3830, %v3831
        %v3834 = vsel %vm3254, %v3832, 0
        %3836 = vmatprep.subr.mxu0 %v3780
        %3837 = vmatpush1.msra.mxu0 %v3779
        %3838 = vmatprep.subr.mxu0 %v3782
        %3839 = vmatpush1.msra.mxu0 %v3781
        %3840 = vmatprep.subr.mxu0 %v3784
        %3841 = vmatpush1.msra.mxu0 %v3783
        %3842 = vmatprep.subr.mxu0 %v3786
        %3843 = vmatpush1.msra.mxu0 %v3785
        %3844 = vmatprep.subr.mxu0 %v3788
        %3845 = vmatpush1.msra.mxu0 %v3787
        %3846 = vmatprep.subr.mxu0 %v3790
        %3847 = vmatpush1.msra.mxu0 %v3789
        %3848 = vmatprep.subr.mxu0 %v3792
        %3849 = vmatpush1.msra.mxu0 %v3791
        %3850 = vmatprep.subr.mxu0 %v3794
        %3851 = vmatpush1.msra.mxu0 %v3793
        %3852 = vmatprep.subr.mxu0 %v3796
        %3853 = vmatpush1.msra.mxu0 %v3795
        %3854 = vmatprep.subr.mxu0 %v3798
        %3855 = vmatpush1.msra.mxu0 %v3797
        %3856 = vmatprep.subr.mxu0 %v3800
        %3857 = vmatpush1.msra.mxu0 %v3799
        %3858 = vmatprep.subr.mxu0 %v3802
        %3859 = vmatpush1.msra.mxu0 %v3801
        %3860 = vmatprep.subr.mxu0 %v3804
        %3861 = vmatpush1.msra.mxu0 %v3803
        %3862 = vmatprep.subr.mxu0 %v3806
        %3863 = vmatpush1.msra.mxu0 %v3805
        %3864 = vmatprep.subr.mxu0 %v3808
        %3865 = vmatpush1.msra.mxu0 %v3807
        %3866 = vmatprep.subr.mxu0 %v3810
        %3867 = vmatpush1.msra.mxu0 %v3809
        %3868 = vmatprep.subr.mxu0 %v3812
        %3869 = vmatpush1.msra.mxu0 %v3811
        %3870 = vmatprep.subr.mxu0 %v3814
        %3871 = vmatpush1.msra.mxu0 %v3813
        %3872 = vmatprep.subr.mxu0 %v3816
        %3873 = vmatpush1.msra.mxu0 %v3815
        %3874 = vmatprep.subr.mxu0 %v3818
        %3875 = vmatpush1.msra.mxu0 %v3817
        %3876 = vmatprep.subr.mxu0 %v3820
        %3877 = vmatpush1.msra.mxu0 %v3819
        %3878 = vmatprep.subr.mxu0 %v3822
        %3879 = vmatpush1.msra.mxu0 %v3821
        %3880 = vmatprep.subr.mxu0 0.0
        %3881 = vmatpush1.msra.mxu0 0.0
        %3882 = vmatprep.subr.mxu0 0.0
        %3883 = vmatpush1.msra.mxu0 0.0
        %3884 = vmatprep.subr.mxu0 0.0
        %3885 = vmatpush1.msra.mxu0 0.0
        %3886 = vmatprep.subr.mxu0 0.0
        %3887 = vmatpush1.msra.mxu0 0.0
        %3888 = vmatprep.subr.mxu0 0.0
        %3889 = vmatpush1.msra.mxu0 0.0
        %3890 = vmatprep.subr.mxu0 0.0
        %3891 = vmatpush1.msra.mxu0 0.0
        %3892 = vmatprep.subr.mxu0 0.0
        %3893 = vmatpush1.msra.mxu0 0.0
        %3894 = vmatprep.subr.mxu0 0.0
        %3895 = vmatpush1.msra.mxu0 0.0
        %3896 = vmatprep.subr.mxu0 0.0
        %3897 = vmatpush1.msra.mxu0 0.0
        %3898 = vmatprep.subr.mxu0 0.0
        %3899 = vmatpush1.msra.mxu0 0.0
        %3900 = vmatprep.mubr.f32.mxu0 %v3834
        %3901 = vmatmul.mubr.f32.gmra.mrb[0].mxu0 %v3829
        %v3902 = vpop.f32.mrb[0].mxu0
        %v3903 = vadd.f32 0.0, %v3902
        %v3904 = vpop.f32.mrb[0].mxu0
        %v3905 = vadd.f32 0.0, %v3904
        %3906 = vdwg.mxu0
        %v3907 = vadd.f32 %v3772, %v3903
        %v3908 = vadd.f32 %v3773, %v3905
        %v3909 = vld [vmem:[#allocation16] sm:$0x3]
        %v3911 = vlaneseq
        %v3912 = vshrl.u32 %v3911, 7
        %v3913 = vsub.s32 0, %v3912
        %v3914 = vrot.slane %v3909, %v3913
        %v3915 = vlaneseq
        %v3916 = vshrl.u32 %v3915, 7
        %v3917 = vsub.s32 1, %v3916
        %v3918 = vrot.slane %v3909, %v3917
        %v3921 = vmul.f32 %v3907, %v3914
        %v3922 = vmul.f32 %v3908, %v3918
        %v3923 = vld [vmem:[#allocation18] sm:$0x3]
        %v3925 = vlaneseq
        %v3926 = vshrl.u32 %v3925, 7
        %v3927 = vsub.s32 0, %v3926
        %v3928 = vrot.slane %v3923, %v3927
        %v3929 = vlaneseq
        %v3930 = vshrl.u32 %v3929, 7
        %v3931 = vsub.s32 1, %v3930
        %v3932 = vrot.slane %v3923, %v3931
        %v3935 = vadd.f32 %v3921, %v3928
        %v3936 = vadd.f32 %v3922, %v3932
        %v3937 = vmax.f32 %v3935, 0.0
        %v3938 = vmax.f32 %v3936, 0.0
        %3939 = vst [vmem:[%s744] sm:$0x7f] %v3937
        %vm3940 = vcmask 784384
        %3941 = vst.msk [vmem:[%s744 + $0x8] sm:$0x7f] %vm3940, %v3938
        %v3942 = vld [vmem:[%s15] sm:$0x1]
        %v3943 = vld [vmem:[%s14] sm:$0xff]
        %v3944 = vld [vmem:[%s14 + $0x8] sm:$0xff]
        %v3945 = vld [vmem:[%s14 + $0x10] sm:$0xff]
        %v3946 = vld [vmem:[%s14 + $0x18] sm:$0xff]
        %v3947 = vld [vmem:[%s14 + $0x20] sm:$0xff]
        %v3948 = vld [vmem:[%s14 + $0x28] sm:$0xff]
        %v3949 = vld [vmem:[%s14 + $0x30] sm:$0xff]
        %v3950 = vld [vmem:[%s14 + $0x38] sm:$0xff]
        %v3951 = vld [vmem:[%s14 + $0x40] sm:$0xff]
        %v3952 = vld [vmem:[%s14 + $0x48] sm:$0xff]
        %v3953 = vld [vmem:[%s14 + $0x50] sm:$0xff]
        %v3954 = vld [vmem:[%s14 + $0x58] sm:$0xff]
        %v3955 = vld [vmem:[%s14 + $0x60] sm:$0xff]
        %v3956 = vld [vmem:[%s14 + $0x68] sm:$0xff]
        %v3957 = vld [vmem:[%s14 + $0x70] sm:$0xff]
        %v3958 = vld [vmem:[%s14 + $0x78] sm:$0xff]
        %v3959 = vld [vmem:[%s14 + $0x80] sm:$0xff]
        %v3960 = vld [vmem:[%s14 + $0x88] sm:$0xff]
        %v3961 = vld [vmem:[%s14 + $0x90] sm:$0xff]
        %v3962 = vld [vmem:[%s14 + $0x98] sm:$0xff]
        %v3963 = vld [vmem:[%s14 + $0xa0] sm:$0xff]
        %v3964 = vld [vmem:[%s14 + $0xa8] sm:$0xff]
        %v3965 = vld [vmem:[%s14 + $0xb0] sm:$0xff]
        %v3966 = vld [vmem:[%s14 + $0xb8] sm:$0xff]
        %v3967 = vld [vmem:[%s14 + $0xc0] sm:$0xff]
        %v3968 = vld [vmem:[%s14 + $0xc8] sm:$0xff]
        %v3969 = vld [vmem:[%s14 + $0xd0] sm:$0xff]
        %v3970 = vld [vmem:[%s14 + $0xd8] sm:$0xff]
        %vm3971 = vcmask 785408
        %v3973 = vsel %vm3971, %v3938, 0
        %3975 = vmatprep.subr.mxu0 0.0
        %3976 = vmatpush1.msra.mxu0 %v3943
        %3977 = vmatprep.subr.mxu0 0.0
        %3978 = vmatpush1.msra.mxu0 %v3944
        %3979 = vmatprep.subr.mxu0 0.0
        %3980 = vmatpush1.msra.mxu0 %v3945
        %3981 = vmatprep.subr.mxu0 0.0
        %3982 = vmatpush1.msra.mxu0 %v3946
        %3983 = vmatprep.subr.mxu0 0.0
        %3984 = vmatpush1.msra.mxu0 %v3947
        %3985 = vmatprep.subr.mxu0 0.0
        %3986 = vmatpush1.msra.mxu0 %v3948
        %3987 = vmatprep.subr.mxu0 0.0
        %3988 = vmatpush1.msra.mxu0 %v3949
        %3989 = vmatprep.subr.mxu0 0.0
        %3990 = vmatpush1.msra.mxu0 %v3950
        %3991 = vmatprep.subr.mxu0 0.0
        %3992 = vmatpush1.msra.mxu0 %v3951
        %3993 = vmatprep.subr.mxu0 0.0
        %3994 = vmatpush1.msra.mxu0 %v3952
        %3995 = vmatprep.subr.mxu0 0.0
        %3996 = vmatpush1.msra.mxu0 %v3953
        %3997 = vmatprep.subr.mxu0 0.0
        %3998 = vmatpush1.msra.mxu0 %v3954
        %3999 = vmatprep.subr.mxu0 0.0
        %4000 = vmatpush1.msra.mxu0 %v3955
        %4001 = vmatprep.subr.mxu0 0.0
        %4002 = vmatpush1.msra.mxu0 %v3956
        %4003 = vmatprep.subr.mxu0 0.0
        %4004 = vmatpush1.msra.mxu0 %v3957
        %4005 = vmatprep.subr.mxu0 0.0
        %4006 = vmatpush1.msra.mxu0 %v3958
        %4007 = vmatprep.subr.mxu0 0.0
        %4008 = vmatpush1.msra.mxu0 %v3959
        %4009 = vmatprep.subr.mxu0 0.0
        %4010 = vmatpush1.msra.mxu0 %v3960
        %4011 = vmatprep.subr.mxu0 0.0
        %4012 = vmatpush1.msra.mxu0 %v3961
        %4013 = vmatprep.subr.mxu0 0.0
        %4014 = vmatpush1.msra.mxu0 %v3962
        %4015 = vmatprep.subr.mxu0 0.0
        %4016 = vmatpush1.msra.mxu0 %v3963
        %4017 = vmatprep.subr.mxu0 0.0
        %4018 = vmatpush1.msra.mxu0 %v3964
        %4019 = vmatprep.subr.mxu0 0.0
        %4020 = vmatpush1.msra.mxu0 %v3965
        %4021 = vmatprep.subr.mxu0 0.0
        %4022 = vmatpush1.msra.mxu0 %v3966
        %4023 = vmatprep.subr.mxu0 0.0
        %4024 = vmatpush1.msra.mxu0 %v3967
        %4025 = vmatprep.subr.mxu0 0.0
        %4026 = vmatpush1.msra.mxu0 %v3968
        %4027 = vmatprep.subr.mxu0 0.0
        %4028 = vmatpush1.msra.mxu0 %v3969
        %4029 = vmatprep.subr.mxu0 0.0
        %4030 = vmatpush1.msra.mxu0 %v3970
        %4031 = vmatprep.subr.mxu0 0.0
        %4032 = vmatpush1.msra.mxu0 0.0
        %4033 = vmatprep.subr.mxu0 0.0
        %4034 = vmatpush1.msra.mxu0 0.0
        %4035 = vmatprep.subr.mxu0 0.0
        %4036 = vmatpush1.msra.mxu0 0.0
        %4037 = vmatprep.subr.mxu0 0.0
        %4038 = vmatpush1.msra.mxu0 0.0
        %4039 = vmatprep.mubr.f32.mxu0 %v3973
        %4040 = vmatmul.mubr.f32.gmra.mrb[0].mxu0 %v3937
        %v4041 = vpop.f32.mrb[0].mxu0
        %v4042 = vadd.f32 0.0, %v4041
        %v4043 = vpop.f32.mrb[0].mxu0
        %4044 = vdwg.mxu0
        %v4045 = vadd.f32 %v3942, %v4042
        %s4046 = scalar_lea.vmem %s14, 224
        %v4047 = vld [vmem:[%s4046] sm:$0xff]
        %v4048 = vld [vmem:[%s4046 + $0x8] sm:$0xff]
        %v4049 = vld [vmem:[%s4046 + $0x10] sm:$0xff]
        %v4050 = vld [vmem:[%s4046 + $0x18] sm:$0xff]
        %v4051 = vld [vmem:[%s4046 + $0x20] sm:$0xff]
        %v4052 = vld [vmem:[%s4046 + $0x28] sm:$0xff]
        %v4053 = vld [vmem:[%s4046 + $0x30] sm:$0xff]
        %v4054 = vld [vmem:[%s4046 + $0x38] sm:$0xff]
        %v4055 = vld [vmem:[%s4046 + $0x40] sm:$0xff]
        %v4056 = vld [vmem:[%s4046 + $0x48] sm:$0xff]
        %v4057 = vld [vmem:[%s4046 + $0x50] sm:$0xff]
        %v4058 = vld [vmem:[%s4046 + $0x58] sm:$0xff]
        %v4059 = vld [vmem:[%s4046 + $0x60] sm:$0xff]
        %v4060 = vld [vmem:[%s4046 + $0x68] sm:$0xff]
        %v4061 = vld [vmem:[%s4046 + $0x70] sm:$0xff]
        %v4062 = vld [vmem:[%s4046 + $0x78] sm:$0xff]
        %v4063 = vld [vmem:[%s4046 + $0x80] sm:$0xff]
        %v4064 = vld [vmem:[%s4046 + $0x88] sm:$0xff]
        %v4065 = vld [vmem:[%s4046 + $0x90] sm:$0xff]
        %v4066 = vld [vmem:[%s4046 + $0x98] sm:$0xff]
        %v4067 = vld [vmem:[%s4046 + $0xa0] sm:$0xff]
        %v4068 = vld [vmem:[%s4046 + $0xa8] sm:$0xff]
        %v4069 = vld [vmem:[%s4046 + $0xb0] sm:$0xff]
        %v4070 = vld [vmem:[%s4046 + $0xb8] sm:$0xff]
        %v4071 = vld [vmem:[%s4046 + $0xc0] sm:$0xff]
        %v4072 = vld [vmem:[%s4046 + $0xc8] sm:$0xff]
        %v4073 = vld [vmem:[%s4046 + $0xd0] sm:$0xff]
        %v4074 = vld [vmem:[%s4046 + $0xd8] sm:$0xff]
        %v4076 = vrot.slane %v3937, 1
        %v4077 = vrot.slane %v3938, 1
        %v4079 = vsel %vm3971, %v4077, 0
        %4081 = vmatprep.subr.mxu0 0.0
        %4082 = vmatpush1.msra.mxu0 %v4047
        %4083 = vmatprep.subr.mxu0 0.0
        %4084 = vmatpush1.msra.mxu0 %v4048
        %4085 = vmatprep.subr.mxu0 0.0
        %4086 = vmatpush1.msra.mxu0 %v4049
        %4087 = vmatprep.subr.mxu0 0.0
        %4088 = vmatpush1.msra.mxu0 %v4050
        %4089 = vmatprep.subr.mxu0 0.0
        %4090 = vmatpush1.msra.mxu0 %v4051
        %4091 = vmatprep.subr.mxu0 0.0
        %4092 = vmatpush1.msra.mxu0 %v4052
        %4093 = vmatprep.subr.mxu0 0.0
        %4094 = vmatpush1.msra.mxu0 %v4053
        %4095 = vmatprep.subr.mxu0 0.0
        %4096 = vmatpush1.msra.mxu0 %v4054
        %4097 = vmatprep.subr.mxu0 0.0
        %4098 = vmatpush1.msra.mxu0 %v4055
        %4099 = vmatprep.subr.mxu0 0.0
        %4100 = vmatpush1.msra.mxu0 %v4056
        %4101 = vmatprep.subr.mxu0 0.0
        %4102 = vmatpush1.msra.mxu0 %v4057
        %4103 = vmatprep.subr.mxu0 0.0
        %4104 = vmatpush1.msra.mxu0 %v4058
        %4105 = vmatprep.subr.mxu0 0.0
        %4106 = vmatpush1.msra.mxu0 %v4059
        %4107 = vmatprep.subr.mxu0 0.0
        %4108 = vmatpush1.msra.mxu0 %v4060
        %4109 = vmatprep.subr.mxu0 0.0
        %4110 = vmatpush1.msra.mxu0 %v4061
        %4111 = vmatprep.subr.mxu0 0.0
        %4112 = vmatpush1.msra.mxu0 %v4062
        %4113 = vmatprep.subr.mxu0 0.0
        %4114 = vmatpush1.msra.mxu0 %v4063
        %4115 = vmatprep.subr.mxu0 0.0
        %4116 = vmatpush1.msra.mxu0 %v4064
        %4117 = vmatprep.subr.mxu0 0.0
        %4118 = vmatpush1.msra.mxu0 %v4065
        %4119 = vmatprep.subr.mxu0 0.0
        %4120 = vmatpush1.msra.mxu0 %v4066
        %4121 = vmatprep.subr.mxu0 0.0
        %4122 = vmatpush1.msra.mxu0 %v4067
        %4123 = vmatprep.subr.mxu0 0.0
        %4124 = vmatpush1.msra.mxu0 %v4068
        %4125 = vmatprep.subr.mxu0 0.0
        %4126 = vmatpush1.msra.mxu0 %v4069
        %4127 = vmatprep.subr.mxu0 0.0
        %4128 = vmatpush1.msra.mxu0 %v4070
        %4129 = vmatprep.subr.mxu0 0.0
        %4130 = vmatpush1.msra.mxu0 %v4071
        %4131 = vmatprep.subr.mxu0 0.0
        %4132 = vmatpush1.msra.mxu0 %v4072
        %4133 = vmatprep.subr.mxu0 0.0
        %4134 = vmatpush1.msra.mxu0 %v4073
        %4135 = vmatprep.subr.mxu0 0.0
        %4136 = vmatpush1.msra.mxu0 %v4074
        %4137 = vmatprep.subr.mxu0 0.0
        %4138 = vmatpush1.msra.mxu0 0.0
        %4139 = vmatprep.subr.mxu0 0.0
        %4140 = vmatpush1.msra.mxu0 0.0
        %4141 = vmatprep.subr.mxu0 0.0
        %4142 = vmatpush1.msra.mxu0 0.0
        %4143 = vmatprep.subr.mxu0 0.0
        %4144 = vmatpush1.msra.mxu0 0.0
        %4145 = vmatprep.mubr.f32.mxu0 %v4079
        %4146 = vmatmul.mubr.f32.gmra.mrb[0].mxu0 %v4076
        %v4147 = vpop.f32.mrb[0].mxu0
        %v4148 = vadd.f32 0.0, %v4147
        %v4149 = vpop.f32.mrb[0].mxu0
        %4150 = vdwg.mxu0
        %v4151 = vadd.f32 %v4045, %v4148
        %s4152 = scalar_lea.vmem %s14, 448
        %v4153 = vld [vmem:[%s4152] sm:$0xff]
        %v4154 = vld [vmem:[%s4152 + $0x8] sm:$0xff]
        %v4155 = vld [vmem:[%s4152 + $0x10] sm:$0xff]
        %v4156 = vld [vmem:[%s4152 + $0x18] sm:$0xff]
        %v4157 = vld [vmem:[%s4152 + $0x20] sm:$0xff]
        %v4158 = vld [vmem:[%s4152 + $0x28] sm:$0xff]
        %v4159 = vld [vmem:[%s4152 + $0x30] sm:$0xff]
        %v4160 = vld [vmem:[%s4152 + $0x38] sm:$0xff]
        %v4161 = vld [vmem:[%s4152 + $0x40] sm:$0xff]
        %v4162 = vld [vmem:[%s4152 + $0x48] sm:$0xff]
        %v4163 = vld [vmem:[%s4152 + $0x50] sm:$0xff]
        %v4164 = vld [vmem:[%s4152 + $0x58] sm:$0xff]
        %v4165 = vld [vmem:[%s4152 + $0x60] sm:$0xff]
        %v4166 = vld [vmem:[%s4152 + $0x68] sm:$0xff]
        %v4167 = vld [vmem:[%s4152 + $0x70] sm:$0xff]
        %v4168 = vld [vmem:[%s4152 + $0x78] sm:$0xff]
        %v4169 = vld [vmem:[%s4152 + $0x80] sm:$0xff]
        %v4170 = vld [vmem:[%s4152 + $0x88] sm:$0xff]
        %v4171 = vld [vmem:[%s4152 + $0x90] sm:$0xff]
        %v4172 = vld [vmem:[%s4152 + $0x98] sm:$0xff]
        %v4173 = vld [vmem:[%s4152 + $0xa0] sm:$0xff]
        %v4174 = vld [vmem:[%s4152 + $0xa8] sm:$0xff]
        %v4175 = vld [vmem:[%s4152 + $0xb0] sm:$0xff]
        %v4176 = vld [vmem:[%s4152 + $0xb8] sm:$0xff]
        %v4177 = vld [vmem:[%s4152 + $0xc0] sm:$0xff]
        %v4178 = vld [vmem:[%s4152 + $0xc8] sm:$0xff]
        %v4179 = vld [vmem:[%s4152 + $0xd0] sm:$0xff]
        %v4180 = vld [vmem:[%s4152 + $0xd8] sm:$0xff]
        %v4181 = vrot.slane %v3937, 2
        %v4182 = vrot.slane %v3938, 2
        %v4184 = vsel %vm3971, %v4182, 0
        %4186 = vmatprep.subr.mxu0 0.0
        %4187 = vmatpush1.msra.mxu0 %v4153
        %4188 = vmatprep.subr.mxu0 0.0
        %4189 = vmatpush1.msra.mxu0 %v4154
        %4190 = vmatprep.subr.mxu0 0.0
        %4191 = vmatpush1.msra.mxu0 %v4155
        %4192 = vmatprep.subr.mxu0 0.0
        %4193 = vmatpush1.msra.mxu0 %v4156
        %4194 = vmatprep.subr.mxu0 0.0
        %4195 = vmatpush1.msra.mxu0 %v4157
        %4196 = vmatprep.subr.mxu0 0.0
        %4197 = vmatpush1.msra.mxu0 %v4158
        %4198 = vmatprep.subr.mxu0 0.0
        %4199 = vmatpush1.msra.mxu0 %v4159
        %4200 = vmatprep.subr.mxu0 0.0
        %4201 = vmatpush1.msra.mxu0 %v4160
        %4202 = vmatprep.subr.mxu0 0.0
        %4203 = vmatpush1.msra.mxu0 %v4161
        %4204 = vmatprep.subr.mxu0 0.0
        %4205 = vmatpush1.msra.mxu0 %v4162
        %4206 = vmatprep.subr.mxu0 0.0
        %4207 = vmatpush1.msra.mxu0 %v4163
        %4208 = vmatprep.subr.mxu0 0.0
        %4209 = vmatpush1.msra.mxu0 %v4164
        %4210 = vmatprep.subr.mxu0 0.0
        %4211 = vmatpush1.msra.mxu0 %v4165
        %4212 = vmatprep.subr.mxu0 0.0
        %4213 = vmatpush1.msra.mxu0 %v4166
        %4214 = vmatprep.subr.mxu0 0.0
        %4215 = vmatpush1.msra.mxu0 %v4167
        %4216 = vmatprep.subr.mxu0 0.0
        %4217 = vmatpush1.msra.mxu0 %v4168
        %4218 = vmatprep.subr.mxu0 0.0
        %4219 = vmatpush1.msra.mxu0 %v4169
        %4220 = vmatprep.subr.mxu0 0.0
        %4221 = vmatpush1.msra.mxu0 %v4170
        %4222 = vmatprep.subr.mxu0 0.0
        %4223 = vmatpush1.msra.mxu0 %v4171
        %4224 = vmatprep.subr.mxu0 0.0
        %4225 = vmatpush1.msra.mxu0 %v4172
        %4226 = vmatprep.subr.mxu0 0.0
        %4227 = vmatpush1.msra.mxu0 %v4173
        %4228 = vmatprep.subr.mxu0 0.0
        %4229 = vmatpush1.msra.mxu0 %v4174
        %4230 = vmatprep.subr.mxu0 0.0
        %4231 = vmatpush1.msra.mxu0 %v4175
        %4232 = vmatprep.subr.mxu0 0.0
        %4233 = vmatpush1.msra.mxu0 %v4176
        %4234 = vmatprep.subr.mxu0 0.0
        %4235 = vmatpush1.msra.mxu0 %v4177
        %4236 = vmatprep.subr.mxu0 0.0
        %4237 = vmatpush1.msra.mxu0 %v4178
        %4238 = vmatprep.subr.mxu0 0.0
        %4239 = vmatpush1.msra.mxu0 %v4179
        %4240 = vmatprep.subr.mxu0 0.0
        %4241 = vmatpush1.msra.mxu0 %v4180
        %4242 = vmatprep.subr.mxu0 0.0
        %4243 = vmatpush1.msra.mxu0 0.0
        %4244 = vmatprep.subr.mxu0 0.0
        %4245 = vmatpush1.msra.mxu0 0.0
        %4246 = vmatprep.subr.mxu0 0.0
        %4247 = vmatpush1.msra.mxu0 0.0
        %4248 = vmatprep.subr.mxu0 0.0
        %4249 = vmatpush1.msra.mxu0 0.0
        %4250 = vmatprep.mubr.f32.mxu0 %v4184
        %4251 = vmatmul.mubr.f32.gmra.mrb[0].mxu0 %v4181
        %v4252 = vpop.f32.mrb[0].mxu0
        %v4253 = vadd.f32 0.0, %v4252
        %v4254 = vpop.f32.mrb[0].mxu0
        %4255 = vdwg.mxu0
        %v4256 = vadd.f32 %v4151, %v4253
        %s4257 = scalar_lea.vmem %s14, 672
        %v4258 = vld [vmem:[%s4257] sm:$0xff]
        %v4259 = vld [vmem:[%s4257 + $0x8] sm:$0xff]
        %v4260 = vld [vmem:[%s4257 + $0x10] sm:$0xff]
        %v4261 = vld [vmem:[%s4257 + $0x18] sm:$0xff]
        %v4262 = vld [vmem:[%s4257 + $0x20] sm:$0xff]
        %v4263 = vld [vmem:[%s4257 + $0x28] sm:$0xff]
        %v4264 = vld [vmem:[%s4257 + $0x30] sm:$0xff]
        %v4265 = vld [vmem:[%s4257 + $0x38] sm:$0xff]
        %v4266 = vld [vmem:[%s4257 + $0x40] sm:$0xff]
        %v4267 = vld [vmem:[%s4257 + $0x48] sm:$0xff]
        %v4268 = vld [vmem:[%s4257 + $0x50] sm:$0xff]
        %v4269 = vld [vmem:[%s4257 + $0x58] sm:$0xff]
        %v4270 = vld [vmem:[%s4257 + $0x60] sm:$0xff]
        %v4271 = vld [vmem:[%s4257 + $0x68] sm:$0xff]
        %v4272 = vld [vmem:[%s4257 + $0x70] sm:$0xff]
        %v4273 = vld [vmem:[%s4257 + $0x78] sm:$0xff]
        %v4274 = vld [vmem:[%s4257 + $0x80] sm:$0xff]
        %v4275 = vld [vmem:[%s4257 + $0x88] sm:$0xff]
        %v4276 = vld [vmem:[%s4257 + $0x90] sm:$0xff]
        %v4277 = vld [vmem:[%s4257 + $0x98] sm:$0xff]
        %v4278 = vld [vmem:[%s4257 + $0xa0] sm:$0xff]
        %v4279 = vld [vmem:[%s4257 + $0xa8] sm:$0xff]
        %v4280 = vld [vmem:[%s4257 + $0xb0] sm:$0xff]
        %v4281 = vld [vmem:[%s4257 + $0xb8] sm:$0xff]
        %v4282 = vld [vmem:[%s4257 + $0xc0] sm:$0xff]
        %v4283 = vld [vmem:[%s4257 + $0xc8] sm:$0xff]
        %v4284 = vld [vmem:[%s4257 + $0xd0] sm:$0xff]
        %v4285 = vld [vmem:[%s4257 + $0xd8] sm:$0xff]
        %v4286 = vrot.slane %v3937, 3
        %v4287 = vrot.slane %v3938, 3
        %v4289 = vsel %vm3971, %v4287, 0
        %4291 = vmatprep.subr.mxu0 0.0
        %4292 = vmatpush1.msra.mxu0 %v4258
        %4293 = vmatprep.subr.mxu0 0.0
        %4294 = vmatpush1.msra.mxu0 %v4259
        %4295 = vmatprep.subr.mxu0 0.0
        %4296 = vmatpush1.msra.mxu0 %v4260
        %4297 = vmatprep.subr.mxu0 0.0
        %4298 = vmatpush1.msra.mxu0 %v4261
        %4299 = vmatprep.subr.mxu0 0.0
        %4300 = vmatpush1.msra.mxu0 %v4262
        %4301 = vmatprep.subr.mxu0 0.0
        %4302 = vmatpush1.msra.mxu0 %v4263
        %4303 = vmatprep.subr.mxu0 0.0
        %4304 = vmatpush1.msra.mxu0 %v4264
        %4305 = vmatprep.subr.mxu0 0.0
        %4306 = vmatpush1.msra.mxu0 %v4265
        %4307 = vmatprep.subr.mxu0 0.0
        %4308 = vmatpush1.msra.mxu0 %v4266
        %4309 = vmatprep.subr.mxu0 0.0
        %4310 = vmatpush1.msra.mxu0 %v4267
        %4311 = vmatprep.subr.mxu0 0.0
        %4312 = vmatpush1.msra.mxu0 %v4268
        %4313 = vmatprep.subr.mxu0 0.0
        %4314 = vmatpush1.msra.mxu0 %v4269
        %4315 = vmatprep.subr.mxu0 0.0
        %4316 = vmatpush1.msra.mxu0 %v4270
        %4317 = vmatprep.subr.mxu0 0.0
        %4318 = vmatpush1.msra.mxu0 %v4271
        %4319 = vmatprep.subr.mxu0 0.0
        %4320 = vmatpush1.msra.mxu0 %v4272
        %4321 = vmatprep.subr.mxu0 0.0
        %4322 = vmatpush1.msra.mxu0 %v4273
        %4323 = vmatprep.subr.mxu0 0.0
        %4324 = vmatpush1.msra.mxu0 %v4274
        %4325 = vmatprep.subr.mxu0 0.0
        %4326 = vmatpush1.msra.mxu0 %v4275
        %4327 = vmatprep.subr.mxu0 0.0
        %4328 = vmatpush1.msra.mxu0 %v4276
        %4329 = vmatprep.subr.mxu0 0.0
        %4330 = vmatpush1.msra.mxu0 %v4277
        %4331 = vmatprep.subr.mxu0 0.0
        %4332 = vmatpush1.msra.mxu0 %v4278
        %4333 = vmatprep.subr.mxu0 0.0
        %4334 = vmatpush1.msra.mxu0 %v4279
        %4335 = vmatprep.subr.mxu0 0.0
        %4336 = vmatpush1.msra.mxu0 %v4280
        %4337 = vmatprep.subr.mxu0 0.0
        %4338 = vmatpush1.msra.mxu0 %v4281
        %4339 = vmatprep.subr.mxu0 0.0
        %4340 = vmatpush1.msra.mxu0 %v4282
        %4341 = vmatprep.subr.mxu0 0.0
        %4342 = vmatpush1.msra.mxu0 %v4283
        %4343 = vmatprep.subr.mxu0 0.0
        %4344 = vmatpush1.msra.mxu0 %v4284
        %4345 = vmatprep.subr.mxu0 0.0
        %4346 = vmatpush1.msra.mxu0 %v4285
        %4347 = vmatprep.subr.mxu0 0.0
        %4348 = vmatpush1.msra.mxu0 0.0
        %4349 = vmatprep.subr.mxu0 0.0
        %4350 = vmatpush1.msra.mxu0 0.0
        %4351 = vmatprep.subr.mxu0 0.0
        %4352 = vmatpush1.msra.mxu0 0.0
        %4353 = vmatprep.subr.mxu0 0.0
        %4354 = vmatpush1.msra.mxu0 0.0
        %4355 = vmatprep.mubr.f32.mxu0 %v4289
        %4356 = vmatmul.mubr.f32.gmra.mrb[0].mxu0 %v4286
        %v4357 = vpop.f32.mrb[0].mxu0
        %v4358 = vadd.f32 0.0, %v4357
        %v4359 = vpop.f32.mrb[0].mxu0
        %4360 = vdwg.mxu0
        %v4361 = vadd.f32 %v4256, %v4358
        %s4362 = scalar_lea.vmem %s14, 896
        %v4363 = vld [vmem:[%s4362] sm:$0xff]
        %v4364 = vld [vmem:[%s4362 + $0x8] sm:$0xff]
        %v4365 = vld [vmem:[%s4362 + $0x10] sm:$0xff]
        %v4366 = vld [vmem:[%s4362 + $0x18] sm:$0xff]
        %v4367 = vld [vmem:[%s4362 + $0x20] sm:$0xff]
        %v4368 = vld [vmem:[%s4362 + $0x28] sm:$0xff]
        %v4369 = vld [vmem:[%s4362 + $0x30] sm:$0xff]
        %v4370 = vld [vmem:[%s4362 + $0x38] sm:$0xff]
        %v4371 = vld [vmem:[%s4362 + $0x40] sm:$0xff]
        %v4372 = vld [vmem:[%s4362 + $0x48] sm:$0xff]
        %v4373 = vld [vmem:[%s4362 + $0x50] sm:$0xff]
        %v4374 = vld [vmem:[%s4362 + $0x58] sm:$0xff]
        %v4375 = vld [vmem:[%s4362 + $0x60] sm:$0xff]
        %v4376 = vld [vmem:[%s4362 + $0x68] sm:$0xff]
        %v4377 = vld [vmem:[%s4362 + $0x70] sm:$0xff]
        %v4378 = vld [vmem:[%s4362 + $0x78] sm:$0xff]
        %v4379 = vld [vmem:[%s4362 + $0x80] sm:$0xff]
        %v4380 = vld [vmem:[%s4362 + $0x88] sm:$0xff]
        %v4381 = vld [vmem:[%s4362 + $0x90] sm:$0xff]
        %v4382 = vld [vmem:[%s4362 + $0x98] sm:$0xff]
        %v4383 = vld [vmem:[%s4362 + $0xa0] sm:$0xff]
        %v4384 = vld [vmem:[%s4362 + $0xa8] sm:$0xff]
        %v4385 = vld [vmem:[%s4362 + $0xb0] sm:$0xff]
        %v4386 = vld [vmem:[%s4362 + $0xb8] sm:$0xff]
        %v4387 = vld [vmem:[%s4362 + $0xc0] sm:$0xff]
        %v4388 = vld [vmem:[%s4362 + $0xc8] sm:$0xff]
        %v4389 = vld [vmem:[%s4362 + $0xd0] sm:$0xff]
        %v4390 = vld [vmem:[%s4362 + $0xd8] sm:$0xff]
        %v4391 = vrot.slane %v3937, 4
        %v4392 = vrot.slane %v3938, 4
        %v4394 = vsel %vm3971, %v4392, 0
        %4396 = vmatprep.subr.mxu0 0.0
        %4397 = vmatpush1.msra.mxu0 %v4363
        %4398 = vmatprep.subr.mxu0 0.0
        %4399 = vmatpush1.msra.mxu0 %v4364
        %4400 = vmatprep.subr.mxu0 0.0
        %4401 = vmatpush1.msra.mxu0 %v4365
        %4402 = vmatprep.subr.mxu0 0.0
        %4403 = vmatpush1.msra.mxu0 %v4366
        %4404 = vmatprep.subr.mxu0 0.0
        %4405 = vmatpush1.msra.mxu0 %v4367
        %4406 = vmatprep.subr.mxu0 0.0
        %4407 = vmatpush1.msra.mxu0 %v4368
        %4408 = vmatprep.subr.mxu0 0.0
        %4409 = vmatpush1.msra.mxu0 %v4369
        %4410 = vmatprep.subr.mxu0 0.0
        %4411 = vmatpush1.msra.mxu0 %v4370
        %4412 = vmatprep.subr.mxu0 0.0
        %4413 = vmatpush1.msra.mxu0 %v4371
        %4414 = vmatprep.subr.mxu0 0.0
        %4415 = vmatpush1.msra.mxu0 %v4372
        %4416 = vmatprep.subr.mxu0 0.0
        %4417 = vmatpush1.msra.mxu0 %v4373
        %4418 = vmatprep.subr.mxu0 0.0
        %4419 = vmatpush1.msra.mxu0 %v4374
        %4420 = vmatprep.subr.mxu0 0.0
        %4421 = vmatpush1.msra.mxu0 %v4375
        %4422 = vmatprep.subr.mxu0 0.0
        %4423 = vmatpush1.msra.mxu0 %v4376
        %4424 = vmatprep.subr.mxu0 0.0
        %4425 = vmatpush1.msra.mxu0 %v4377
        %4426 = vmatprep.subr.mxu0 0.0
        %4427 = vmatpush1.msra.mxu0 %v4378
        %4428 = vmatprep.subr.mxu0 0.0
        %4429 = vmatpush1.msra.mxu0 %v4379
        %4430 = vmatprep.subr.mxu0 0.0
        %4431 = vmatpush1.msra.mxu0 %v4380
        %4432 = vmatprep.subr.mxu0 0.0
        %4433 = vmatpush1.msra.mxu0 %v4381
        %4434 = vmatprep.subr.mxu0 0.0
        %4435 = vmatpush1.msra.mxu0 %v4382
        %4436 = vmatprep.subr.mxu0 0.0
        %4437 = vmatpush1.msra.mxu0 %v4383
        %4438 = vmatprep.subr.mxu0 0.0
        %4439 = vmatpush1.msra.mxu0 %v4384
        %4440 = vmatprep.subr.mxu0 0.0
        %4441 = vmatpush1.msra.mxu0 %v4385
        %4442 = vmatprep.subr.mxu0 0.0
        %4443 = vmatpush1.msra.mxu0 %v4386
        %4444 = vmatprep.subr.mxu0 0.0
        %4445 = vmatpush1.msra.mxu0 %v4387
        %4446 = vmatprep.subr.mxu0 0.0
        %4447 = vmatpush1.msra.mxu0 %v4388
        %4448 = vmatprep.subr.mxu0 0.0
        %4449 = vmatpush1.msra.mxu0 %v4389
        %4450 = vmatprep.subr.mxu0 0.0
        %4451 = vmatpush1.msra.mxu0 %v4390
        %4452 = vmatprep.subr.mxu0 0.0
        %4453 = vmatpush1.msra.mxu0 0.0
        %4454 = vmatprep.subr.mxu0 0.0
        %4455 = vmatpush1.msra.mxu0 0.0
        %4456 = vmatprep.subr.mxu0 0.0
        %4457 = vmatpush1.msra.mxu0 0.0
        %4458 = vmatprep.subr.mxu0 0.0
        %4459 = vmatpush1.msra.mxu0 0.0
        %4460 = vmatprep.mubr.f32.mxu0 %v4394
        %4461 = vmatmul.mubr.f32.gmra.mrb[0].mxu0 %v4391
        %v4462 = vpop.f32.mrb[0].mxu0
        %v4463 = vadd.f32 0.0, %v4462
        %v4464 = vpop.f32.mrb[0].mxu0
        %4465 = vdwg.mxu0
        %v4466 = vadd.f32 %v4361, %v4463
        %s4467 = scalar_lea.vmem %s14, 1120
        %v4468 = vld [vmem:[%s4467] sm:$0xff]
        %v4469 = vld [vmem:[%s4467 + $0x8] sm:$0xff]
        %v4470 = vld [vmem:[%s4467 + $0x10] sm:$0xff]
        %v4471 = vld [vmem:[%s4467 + $0x18] sm:$0xff]
        %v4472 = vld [vmem:[%s4467 + $0x20] sm:$0xff]
        %v4473 = vld [vmem:[%s4467 + $0x28] sm:$0xff]
        %v4474 = vld [vmem:[%s4467 + $0x30] sm:$0xff]
        %v4475 = vld [vmem:[%s4467 + $0x38] sm:$0xff]
        %v4476 = vld [vmem:[%s4467 + $0x40] sm:$0xff]
        %v4477 = vld [vmem:[%s4467 + $0x48] sm:$0xff]
        %v4478 = vld [vmem:[%s4467 + $0x50] sm:$0xff]
        %v4479 = vld [vmem:[%s4467 + $0x58] sm:$0xff]
        %v4480 = vld [vmem:[%s4467 + $0x60] sm:$0xff]
        %v4481 = vld [vmem:[%s4467 + $0x68] sm:$0xff]
        %v4482 = vld [vmem:[%s4467 + $0x70] sm:$0xff]
        %v4483 = vld [vmem:[%s4467 + $0x78] sm:$0xff]
        %v4484 = vld [vmem:[%s4467 + $0x80] sm:$0xff]
        %v4485 = vld [vmem:[%s4467 + $0x88] sm:$0xff]
        %v4486 = vld [vmem:[%s4467 + $0x90] sm:$0xff]
        %v4487 = vld [vmem:[%s4467 + $0x98] sm:$0xff]
        %v4488 = vld [vmem:[%s4467 + $0xa0] sm:$0xff]
        %v4489 = vld [vmem:[%s4467 + $0xa8] sm:$0xff]
        %v4490 = vld [vmem:[%s4467 + $0xb0] sm:$0xff]
        %v4491 = vld [vmem:[%s4467 + $0xb8] sm:$0xff]
        %v4492 = vld [vmem:[%s4467 + $0xc0] sm:$0xff]
        %v4493 = vld [vmem:[%s4467 + $0xc8] sm:$0xff]
        %v4494 = vld [vmem:[%s4467 + $0xd0] sm:$0xff]
        %v4495 = vld [vmem:[%s4467 + $0xd8] sm:$0xff]
        %v4496 = vrot.slane %v3937, 5
        %v4497 = vrot.slane %v3938, 5
        %v4499 = vsel %vm3971, %v4497, 0
        %4501 = vmatprep.subr.mxu0 0.0
        %4502 = vmatpush1.msra.mxu0 %v4468
        %4503 = vmatprep.subr.mxu0 0.0
        %4504 = vmatpush1.msra.mxu0 %v4469
        %4505 = vmatprep.subr.mxu0 0.0
        %4506 = vmatpush1.msra.mxu0 %v4470
        %4507 = vmatprep.subr.mxu0 0.0
        %4508 = vmatpush1.msra.mxu0 %v4471
        %4509 = vmatprep.subr.mxu0 0.0
        %4510 = vmatpush1.msra.mxu0 %v4472
        %4511 = vmatprep.subr.mxu0 0.0
        %4512 = vmatpush1.msra.mxu0 %v4473
        %4513 = vmatprep.subr.mxu0 0.0
        %4514 = vmatpush1.msra.mxu0 %v4474
        %4515 = vmatprep.subr.mxu0 0.0
        %4516 = vmatpush1.msra.mxu0 %v4475
        %4517 = vmatprep.subr.mxu0 0.0
        %4518 = vmatpush1.msra.mxu0 %v4476
        %4519 = vmatprep.subr.mxu0 0.0
        %4520 = vmatpush1.msra.mxu0 %v4477
        %4521 = vmatprep.subr.mxu0 0.0
        %4522 = vmatpush1.msra.mxu0 %v4478
        %4523 = vmatprep.subr.mxu0 0.0
        %4524 = vmatpush1.msra.mxu0 %v4479
        %4525 = vmatprep.subr.mxu0 0.0
        %4526 = vmatpush1.msra.mxu0 %v4480
        %4527 = vmatprep.subr.mxu0 0.0
        %4528 = vmatpush1.msra.mxu0 %v4481
        %4529 = vmatprep.subr.mxu0 0.0
        %4530 = vmatpush1.msra.mxu0 %v4482
        %4531 = vmatprep.subr.mxu0 0.0
        %4532 = vmatpush1.msra.mxu0 %v4483
        %4533 = vmatprep.subr.mxu0 0.0
        %4534 = vmatpush1.msra.mxu0 %v4484
        %4535 = vmatprep.subr.mxu0 0.0
        %4536 = vmatpush1.msra.mxu0 %v4485
        %4537 = vmatprep.subr.mxu0 0.0
        %4538 = vmatpush1.msra.mxu0 %v4486
        %4539 = vmatprep.subr.mxu0 0.0
        %4540 = vmatpush1.msra.mxu0 %v4487
        %4541 = vmatprep.subr.mxu0 0.0
        %4542 = vmatpush1.msra.mxu0 %v4488
        %4543 = vmatprep.subr.mxu0 0.0
        %4544 = vmatpush1.msra.mxu0 %v4489
        %4545 = vmatprep.subr.mxu0 0.0
        %4546 = vmatpush1.msra.mxu0 %v4490
        %4547 = vmatprep.subr.mxu0 0.0
        %4548 = vmatpush1.msra.mxu0 %v4491
        %4549 = vmatprep.subr.mxu0 0.0
        %4550 = vmatpush1.msra.mxu0 %v4492
        %4551 = vmatprep.subr.mxu0 0.0
        %4552 = vmatpush1.msra.mxu0 %v4493
        %4553 = vmatprep.subr.mxu0 0.0
        %4554 = vmatpush1.msra.mxu0 %v4494
        %4555 = vmatprep.subr.mxu0 0.0
        %4556 = vmatpush1.msra.mxu0 %v4495
        %4557 = vmatprep.subr.mxu0 0.0
        %4558 = vmatpush1.msra.mxu0 0.0
        %4559 = vmatprep.subr.mxu0 0.0
        %4560 = vmatpush1.msra.mxu0 0.0
        %4561 = vmatprep.subr.mxu0 0.0
        %4562 = vmatpush1.msra.mxu0 0.0
        %4563 = vmatprep.subr.mxu0 0.0
        %4564 = vmatpush1.msra.mxu0 0.0
        %4565 = vmatprep.mubr.f32.mxu0 %v4499
        %4566 = vmatmul.mubr.f32.gmra.mrb[0].mxu0 %v4496
        %v4567 = vpop.f32.mrb[0].mxu0
        %v4568 = vadd.f32 0.0, %v4567
        %v4569 = vpop.f32.mrb[0].mxu0
        %4570 = vdwg.mxu0
        %v4571 = vadd.f32 %v4466, %v4568
        %s4572 = scalar_lea.vmem %s14, 1344
        %v4573 = vld [vmem:[%s4572] sm:$0xff]
        %v4574 = vld [vmem:[%s4572 + $0x8] sm:$0xff]
        %v4575 = vld [vmem:[%s4572 + $0x10] sm:$0xff]
        %v4576 = vld [vmem:[%s4572 + $0x18] sm:$0xff]
        %v4577 = vld [vmem:[%s4572 + $0x20] sm:$0xff]
        %v4578 = vld [vmem:[%s4572 + $0x28] sm:$0xff]
        %v4579 = vld [vmem:[%s4572 + $0x30] sm:$0xff]
        %v4580 = vld [vmem:[%s4572 + $0x38] sm:$0xff]
        %v4581 = vld [vmem:[%s4572 + $0x40] sm:$0xff]
        %v4582 = vld [vmem:[%s4572 + $0x48] sm:$0xff]
        %v4583 = vld [vmem:[%s4572 + $0x50] sm:$0xff]
        %v4584 = vld [vmem:[%s4572 + $0x58] sm:$0xff]
        %v4585 = vld [vmem:[%s4572 + $0x60] sm:$0xff]
        %v4586 = vld [vmem:[%s4572 + $0x68] sm:$0xff]
        %v4587 = vld [vmem:[%s4572 + $0x70] sm:$0xff]
        %v4588 = vld [vmem:[%s4572 + $0x78] sm:$0xff]
        %v4589 = vld [vmem:[%s4572 + $0x80] sm:$0xff]
        %v4590 = vld [vmem:[%s4572 + $0x88] sm:$0xff]
        %v4591 = vld [vmem:[%s4572 + $0x90] sm:$0xff]
        %v4592 = vld [vmem:[%s4572 + $0x98] sm:$0xff]
        %v4593 = vld [vmem:[%s4572 + $0xa0] sm:$0xff]
        %v4594 = vld [vmem:[%s4572 + $0xa8] sm:$0xff]
        %v4595 = vld [vmem:[%s4572 + $0xb0] sm:$0xff]
        %v4596 = vld [vmem:[%s4572 + $0xb8] sm:$0xff]
        %v4597 = vld [vmem:[%s4572 + $0xc0] sm:$0xff]
        %v4598 = vld [vmem:[%s4572 + $0xc8] sm:$0xff]
        %v4599 = vld [vmem:[%s4572 + $0xd0] sm:$0xff]
        %v4600 = vld [vmem:[%s4572 + $0xd8] sm:$0xff]
        %v4601 = vrot.slane %v3937, 6
        %v4602 = vrot.slane %v3938, 6
        %v4604 = vsel %vm3971, %v4602, 0
        %4606 = vmatprep.subr.mxu0 0.0
        %4607 = vmatpush1.msra.mxu0 %v4573
        %4608 = vmatprep.subr.mxu0 0.0
        %4609 = vmatpush1.msra.mxu0 %v4574
        %4610 = vmatprep.subr.mxu0 0.0
        %4611 = vmatpush1.msra.mxu0 %v4575
        %4612 = vmatprep.subr.mxu0 0.0
        %4613 = vmatpush1.msra.mxu0 %v4576
        %4614 = vmatprep.subr.mxu0 0.0
        %4615 = vmatpush1.msra.mxu0 %v4577
        %4616 = vmatprep.subr.mxu0 0.0
        %4617 = vmatpush1.msra.mxu0 %v4578
        %4618 = vmatprep.subr.mxu0 0.0
        %4619 = vmatpush1.msra.mxu0 %v4579
        %4620 = vmatprep.subr.mxu0 0.0
        %4621 = vmatpush1.msra.mxu0 %v4580
        %4622 = vmatprep.subr.mxu0 0.0
        %4623 = vmatpush1.msra.mxu0 %v4581
        %4624 = vmatprep.subr.mxu0 0.0
        %4625 = vmatpush1.msra.mxu0 %v4582
        %4626 = vmatprep.subr.mxu0 0.0
        %4627 = vmatpush1.msra.mxu0 %v4583
        %4628 = vmatprep.subr.mxu0 0.0
        %4629 = vmatpush1.msra.mxu0 %v4584
        %4630 = vmatprep.subr.mxu0 0.0
        %4631 = vmatpush1.msra.mxu0 %v4585
        %4632 = vmatprep.subr.mxu0 0.0
        %4633 = vmatpush1.msra.mxu0 %v4586
        %4634 = vmatprep.subr.mxu0 0.0
        %4635 = vmatpush1.msra.mxu0 %v4587
        %4636 = vmatprep.subr.mxu0 0.0
        %4637 = vmatpush1.msra.mxu0 %v4588
        %4638 = vmatprep.subr.mxu0 0.0
        %4639 = vmatpush1.msra.mxu0 %v4589
        %4640 = vmatprep.subr.mxu0 0.0
        %4641 = vmatpush1.msra.mxu0 %v4590
        %4642 = vmatprep.subr.mxu0 0.0
        %4643 = vmatpush1.msra.mxu0 %v4591
        %4644 = vmatprep.subr.mxu0 0.0
        %4645 = vmatpush1.msra.mxu0 %v4592
        %4646 = vmatprep.subr.mxu0 0.0
        %4647 = vmatpush1.msra.mxu0 %v4593
        %4648 = vmatprep.subr.mxu0 0.0
        %4649 = vmatpush1.msra.mxu0 %v4594
        %4650 = vmatprep.subr.mxu0 0.0
        %4651 = vmatpush1.msra.mxu0 %v4595
        %4652 = vmatprep.subr.mxu0 0.0
        %4653 = vmatpush1.msra.mxu0 %v4596
        %4654 = vmatprep.subr.mxu0 0.0
        %4655 = vmatpush1.msra.mxu0 %v4597
        %4656 = vmatprep.subr.mxu0 0.0
        %4657 = vmatpush1.msra.mxu0 %v4598
        %4658 = vmatprep.subr.mxu0 0.0
        %4659 = vmatpush1.msra.mxu0 %v4599
        %4660 = vmatprep.subr.mxu0 0.0
        %4661 = vmatpush1.msra.mxu0 %v4600
        %4662 = vmatprep.subr.mxu0 0.0
        %4663 = vmatpush1.msra.mxu0 0.0
        %4664 = vmatprep.subr.mxu0 0.0
        %4665 = vmatpush1.msra.mxu0 0.0
        %4666 = vmatprep.subr.mxu0 0.0
        %4667 = vmatpush1.msra.mxu0 0.0
        %4668 = vmatprep.subr.mxu0 0.0
        %4669 = vmatpush1.msra.mxu0 0.0
        %4670 = vmatprep.mubr.f32.mxu0 %v4604
        %4671 = vmatmul.mubr.f32.gmra.mrb[0].mxu0 %v4601
        %v4672 = vpop.f32.mrb[0].mxu0
        %v4673 = vadd.f32 0.0, %v4672
        %v4674 = vpop.f32.mrb[0].mxu0
        %4675 = vdwg.mxu0
        %v4676 = vadd.f32 %v4571, %v4673
        %v4677 = vmax.f32 %v4676, 0.0
        %v4678 = vld [vmem:[%s16] sm:$0xff]
        %v4679 = vld [vmem:[%s16 + $0x8] sm:$0xff]
        %v4680 = vld [vmem:[%s16 + $0x10] sm:$0xff]
        %v4681 = vld [vmem:[%s16 + $0x18] sm:$0xff]
        %v4682 = vld [vmem:[%s16 + $0x20] sm:$0xff]
        %v4683 = vld [vmem:[%s16 + $0x28] sm:$0xff]
        %v4684 = vld [vmem:[%s16 + $0x30] sm:$0xff]
        %v4685 = vld [vmem:[%s16 + $0x38] sm:$0xff]
        %v4686 = vld [vmem:[%s16 + $0x40] sm:$0xff]
        %v4687 = vld [vmem:[%s16 + $0x48] sm:$0xff]
        %v4688 = vld [vmem:[%s16 + $0x50] sm:$0xff]
        %v4689 = vld [vmem:[%s16 + $0x58] sm:$0xff]
        %v4690 = vld [vmem:[%s16 + $0x60] sm:$0xff]
        %v4691 = vld [vmem:[%s16 + $0x68] sm:$0xff]
        %v4692 = vld [vmem:[%s16 + $0x70] sm:$0xff]
        %v4693 = vld [vmem:[%s16 + $0x78] sm:$0xff]
        %v4694 = vld [vmem:[#allocation19] sm:$0x1]
        %4695 = vmatprep.subr.mxu0 0.0
        %4696 = vmatpush1.msra.mxu0 %v4678
        %4697 = vmatprep.subr.mxu0 0.0
        %4698 = vmatpush1.msra.mxu0 %v4679
        %4699 = vmatprep.subr.mxu0 0.0
        %4700 = vmatpush1.msra.mxu0 %v4680
        %4701 = vmatprep.subr.mxu0 0.0
        %4702 = vmatpush1.msra.mxu0 %v4681
        %4703 = vmatprep.subr.mxu0 0.0
        %4704 = vmatpush1.msra.mxu0 %v4682
        %4705 = vmatprep.subr.mxu0 0.0
        %4706 = vmatpush1.msra.mxu0 %v4683
        %4707 = vmatprep.subr.mxu0 0.0
        %4708 = vmatpush1.msra.mxu0 %v4684
        %4709 = vmatprep.subr.mxu0 0.0
        %4710 = vmatpush1.msra.mxu0 %v4685
        %4711 = vmatprep.subr.mxu0 0.0
        %4712 = vmatpush1.msra.mxu0 %v4686
        %4713 = vmatprep.subr.mxu0 0.0
        %4714 = vmatpush1.msra.mxu0 %v4687
        %4715 = vmatprep.subr.mxu0 0.0
        %4716 = vmatpush1.msra.mxu0 %v4688
        %4717 = vmatprep.subr.mxu0 0.0
        %4718 = vmatpush1.msra.mxu0 %v4689
        %4719 = vmatprep.subr.mxu0 0.0
        %4720 = vmatpush1.msra.mxu0 %v4690
        %4721 = vmatprep.subr.mxu0 0.0
        %4722 = vmatpush1.msra.mxu0 %v4691
        %4723 = vmatprep.subr.mxu0 0.0
        %4724 = vmatpush1.msra.mxu0 %v4692
        %4725 = vmatprep.subr.mxu0 0.0
        %4726 = vmatpush1.msra.mxu0 %v4693
        %4727 = vmatprep.subr.mxu0 0.0
        %4728 = vmatpush1.msra.mxu0 0.0
        %4729 = vmatprep.subr.mxu0 0.0
        %4730 = vmatpush1.msra.mxu0 0.0
        %4731 = vmatprep.subr.mxu0 0.0
        %4732 = vmatpush1.msra.mxu0 0.0
        %4733 = vmatprep.subr.mxu0 0.0
        %4734 = vmatpush1.msra.mxu0 0.0
        %4735 = vmatprep.subr.mxu0 0.0
        %4736 = vmatpush1.msra.mxu0 0.0
        %4737 = vmatprep.subr.mxu0 0.0
        %4738 = vmatpush1.msra.mxu0 0.0
        %4739 = vmatprep.subr.mxu0 0.0
        %4740 = vmatpush1.msra.mxu0 0.0
        %4741 = vmatprep.subr.mxu0 0.0
        %4742 = vmatpush1.msra.mxu0 0.0
        %4743 = vmatprep.subr.mxu0 0.0
        %4744 = vmatpush1.msra.mxu0 0.0
        %4745 = vmatprep.subr.mxu0 0.0
        %4746 = vmatpush1.msra.mxu0 0.0
        %4747 = vmatprep.subr.mxu0 0.0
        %4748 = vmatpush1.msra.mxu0 0.0
        %4749 = vmatprep.subr.mxu0 0.0
        %4750 = vmatpush1.msra.mxu0 0.0
        %4751 = vmatprep.subr.mxu0 0.0
        %4752 = vmatpush1.msra.mxu0 0.0
        %4753 = vmatprep.subr.mxu0 0.0
        %4754 = vmatpush1.msra.mxu0 0.0
        %4755 = vmatprep.subr.mxu0 0.0
        %4756 = vmatpush1.msra.mxu0 0.0
        %4757 = vmatprep.subr.mxu0 0.0
        %4758 = vmatpush1.msra.mxu0 0.0
        %4759 = vmatprep.mubr.f32.mxu0 0.0
        %4760 = vmatmul.mubr.f32.gmra.mrb[0].mxu0 %v4677
        %v4761 = vpop.f32.mrb[0].mxu0
        %v4762 = vadd.f32 %v4694, %v4761
        %v4763 = vpop.f32.mrb[0].mxu0
        %4764 = vdwg.mxu0
        %4765 = vst [vmem:[%s727] sm:$0x1] %v4762
        %s4766 = sand.u32 %s431, 1
        %s4767 = scalar_lea.sflag [#allocation6], %s4766
        %s4768 = sand.u32 %s431, 1
        %s4769 = scalar_lea.vmem [#allocation21], %s4768
        %p4770 = scmp.lt.s32.totalorder %s40, 1
        %s4771 = scalar_select %p4770, %s40, 1
        %s4772 = smul.addr %s4771, 2
        %s4773 = smul.addr %s4772, 8
        %s4774 = scalar_lea.vmem %s19, %s4773
        // Predicated region
        $region133: #{tpu_custom_call.1} parent=91 // pred_check
          %p4775 = pneg %p441
        $region134: #{tpu_custom_call.1} parent=91 // pred_check_branch
          %4777 = sbr.rel (%p4775) target = $region136
        $region135: #{tpu_custom_call.1} parent=91 // pred_region
          %s4779 = ssub.s32 16, 16
          %4780 = vsyncadd %s4767, %s4779
          %s4781 = smul.addr %s40, 16
          %s4782 = scalar_lea.hbm %s18, %s4781
          %s4784 = sshll.u32 %s4769, 4
          %s4785 = int_to_ptr.vmem [resolvable:$true] %s4784
          %4787 = dma.vmem_to_hbm [thread:$0]  %s4785, 16, %s4782, %s4767
        $region136: #{tpu_custom_call.1} parent=91 // pred_fallthru
          _
        // Predicated region
        $region137: #{tpu_custom_call.1} parent=91 // pred_check
          %p4788 = pneg %p467
        $region138: #{tpu_custom_call.1} parent=91 // pred_check_branch
          %4790 = sbr.rel (%p4788) target = $region140
        $region139: #{tpu_custom_call.1} parent=91 // pred_region
          _
        $region140: #{tpu_custom_call.1} parent=91 // pred_fallthru
          _
      $region92: #{tpu_custom_call.1} parent=5 // pred_fallthru
        _
      %p4791 = scmp.le.s32.totalorder 2, %s35
      // Predicated region
      $region141: #{tpu_custom_call.1} parent=5 // pred_check
        %p4792 = pneg %p4791
      $region142: #{tpu_custom_call.1} parent=5 // pred_check_branch
        %4794 = sbr.rel (%p4792) target = $region144
      $region143: #{tpu_custom_call.1} parent=5 // pred_region
        %s4795 = ssub.s32 %s35, 2
        // Predicated region
        $region145: #{tpu_custom_call.1} parent=143 // pred_check
          %p4796 = pneg %p447
        $region146: #{tpu_custom_call.1} parent=143 // pred_check_branch
          %4798 = sbr.rel (%p4796) target = $region148
        $region147: #{tpu_custom_call.1} parent=143 // pred_region
          %s4799 = sand.u32 %s432, 1
          %s4800 = scalar_lea.sflag [#allocation6], %s4799
          %s4801 = sand.u32 %s432, 1
          %s4802 = scalar_lea.vmem [#allocation21], %s4801
          %4803 = dma.done %s4800, 16
        $region148: #{tpu_custom_call.1} parent=143 // pred_fallthru
          _
        // Predicated region
        $region149: #{tpu_custom_call.1} parent=143 // pred_check
          %p4804 = pneg %p473
        $region150: #{tpu_custom_call.1} parent=143 // pred_check_branch
          %4806 = sbr.rel (%p4804) target = $region152
        $region151: #{tpu_custom_call.1} parent=143 // pred_region
          %p4807 = scmp.lt.s32.totalorder %s41, 1
          %s4808 = scalar_select %p4807, %s41, 1
          %s4809 = smul.addr %s4808, 2
          %s4810 = smul.addr %s4809, 8
          %s4811 = scalar_lea.vmem %s19, %s4810
        $region152: #{tpu_custom_call.1} parent=143 // pred_fallthru
          _
      $region144: #{tpu_custom_call.1} parent=5 // pred_fallthru
        _
    $region6: #{tpu_custom_call.1} parent=1 // loop_footer
      %s39 = sadd.s32 1, %s35
    $region7: #{tpu_custom_call.1} parent=1 // loop_footer_branch
      %34 = sbr.rel target = $region3
    $region8: #{tpu_custom_call.1} parent=1 // loop_exit
      _
    %4812 = vsyncpa [#allocation5], 1
    %s4813 = scalar_lea.sflag [#allocation5], 1
    %4814 = vsyncpa %s4813, 1
    %4815 = vsyncpa [#allocation8], 1
    %4816 = vsyncpa [#allocation11], 1
    %4817 = vsyncpa [#allocation14], 1
    %4818 = vsyncpa [#allocation17], 1
    %4819 = vsyncpa [#allocation20], 1
    %4820 = vsyncpa [#allocation6], 1
    %s4821 = scalar_lea.sflag [#allocation6], 1
    %4822 = vsyncpa %s4821, 1

</llo_original>
